<compile_context>
chip_gen: v6e
topology: v6e:2x2x1
jax: 0.10.0
libtpu: 0.0.40
codegen_flags: <defaults>
</compile_context>

<pallas_src>
import jax
import jax.numpy as jnp
import numpy as np
from jax import lax
from jax.experimental import pallas as pl
from jax.experimental.pallas import tpu as pltpu


# ---------------------------------------------------------------------------
# Fused kernel: BN1 + ReLU + 1x1 conv + BN2 + ReLU + 3x3 conv (one image/step)
# ---------------------------------------------------------------------------
def _dense_layer_kernel(x_ref, scale1_ref, bias1_ref, w1_ref,
                        scale2_ref, bias2_ref, w2_ref, o_ref,
                        y_pad_ref, slab_ref):
    _, H, W, Cin = x_ref.shape
    Cmid = w1_ref.shape[1]
    Cout = o_ref.shape[-1]
    HW = H * W

    # ---- stage 1: BN1 + ReLU (f32) -> 1x1 conv on the MXU (bf16 x bf16 -> f32)
    x2d = x_ref[...].reshape(HW, Cin)                              # f32
    h1 = jnp.maximum(x2d * scale1_ref[...] + bias1_ref[...], 0.0)  # (HW, Cin)
    y = jnp.dot(h1.astype(jnp.bfloat16), w1_ref[...],
                preferred_element_type=jnp.float32)                # (HW, Cmid)

    # ---- BN2 + ReLU (f32); stays in VMEM (never written back to HBM) --------
    h2 = jnp.maximum(y * scale2_ref[...] + bias2_ref[...], 0.0)    # (HW, Cmid)

    # Write the interior of the padded scratch, zero ONLY the 1-pixel border.
    y_pad_ref[1:H + 1, 1:W + 1, :] = h2.reshape(H, W, Cmid)
    zrow = jnp.zeros((1, W + 2, Cmid), jnp.float32)
    zcol = jnp.zeros((H + 2, 1, Cmid), jnp.float32)
    y_pad_ref[0:1, :, :] = zrow
    y_pad_ref[H + 1:H + 2, :, :] = zrow
    y_pad_ref[:, 0:1, :] = zcol
    y_pad_ref[:, W + 1:W + 2, :] = zcol

    # ---- im2col: pack the 9 shifted windows into the bf16 slab --------------
    # Slab columns for tap k (= ky*3 + kx) hold window[ky:ky+H, kx:kx+W, :].
    # With Cmid a multiple of 128 these writes are lane-aligned.
    for k in range(9):
        ky, kx = k // 3, k % 3
        win = y_pad_ref[ky:ky + H, kx:kx + W, :]                   # (H, W, Cmid)
        slab_ref[:, k * Cmid:(k + 1) * Cmid] = (
            win.reshape(HW, Cmid).astype(jnp.bfloat16))

    # ---- stage 2: one MXU matmul with K = 9*Cmid, f32 accumulation ----------
    out = jnp.dot(slab_ref[...], w2_ref[...],
                  preferred_element_type=jnp.float32)              # (HW, Cout)
    o_ref[...] = out.reshape(1, H, W, Cout).astype(o_ref.dtype)


# ---------------------------------------------------------------------------
# Wrapper
# ---------------------------------------------------------------------------
def dense_layer_forward(xs, params):
    """xs: list/tuple of NCHW float32 arrays (concatenated along channels)."""
    x = jnp.concatenate(xs, axis=1)                 # torch.cat(x, 1), NCHW
    x = jnp.transpose(x, (0, 2, 3, 1))              # -> NHWC (channels on lanes)
    N, H, W, Cin = x.shape
    Cmid = params["w1"].shape[1]
    Cout = params["w2"].shape[-1]
    HW = H * W

    # MXU operands in bf16 (halves weight DMA bytes); BN affine stays f32.
    w1 = params["w1"].astype(jnp.bfloat16)                         # (Cin, Cmid)
    w2 = params["w2"].reshape(9 * Cmid, Cout).astype(jnp.bfloat16)  # im2col weights
    scale1 = params["scale1"].reshape(1, Cin)
    bias1 = params["bias1"].reshape(1, Cin)
    scale2 = params["scale2"].reshape(1, Cmid)
    bias2 = params["bias2"].reshape(1, Cmid)

    out_nhwc = pl.pallas_call(
        _dense_layer_kernel,
        out_shape=jax.ShapeDtypeStruct((N, H, W, Cout), jnp.float32),
        grid_spec=pltpu.PrefetchScalarGridSpec(
            num_scalar_prefetch=0,
            grid=(N,),
            in_specs=[
                pl.BlockSpec((1, H, W, Cin), lambda n: (n, 0, 0, 0)),
                pl.BlockSpec((1, Cin), lambda n: (0, 0)),
                pl.BlockSpec((1, Cin), lambda n: (0, 0)),
                pl.BlockSpec((Cin, Cmid), lambda n: (0, 0)),
                pl.BlockSpec((1, Cmid), lambda n: (0, 0)),
                pl.BlockSpec((1, Cmid), lambda n: (0, 0)),
                pl.BlockSpec((9 * Cmid, Cout), lambda n: (0, 0)),
            ],
            out_specs=pl.BlockSpec((1, H, W, Cout), lambda n: (n, 0, 0, 0)),
            scratch_shapes=[
                # padded BN2+ReLU output (f32: avoids packed-dtype offset slices)
                pltpu.VMEM((H + 2, W + 2, Cmid), jnp.float32),
                # im2col slab, bf16 (feeds the MXU directly)
                pltpu.VMEM((HW, 9 * Cmid), jnp.bfloat16),
            ],
        ),
        compiler_params=pltpu.CompilerParams(
            dimension_semantics=("parallel",),       # megacore sharding on v7x
        ),
    )(x, scale1, bias1, w1, scale2, bias2, w2)

    return jnp.transpose(out_nhwc, (0, 3, 1, 2))    # back to NCHW


# ---------------------------------------------------------------------------
# Pure-JAX reference (lax.conv).  match_bf16=True applies the same bf16
# operand rounding as the kernel (f32 math otherwise) for a tight check.
# ---------------------------------------------------------------------------
def dense_layer_reference(xs, params, *, match_bf16=False):
    x = jnp.concatenate(xs, axis=1)
    x = jnp.transpose(x, (0, 2, 3, 1))              # NHWC
    Cin = x.shape[-1]
    Cmid = params["w1"].shape[1]

    def q(a):
        return a.astype(jnp.bfloat16).astype(jnp.float32) if match_bf16 else a

    h1 = q(jnp.maximum(x * params["scale1"] + params["bias1"], 0.0))
    y = lax.conv_general_dilated(
        h1, q(params["w1"]).reshape(1, 1, Cin, Cmid), (1, 1), "VALID",
        dimension_numbers=("NHWC", "HWIO", "NHWC"),
        precision=lax.Precision.HIGHEST)

    h2 = q(jnp.maximum(y * params["scale2"] + params["bias2"], 0.0))
    o = lax.conv_general_dilated(
        h2, q(params["w2"]), (1, 1), "SAME",
        dimension_numbers=("NHWC", "HWIO", "NHWC"),
        precision=lax.Precision.HIGHEST)
    return jnp.transpose(o, (0, 3, 1, 2))


def make_params(key, in_ch, growth_rate, bottleneck_size, eps=1e-5):
    c_mid = growth_rate * bottleneck_size
    c_out = growth_rate
    ks = jax.random.split(key, 10)

    gamma1 = jax.random.uniform(ks[0], (in_ch,), jnp.float32, 0.5, 1.5)
    beta1 = 0.1 * jax.random.normal(ks[1], (in_ch,), jnp.float32)
    mean1 = 0.1 * jax.random.normal(ks[2], (in_ch,), jnp.float32)
    var1 = jax.random.uniform(ks[3], (in_ch,), jnp.float32, 0.5, 1.5)
    scale1 = gamma1 / jnp.sqrt(var1 + eps)
    bias1 = beta1 - mean1 * scale1

    gamma2 = jax.random.uniform(ks[4], (c_mid,), jnp.float32, 0.5, 1.5)
    beta2 = 0.1 * jax.random.normal(ks[5], (c_mid,), jnp.float32)
    mean2 = 0.1 * jax.random.normal(ks[6], (c_mid,), jnp.float32)
    var2 = jax.random.uniform(ks[7], (c_mid,), jnp.float32, 0.5, 1.5)
    scale2 = gamma2 / jnp.sqrt(var2 + eps)
    bias2 = beta2 - mean2 * scale2

    # conv1: torch weight (Cmid, Cin, 1, 1) -> stored as (Cin, Cmid)
    w1 = 0.05 * jax.random.normal(ks[8], (in_ch, c_mid), jnp.float32)
    # conv2: torch weight (Cout, Cmid, 3, 3) -> stored HWIO (3, 3, Cmid, Cout)
    w2 = 0.05 * jax.random.normal(ks[9], (3, 3, c_mid, c_out), jnp.float32)

    return dict(scale1=scale1, bias1=bias1, w1=w1,
                scale2=scale2, bias2=bias2, w2=w2)


if __name__ == "__main__":
    key = jax.random.PRNGKey(0)
    k0, k1, kp = jax.random.split(key, 3)

    # Standard DenseNet bottleneck config at small spatial size:
    # two 32-channel feature maps concatenated -> in_ch = 64,
    # growth_rate = 32, bottleneck_size = 4  ->  Cmid = 128, Cout = 32.
    N, H, W = 2, 16, 16
    x0 = jax.random.normal(k0, (N, 32, H, W), jnp.float32)   # NCHW
    x1 = jax.random.normal(k1, (N, 32, H, W), jnp.float32)   # NCHW
    xs = [x0, x1]

    params = make_params(kp, in_ch=64, growth_rate=32, bottleneck_size=4)

    out = jax.block_until_ready(dense_layer_forward(xs, params))
    assert out.shape == (N, 32, H, W)

    # Tight check against a numerics-matched reference (same bf16 operand
    # rounding as the kernel, f32 accumulation).
    ref_bf16 = jax.block_until_ready(
        dense_layer_reference(xs, params, match_bf16=True))
    np.testing.assert_allclose(np.asarray(out), np.asarray(ref_bf16),
                               rtol=1e-3, atol=1e-3)

    # Looser check against pure-f32 module semantics (kernel uses bf16 MXU
    # operands, so a few 1e-3 of absolute drift is expected).
    ref_f32 = jax.block_until_ready(
        dense_layer_reference(xs, params, match_bf16=False))
    np.testing.assert_allclose(np.asarray(out), np.asarray(ref_f32),
                               rtol=2e-2, atol=2e-2)

    print("KERNEL_OK")
</pallas_src>

<mosaic_0001>
module attributes {stable_mosaic.version = 11 : i64} {
  func.func @_dense_layer_kernel(%arg0: i32, %arg1: memref<1x16x16x64xf32, #tpu.memory_space<vmem>>, %arg2: memref<1x64xf32, #tpu.memory_space<vmem>>, %arg3: memref<1x64xf32, #tpu.memory_space<vmem>>, %arg4: memref<64x128xbf16, #tpu.memory_space<vmem>>, %arg5: memref<1x128xf32, #tpu.memory_space<vmem>>, %arg6: memref<1x128xf32, #tpu.memory_space<vmem>>, %arg7: memref<1152x32xbf16, #tpu.memory_space<vmem>>, %arg8: memref<1x16x16x32xf32, #tpu.memory_space<vmem>>, %arg9: memref<18x18x128xf32, #tpu.memory_space<vmem>>, %arg10: memref<256x1152xbf16, #tpu.memory_space<vmem>>) attributes {dimension_semantics = [#tpu.dimension_semantics<parallel>], iteration_bounds = array<i64: 2>, scalar_prefetch = 0 : i64, scratch_operands = 2 : i64, tpu.core_type = #tpu.core_type<tc>, window_params = [{transform_indices = @transform_0, window_bounds = array<i64: 1, 16, 16, 64>}, {pipeline_mode = #tpu.pipeline_mode<synchronous>, transform_indices = @transform_1, window_bounds = array<i64: 1, 64>}, {pipeline_mode = #tpu.pipeline_mode<synchronous>, transform_indices = @transform_2, window_bounds = array<i64: 1, 64>}, {pipeline_mode = #tpu.pipeline_mode<synchronous>, transform_indices = @transform_3, window_bounds = array<i64: 64, 128>}, {pipeline_mode = #tpu.pipeline_mode<synchronous>, transform_indices = @transform_4, window_bounds = array<i64: 1, 128>}, {pipeline_mode = #tpu.pipeline_mode<synchronous>, transform_indices = @transform_5, window_bounds = array<i64: 1, 128>}, {pipeline_mode = #tpu.pipeline_mode<synchronous>, transform_indices = @transform_6, window_bounds = array<i64: 1152, 32>}, {transform_indices = @transform_7, window_bounds = array<i64: 1, 16, 16, 32>}]} {
    %c0 = arith.constant 0 : index
    %c0_0 = arith.constant 0 : index
    %c0_1 = arith.constant 0 : index
    %c0_2 = arith.constant 0 : index
    %0 = vector.load %arg1[%c0, %c0_0, %c0_1, %c0_2] : memref<1x16x16x64xf32, #tpu.memory_space<vmem>>, vector<1x16x16x64xf32>
    %1 = vector.shape_cast %0 : vector<1x16x16x64xf32> to vector<256x64xf32>
    %c0_3 = arith.constant 0 : index
    %c0_4 = arith.constant 0 : index
    %2 = vector.load %arg2[%c0_3, %c0_4] : memref<1x64xf32, #tpu.memory_space<vmem>>, vector<1x64xf32>
    %3 = vector.broadcast %2 : vector<1x64xf32> to vector<256x64xf32>
    %4 = arith.mulf %1, %3 : vector<256x64xf32>
    %c0_5 = arith.constant 0 : index
    %c0_6 = arith.constant 0 : index
    %5 = vector.load %arg3[%c0_5, %c0_6] : memref<1x64xf32, #tpu.memory_space<vmem>>, vector<1x64xf32>
    %6 = vector.broadcast %5 : vector<1x64xf32> to vector<256x64xf32>
    %7 = arith.addf %4, %6 : vector<256x64xf32>
    %cst = arith.constant 0.000000e+00 : f32
    %8 = vector.broadcast %cst : f32 to vector<256x64xf32>
    %9 = arith.maximumf %7, %8 : vector<256x64xf32>
    %10 = arith.truncf %9 : vector<256x64xf32> to vector<256x64xbf16>
    %c0_7 = arith.constant 0 : index
    %c0_8 = arith.constant 0 : index
    %11 = vector.load %arg4[%c0_7, %c0_8] : memref<64x128xbf16, #tpu.memory_space<vmem>>, vector<64x128xbf16>
    %cst_9 = arith.constant dense<0.000000e+00> : vector<256x128xf32>
    %12 = tpu.matmul %10, %11, %cst_9 {dimension_numbers = #tpu.dot_dimension_numbers<[1], [0], [0], [1], [0, 0, 1, 1], [], []>} : vector<256x64xbf16>, vector<64x128xbf16>, vector<256x128xf32> -> vector<256x128xf32>
    %c0_10 = arith.constant 0 : index
    %c0_11 = arith.constant 0 : index
    %13 = vector.load %arg5[%c0_10, %c0_11] : memref<1x128xf32, #tpu.memory_space<vmem>>, vector<1x128xf32>
    %14 = vector.broadcast %13 : vector<1x128xf32> to vector<256x128xf32>
    %15 = arith.mulf %12, %14 : vector<256x128xf32>
    %c0_12 = arith.constant 0 : index
    %c0_13 = arith.constant 0 : index
    %16 = vector.load %arg6[%c0_12, %c0_13] : memref<1x128xf32, #tpu.memory_space<vmem>>, vector<1x128xf32>
    %17 = vector.broadcast %16 : vector<1x128xf32> to vector<256x128xf32>
    %18 = arith.addf %15, %17 : vector<256x128xf32>
    %cst_14 = arith.constant 0.000000e+00 : f32
    %19 = vector.broadcast %cst_14 : f32 to vector<256x128xf32>
    %20 = arith.maximumf %18, %19 : vector<256x128xf32>
    %21 = vector.shape_cast %20 : vector<256x128xf32> to vector<16x16x128xf32>
    %c1 = arith.constant 1 : index
    %c1_15 = arith.constant 1 : index
    %c0_16 = arith.constant 0 : index
    %22 = vector.load %arg9[%c1, %c1_15, %c0_16] : memref<18x18x128xf32, #tpu.memory_space<vmem>>, vector<16x16x128xf32>
    tpu.vector_store %arg9[%c1, %c1_15, %c0_16], %21 {strides = array<i32>} : memref<18x18x128xf32, #tpu.memory_space<vmem>>, vector<16x16x128xf32>,
    %cst_17 = arith.constant 0.000000e+00 : f32
    %23 = vector.broadcast %cst_17 : f32 to vector<1x18x128xf32>
    %cst_18 = arith.constant 0.000000e+00 : f32
    %24 = vector.broadcast %cst_18 : f32 to vector<18x1x128xf32>
    %c0_19 = arith.constant 0 : index
    %c0_20 = arith.constant 0 : index
    %c0_21 = arith.constant 0 : index
    %25 = vector.load %arg9[%c0_19, %c0_20, %c0_21] : memref<18x18x128xf32, #tpu.memory_space<vmem>>, vector<1x18x128xf32>
    tpu.vector_store %arg9[%c0_19, %c0_20, %c0_21], %23 {strides = array<i32>} : memref<18x18x128xf32, #tpu.memory_space<vmem>>, vector<1x18x128xf32>,
    %c17 = arith.constant 17 : index
    %c0_22 = arith.constant 0 : index
    %c0_23 = arith.constant 0 : index
    %26 = vector.load %arg9[%c17, %c0_22, %c0_23] : memref<18x18x128xf32, #tpu.memory_space<vmem>>, vector<1x18x128xf32>
    tpu.vector_store %arg9[%c17, %c0_22, %c0_23], %23 {strides = array<i32>} : memref<18x18x128xf32, #tpu.memory_space<vmem>>, vector<1x18x128xf32>,
    %c0_24 = arith.constant 0 : index
    %c0_25 = arith.constant 0 : index
    %c0_26 = arith.constant 0 : index
    %27 = vector.load %arg9[%c0_24, %c0_25, %c0_26] : memref<18x18x128xf32, #tpu.memory_space<vmem>>, vector<18x1x128xf32>
    tpu.vector_store %arg9[%c0_24, %c0_25, %c0_26], %24 {strides = array<i32>} : memref<18x18x128xf32, #tpu.memory_space<vmem>>, vector<18x1x128xf32>,
    %c0_27 = arith.constant 0 : index
    %c17_28 = arith.constant 17 : index
    %c0_29 = arith.constant 0 : index
    %28 = vector.load %arg9[%c0_27, %c17_28, %c0_29] : memref<18x18x128xf32, #tpu.memory_space<vmem>>, vector<18x1x128xf32>
    tpu.vector_store %arg9[%c0_27, %c17_28, %c0_29], %24 {strides = array<i32>} : memref<18x18x128xf32, #tpu.memory_space<vmem>>, vector<18x1x128xf32>,
    %c0_30 = arith.constant 0 : index
    %c0_31 = arith.constant 0 : index
    %c0_32 = arith.constant 0 : index
    %29 = vector.load %arg9[%c0_30, %c0_31, %c0_32] : memref<18x18x128xf32, #tpu.memory_space<vmem>>, vector<16x16x128xf32>
    %30 = vector.shape_cast %29 : vector<16x16x128xf32> to vector<256x128xf32>
    %31 = arith.truncf %30 : vector<256x128xf32> to vector<256x128xbf16>
    %c0_33 = arith.constant 0 : index
    %c0_34 = arith.constant 0 : index
    %32 = vector.load %arg10[%c0_33, %c0_34] : memref<256x1152xbf16, #tpu.memory_space<vmem>>, vector<256x128xbf16>
    tpu.vector_store %arg10[%c0_33, %c0_34], %31 {strides = array<i32>} : memref<256x1152xbf16, #tpu.memory_space<vmem>>, vector<256x128xbf16>,
    %c0_35 = arith.constant 0 : index
    %c1_36 = arith.constant 1 : index
    %c0_37 = arith.constant 0 : index
    %33 = vector.load %arg9[%c0_35, %c1_36, %c0_37] : memref<18x18x128xf32, #tpu.memory_space<vmem>>, vector<16x16x128xf32>
    %34 = vector.shape_cast %33 : vector<16x16x128xf32> to vector<256x128xf32>
    %35 = arith.truncf %34 : vector<256x128xf32> to vector<256x128xbf16>
    %c0_38 = arith.constant 0 : index
    %c128 = arith.constant 128 : index
    %36 = vector.load %arg10[%c0_38, %c128] : memref<256x1152xbf16, #tpu.memory_space<vmem>>, vector<256x128xbf16>
    tpu.vector_store %arg10[%c0_38, %c128], %35 {strides = array<i32>} : memref<256x1152xbf16, #tpu.memory_space<vmem>>, vector<256x128xbf16>,
    %c0_39 = arith.constant 0 : index
    %c2 = arith.constant 2 : index
    %c0_40 = arith.constant 0 : index
    %37 = vector.load %arg9[%c0_39, %c2, %c0_40] : memref<18x18x128xf32, #tpu.memory_space<vmem>>, vector<16x16x128xf32>
    %38 = vector.shape_cast %37 : vector<16x16x128xf32> to vector<256x128xf32>
    %39 = arith.truncf %38 : vector<256x128xf32> to vector<256x128xbf16>
    %c0_41 = arith.constant 0 : index
    %c256 = arith.constant 256 : index
    %40 = vector.load %arg10[%c0_41, %c256] : memref<256x1152xbf16, #tpu.memory_space<vmem>>, vector<256x128xbf16>
    tpu.vector_store %arg10[%c0_41, %c256], %39 {strides = array<i32>} : memref<256x1152xbf16, #tpu.memory_space<vmem>>, vector<256x128xbf16>,
    %c1_42 = arith.constant 1 : index
    %c0_43 = arith.constant 0 : index
    %c0_44 = arith.constant 0 : index
    %41 = vector.load %arg9[%c1_42, %c0_43, %c0_44] : memref<18x18x128xf32, #tpu.memory_space<vmem>>, vector<16x16x128xf32>
    %42 = vector.shape_cast %41 : vector<16x16x128xf32> to vector<256x128xf32>
    %43 = arith.truncf %42 : vector<256x128xf32> to vector<256x128xbf16>
    %c0_45 = arith.constant 0 : index
    %c384 = arith.constant 384 : index
    %44 = vector.load %arg10[%c0_45, %c384] : memref<256x1152xbf16, #tpu.memory_space<vmem>>, vector<256x128xbf16>
    tpu.vector_store %arg10[%c0_45, %c384], %43 {strides = array<i32>} : memref<256x1152xbf16, #tpu.memory_space<vmem>>, vector<256x128xbf16>,
    %c1_46 = arith.constant 1 : index
    %c1_47 = arith.constant 1 : index
    %c0_48 = arith.constant 0 : index
    %45 = vector.load %arg9[%c1_46, %c1_47, %c0_48] : memref<18x18x128xf32, #tpu.memory_space<vmem>>, vector<16x16x128xf32>
    %46 = vector.shape_cast %45 : vector<16x16x128xf32> to vector<256x128xf32>
    %47 = arith.truncf %46 : vector<256x128xf32> to vector<256x128xbf16>
    %c0_49 = arith.constant 0 : index
    %c512 = arith.constant 512 : index
    %48 = vector.load %arg10[%c0_49, %c512] : memref<256x1152xbf16, #tpu.memory_space<vmem>>, vector<256x128xbf16>
    tpu.vector_store %arg10[%c0_49, %c512], %47 {strides = array<i32>} : memref<256x1152xbf16, #tpu.memory_space<vmem>>, vector<256x128xbf16>,
    %c1_50 = arith.constant 1 : index
    %c2_51 = arith.constant 2 : index
    %c0_52 = arith.constant 0 : index
    %49 = vector.load %arg9[%c1_50, %c2_51, %c0_52] : memref<18x18x128xf32, #tpu.memory_space<vmem>>, vector<16x16x128xf32>
    %50 = vector.shape_cast %49 : vector<16x16x128xf32> to vector<256x128xf32>
    %51 = arith.truncf %50 : vector<256x128xf32> to vector<256x128xbf16>
    %c0_53 = arith.constant 0 : index
    %c640 = arith.constant 640 : index
    %52 = vector.load %arg10[%c0_53, %c640] : memref<256x1152xbf16, #tpu.memory_space<vmem>>, vector<256x128xbf16>
    tpu.vector_store %arg10[%c0_53, %c640], %51 {strides = array<i32>} : memref<256x1152xbf16, #tpu.memory_space<vmem>>, vector<256x128xbf16>,
    %c2_54 = arith.constant 2 : index
    %c0_55 = arith.constant 0 : index
    %c0_56 = arith.constant 0 : index
    %53 = vector.load %arg9[%c2_54, %c0_55, %c0_56] : memref<18x18x128xf32, #tpu.memory_space<vmem>>, vector<16x16x128xf32>
    %54 = vector.shape_cast %53 : vector<16x16x128xf32> to vector<256x128xf32>
    %55 = arith.truncf %54 : vector<256x128xf32> to vector<256x128xbf16>
    %c0_57 = arith.constant 0 : index
    %c768 = arith.constant 768 : index
    %56 = vector.load %arg10[%c0_57, %c768] : memref<256x1152xbf16, #tpu.memory_space<vmem>>, vector<256x128xbf16>
    tpu.vector_store %arg10[%c0_57, %c768], %55 {strides = array<i32>} : memref<256x1152xbf16, #tpu.memory_space<vmem>>, vector<256x128xbf16>,
    %c2_58 = arith.constant 2 : index
    %c1_59 = arith.constant 1 : index
    %c0_60 = arith.constant 0 : index
    %57 = vector.load %arg9[%c2_58, %c1_59, %c0_60] : memref<18x18x128xf32, #tpu.memory_space<vmem>>, vector<16x16x128xf32>
    %58 = vector.shape_cast %57 : vector<16x16x128xf32> to vector<256x128xf32>
    %59 = arith.truncf %58 : vector<256x128xf32> to vector<256x128xbf16>
    %c0_61 = arith.constant 0 : index
    %c896 = arith.constant 896 : index
    %60 = vector.load %arg10[%c0_61, %c896] : memref<256x1152xbf16, #tpu.memory_space<vmem>>, vector<256x128xbf16>
    tpu.vector_store %arg10[%c0_61, %c896], %59 {strides = array<i32>} : memref<256x1152xbf16, #tpu.memory_space<vmem>>, vector<256x128xbf16>,
    %c2_62 = arith.constant 2 : index
    %c2_63 = arith.constant 2 : index
    %c0_64 = arith.constant 0 : index
    %61 = vector.load %arg9[%c2_62, %c2_63, %c0_64] : memref<18x18x128xf32, #tpu.memory_space<vmem>>, vector<16x16x128xf32>
    %62 = vector.shape_cast %61 : vector<16x16x128xf32> to vector<256x128xf32>
    %63 = arith.truncf %62 : vector<256x128xf32> to vector<256x128xbf16>
    %c0_65 = arith.constant 0 : index
    %c1024 = arith.constant 1024 : index
    %64 = vector.load %arg10[%c0_65, %c1024] : memref<256x1152xbf16, #tpu.memory_space<vmem>>, vector<256x128xbf16>
    tpu.vector_store %arg10[%c0_65, %c1024], %63 {strides = array<i32>} : memref<256x1152xbf16, #tpu.memory_space<vmem>>, vector<256x128xbf16>,
    %c0_66 = arith.constant 0 : index
    %c0_67 = arith.constant 0 : index
    %65 = vector.load %arg10[%c0_66, %c0_67] : memref<256x1152xbf16, #tpu.memory_space<vmem>>, vector<256x1152xbf16>
    %c0_68 = arith.constant 0 : index
    %c0_69 = arith.constant 0 : index
    %66 = vector.load %arg7[%c0_68, %c0_69] : memref<1152x32xbf16, #tpu.memory_space<vmem>>, vector<1152x32xbf16>
    %cst_70 = arith.constant dense<0.000000e+00> : vector<256x32xf32>
    %67 = tpu.matmul %65, %66, %cst_70 {dimension_numbers = #tpu.dot_dimension_numbers<[1], [0], [0], [1], [0, 0, 1, 1], [], []>} : vector<256x1152xbf16>, vector<1152x32xbf16>, vector<256x32xf32> -> vector<256x32xf32>
    %68 = vector.shape_cast %67 : vector<256x32xf32> to vector<1x16x16x32xf32>
    %c0_71 = arith.constant 0 : index
    %c0_72 = arith.constant 0 : index
    %c0_73 = arith.constant 0 : index
    %c0_74 = arith.constant 0 : index
    %69 = vector.load %arg8[%c0_71, %c0_72, %c0_73, %c0_74] : memref<1x16x16x32xf32, #tpu.memory_space<vmem>>, vector<1x16x16x32xf32>
    tpu.vector_store %arg8[%c0_71, %c0_72, %c0_73, %c0_74], %68 {strides = array<i32>} : memref<1x16x16x32xf32, #tpu.memory_space<vmem>>, vector<1x16x16x32xf32>,
    return
  }
  func.func @transform_0(%arg0: i32) -> (i32, i32, i32, i32) {
    %c0_i32 = arith.constant 0 : i32
    %c0_i32_0 = arith.constant 0 : i32
    %c0_i32_1 = arith.constant 0 : i32
    %c0_i32_2 = arith.constant 0 : i32
    return %arg0, %c0_i32, %c0_i32_0, %c0_i32_1 : i32, i32, i32, i32
  }
  func.func @transform_1(%arg0: i32) -> (i32, i32) {
    %c0_i32 = arith.constant 0 : i32
    %c0_i32_0 = arith.constant 0 : i32
    %c0_i32_1 = arith.constant 0 : i32
    return %c0_i32, %c0_i32_0 : i32, i32
  }
  func.func @transform_2(%arg0: i32) -> (i32, i32) {
    %c0_i32 = arith.constant 0 : i32
    %c0_i32_0 = arith.constant 0 : i32
    %c0_i32_1 = arith.constant 0 : i32
    return %c0_i32, %c0_i32_0 : i32, i32
  }
  func.func @transform_3(%arg0: i32) -> (i32, i32) {
    %c0_i32 = arith.constant 0 : i32
    %c0_i32_0 = arith.constant 0 : i32
    %c0_i32_1 = arith.constant 0 : i32
    return %c0_i32, %c0_i32_0 : i32, i32
  }
  func.func @transform_4(%arg0: i32) -> (i32, i32) {
    %c0_i32 = arith.constant 0 : i32
    %c0_i32_0 = arith.constant 0 : i32
    %c0_i32_1 = arith.constant 0 : i32
    return %c0_i32, %c0_i32_0 : i32, i32
  }
  func.func @transform_5(%arg0: i32) -> (i32, i32) {
    %c0_i32 = arith.constant 0 : i32
    %c0_i32_0 = arith.constant 0 : i32
    %c0_i32_1 = arith.constant 0 : i32
    return %c0_i32, %c0_i32_0 : i32, i32
  }
  func.func @transform_6(%arg0: i32) -> (i32, i32) {
    %c0_i32 = arith.constant 0 : i32
    %c0_i32_0 = arith.constant 0 : i32
    %c0_i32_1 = arith.constant 0 : i32
    return %c0_i32, %c0_i32_0 : i32, i32
  }
  func.func @transform_7(%arg0: i32) -> (i32, i32, i32, i32) {
    %c0_i32 = arith.constant 0 : i32
    %c0_i32_0 = arith.constant 0 : i32
    %c0_i32_1 = arith.constant 0 : i32
    %c0_i32_2 = arith.constant 0 : i32
    return %arg0, %c0_i32, %c0_i32_0, %c0_i32_1 : i32, i32, i32, i32
  }
}

</mosaic_0001>

<llo_original>
// kernel: tpu_custom_call.1
$region0: #{tpu_custom_call.1}
  #allocation0 [shape = 'u32[]', space=smem, size = 0x4, offset = 0x4, fixed_abs, tag = 'smem constant byte address 0x4 - core index']
  #allocation1 [shape = 'u32[144,128]{1,0:T(1,128)}', space=vmem, size = 0x12000, scoped, tag = 'internal scratch']
  #allocation2 [shape = 'f32[18,18,128]{2,1,0:T(8,128)}', space=vmem, size = 0x36000, scoped, tag = 'scratch operand']
  #allocation3 [shape = 'bf16[256,1152]{1,0:T(8,128)(2,1)}', space=vmem, size = 0x90000, scoped, tag = 'scratch operand']
  %s0 = inlined_call_operand.vmem [shape: f32[2,16,16,64], index: 0, kind: input, shape index: {}]
  %s1 = inlined_call_operand.vmem [shape: f32[1,64], index: 1, kind: input, shape index: {}]
  %s2 = inlined_call_operand.vmem [shape: f32[1,64], index: 2, kind: input, shape index: {}]
  %s3 = inlined_call_operand.vmem [shape: bf16[64,128], index: 3, kind: input, shape index: {}]
  %s4 = inlined_call_operand.vmem [shape: f32[1,128], index: 4, kind: input, shape index: {}]
  %s5 = inlined_call_operand.vmem [shape: f32[1,128], index: 5, kind: input, shape index: {}]
  %s6 = inlined_call_operand.vmem [shape: bf16[1152,32], index: 6, kind: input, shape index: {}]
  %s7 = inlined_call_operand.hbm [shape: f32[2,16,16,32], index: 7, kind: output, shape index: {}]
  %s8 = sld [smem:[#allocation0]]
  $region61: #{tpu_custom_call.1} parent=0
    _
  %s10 = ssub.s32 1, %s8
  %s11 = scalar_select 0, %s10, %s8
  $region1: #{tpu_custom_call.1} parent=0
    #allocation4 [shape = 'u8[262144]{0}', space=vmem, size = 0x40000, scoped, tag = 'output window, operand 0']
    #allocation5 [shape = 's32[2]{0}', space=sflag, size = 0x8, scoped, tag = 'scoped memory for tpu_custom_call.1']
    %12 = vsyncpa [#allocation5], 0
    %s13 = scalar_lea.sflag [#allocation5], 1
    %14 = vsyncpa %s13, 0
    loop: start=0, step=1, limit=4
    $region2: #{tpu_custom_call.1} parent=1 // loop_pre_header
      _
    $region3: #{tpu_custom_call.1} parent=1 // loop_header
      %s16 = sphi 0, %s20
      %p17 = scmp.ge.s32.totalorder %s16, 4
      %s26 = sphi 0, %s28
      %s29 = sphi 0, %s26
      %s30 = sphi 0, %s29
      %s46 = sphi 0, %s30
      %s50 = sphi 0, %s50
      %s52 = sphi 0, %s50
      %s53 = sphi 0, %s52
      %s67 = sphi 0, %s53
      %s71 = sphi 0, %s71
      %s73 = sphi 0, %s71
      %s74 = sphi 0, %s73
      %s88 = sphi 0, %s74
      %s92 = sphi 0, %s92
      %s94 = sphi 0, %s92
      %s95 = sphi 0, %s94
      %s109 = sphi 0, %s95
      %s113 = sphi 0, %s113
      %s115 = sphi 0, %s113
      %s116 = sphi 0, %s115
      %s130 = sphi 0, %s116
      %s134 = sphi 0, %s134
      %s136 = sphi 0, %s134
      %s137 = sphi 0, %s136
      %s151 = sphi 0, %s137
      %s155 = sphi 0, %s155
      %s157 = sphi 0, %s155
      %s158 = sphi 0, %s157
      %s172 = sphi 0, %s158
      %s178 = sphi 0, %s180
      %s181 = sphi 0, %s178
      %s182 = sphi 0, %s181
      %s198 = sphi 0, %s182
    $region4: #{tpu_custom_call.1} parent=1 // loop_header_branch
      %19 = sbr.rel (%p17) target = $region8
    $region5: #{tpu_custom_call.1} parent=1 // loop_body
      %s21 = ssub.s32 %s16, 1
      %s22 = ssub.s32 %s16, 2
      %s23 = sadd.s32 %s16, 1
      %s24 = ssub.s32 %s16, %s23
      %p25 = scmp.eq.s32.totalorder %s24, 0
      %s27 = sadd.s32 %s26, 1
      %s28 = scalar_select %p25, %s26, %s27
      %p31 = pneg %p25
      %p32 = scmp.eq.s32.totalorder %s16, 1
      %p33 = por %p31, %p32
      %p34 = scmp.ne.s32.totalorder %s26, %s29
      %p35 = scmp.eq.s32.totalorder %s16, 0
      %p36 = por %p34, %p35
      %p37 = scmp.ne.s32.totalorder %s26, %s29
      %p38 = scmp.eq.s32.totalorder %s21, 1
      %p39 = por %p37, %p38
      %p40 = scmp.ne.s32.totalorder %s29, %s30
      %p41 = scmp.eq.s32.totalorder %s21, 0
      %p42 = por %p40, %p41
      %p43 = scmp.ne.s32.totalorder %s29, %s30
      %p44 = scmp.eq.s32.totalorder %s22, 1
      %p45 = por %p43, %p44
      %p47 = scmp.ne.s32.totalorder %s30, %s46
      %p48 = scmp.eq.s32.totalorder %s22, 0
      %p49 = por %p47, %p48
      %s51 = sadd.s32 %s50, 1
      %p54 = scmp.eq.s32.totalorder %s16, 1
      %p55 = scmp.ne.s32.totalorder %s50, %s52
      %p56 = scmp.eq.s32.totalorder %s16, 0
      %p57 = por %p55, %p56
      %p58 = scmp.ne.s32.totalorder %s50, %s52
      %p59 = scmp.eq.s32.totalorder %s21, 1
      %p60 = por %p58, %p59
      %p61 = scmp.ne.s32.totalorder %s52, %s53
      %p62 = scmp.eq.s32.totalorder %s21, 0
      %p63 = por %p61, %p62
      %p64 = scmp.ne.s32.totalorder %s52, %s53
      %p65 = scmp.eq.s32.totalorder %s22, 1
      %p66 = por %p64, %p65
      %p68 = scmp.ne.s32.totalorder %s53, %s67
      %p69 = scmp.eq.s32.totalorder %s22, 0
      %p70 = por %p68, %p69
      %s72 = sadd.s32 %s71, 1
      %p75 = scmp.eq.s32.totalorder %s16, 1
      %p76 = scmp.ne.s32.totalorder %s71, %s73
      %p77 = scmp.eq.s32.totalorder %s16, 0
      %p78 = por %p76, %p77
      %p79 = scmp.ne.s32.totalorder %s71, %s73
      %p80 = scmp.eq.s32.totalorder %s21, 1
      %p81 = por %p79, %p80
      %p82 = scmp.ne.s32.totalorder %s73, %s74
      %p83 = scmp.eq.s32.totalorder %s21, 0
      %p84 = por %p82, %p83
      %p85 = scmp.ne.s32.totalorder %s73, %s74
      %p86 = scmp.eq.s32.totalorder %s22, 1
      %p87 = por %p85, %p86
      %p89 = scmp.ne.s32.totalorder %s74, %s88
      %p90 = scmp.eq.s32.totalorder %s22, 0
      %p91 = por %p89, %p90
      %s93 = sadd.s32 %s92, 1
      %p96 = scmp.eq.s32.totalorder %s16, 1
      %p97 = scmp.ne.s32.totalorder %s92, %s94
      %p98 = scmp.eq.s32.totalorder %s16, 0
      %p99 = por %p97, %p98
      %p100 = scmp.ne.s32.totalorder %s92, %s94
      %p101 = scmp.eq.s32.totalorder %s21, 1
      %p102 = por %p100, %p101
      %p103 = scmp.ne.s32.totalorder %s94, %s95
      %p104 = scmp.eq.s32.totalorder %s21, 0
      %p105 = por %p103, %p104
      %p106 = scmp.ne.s32.totalorder %s94, %s95
      %p107 = scmp.eq.s32.totalorder %s22, 1
      %p108 = por %p106, %p107
      %p110 = scmp.ne.s32.totalorder %s95, %s109
      %p111 = scmp.eq.s32.totalorder %s22, 0
      %p112 = por %p110, %p111
      %s114 = sadd.s32 %s113, 1
      %p117 = scmp.eq.s32.totalorder %s16, 1
      %p118 = scmp.ne.s32.totalorder %s113, %s115
      %p119 = scmp.eq.s32.totalorder %s16, 0
      %p120 = por %p118, %p119
      %p121 = scmp.ne.s32.totalorder %s113, %s115
      %p122 = scmp.eq.s32.totalorder %s21, 1
      %p123 = por %p121, %p122
      %p124 = scmp.ne.s32.totalorder %s115, %s116
      %p125 = scmp.eq.s32.totalorder %s21, 0
      %p126 = por %p124, %p125
      %p127 = scmp.ne.s32.totalorder %s115, %s116
      %p128 = scmp.eq.s32.totalorder %s22, 1
      %p129 = por %p127, %p128
      %p131 = scmp.ne.s32.totalorder %s116, %s130
      %p132 = scmp.eq.s32.totalorder %s22, 0
      %p133 = por %p131, %p132
      %s135 = sadd.s32 %s134, 1
      %p138 = scmp.eq.s32.totalorder %s16, 1
      %p139 = scmp.ne.s32.totalorder %s134, %s136
      %p140 = scmp.eq.s32.totalorder %s16, 0
      %p141 = por %p139, %p140
      %p142 = scmp.ne.s32.totalorder %s134, %s136
      %p143 = scmp.eq.s32.totalorder %s21, 1
      %p144 = por %p142, %p143
      %p145 = scmp.ne.s32.totalorder %s136, %s137
      %p146 = scmp.eq.s32.totalorder %s21, 0
      %p147 = por %p145, %p146
      %p148 = scmp.ne.s32.totalorder %s136, %s137
      %p149 = scmp.eq.s32.totalorder %s22, 1
      %p150 = por %p148, %p149
      %p152 = scmp.ne.s32.totalorder %s137, %s151
      %p153 = scmp.eq.s32.totalorder %s22, 0
      %p154 = por %p152, %p153
      %s156 = sadd.s32 %s155, 1
      %p159 = scmp.eq.s32.totalorder %s16, 1
      %p160 = scmp.ne.s32.totalorder %s155, %s157
      %p161 = scmp.eq.s32.totalorder %s16, 0
      %p162 = por %p160, %p161
      %p163 = scmp.ne.s32.totalorder %s155, %s157
      %p164 = scmp.eq.s32.totalorder %s21, 1
      %p165 = por %p163, %p164
      %p166 = scmp.ne.s32.totalorder %s157, %s158
      %p167 = scmp.eq.s32.totalorder %s21, 0
      %p168 = por %p166, %p167
      %p169 = scmp.ne.s32.totalorder %s157, %s158
      %p170 = scmp.eq.s32.totalorder %s22, 1
      %p171 = por %p169, %p170
      %p173 = scmp.ne.s32.totalorder %s158, %s172
      %p174 = scmp.eq.s32.totalorder %s22, 0
      %p175 = por %p173, %p174
      %s176 = ssub.s32 %s16, %s23
      %p177 = scmp.eq.s32.totalorder %s176, 0
      %s179 = sadd.s32 %s178, 1
      %s180 = scalar_select %p177, %s178, %s179
      %p183 = pneg %p177
      %p184 = scmp.eq.s32.totalorder %s16, 1
      %p185 = por %p183, %p184
      %p186 = scmp.ne.s32.totalorder %s178, %s181
      %p187 = scmp.eq.s32.totalorder %s16, 0
      %p188 = por %p186, %p187
      %p189 = scmp.ne.s32.totalorder %s178, %s181
      %p190 = scmp.eq.s32.totalorder %s21, 1
      %p191 = por %p189, %p190
      %p192 = scmp.ne.s32.totalorder %s181, %s182
      %p193 = scmp.eq.s32.totalorder %s21, 0
      %p194 = por %p192, %p193
      %p195 = scmp.ne.s32.totalorder %s181, %s182
      %p196 = scmp.eq.s32.totalorder %s22, 1
      %p197 = por %p195, %p196
      %p199 = scmp.ne.s32.totalorder %s182, %s198
      %p200 = scmp.eq.s32.totalorder %s22, 0
      %p201 = por %p199, %p200
      %p202 = scmp.le.s32.totalorder 1, %s16
      %p203 = scmp.lt.s32.totalorder %s16, 3
      %p204 = pnand %p202, %p203
      %p205 = pneg %p204
      // Predicated region
      $region9: #{tpu_custom_call.1} parent=5 // pred_check
        _
      $region10: #{tpu_custom_call.1} parent=5 // pred_check_branch
        %207 = sbr.rel (%p204) target = $region12
      $region11: #{tpu_custom_call.1} parent=5 // pred_region
        %s208 = ssub.s32 %s16, 1
        // Predicated region
        $region13: #{tpu_custom_call.1} parent=11 // pred_check
          %p209 = pneg %p63
        $region14: #{tpu_custom_call.1} parent=11 // pred_check_branch
          %211 = sbr.rel (%p209) target = $region16
        $region15: #{tpu_custom_call.1} parent=11 // pred_region
          _
        $region16: #{tpu_custom_call.1} parent=11 // pred_fallthru
          _
        // Predicated region
        $region17: #{tpu_custom_call.1} parent=11 // pred_check
          %p212 = pneg %p84
        $region18: #{tpu_custom_call.1} parent=11 // pred_check_branch
          %214 = sbr.rel (%p212) target = $region20
        $region19: #{tpu_custom_call.1} parent=11 // pred_region
          _
        $region20: #{tpu_custom_call.1} parent=11 // pred_fallthru
          _
        // Predicated region
        $region21: #{tpu_custom_call.1} parent=11 // pred_check
          %p215 = pneg %p105
        $region22: #{tpu_custom_call.1} parent=11 // pred_check_branch
          %217 = sbr.rel (%p215) target = $region24
        $region23: #{tpu_custom_call.1} parent=11 // pred_region
          _
        $region24: #{tpu_custom_call.1} parent=11 // pred_fallthru
          _
        // Predicated region
        $region25: #{tpu_custom_call.1} parent=11 // pred_check
          %p218 = pneg %p126
        $region26: #{tpu_custom_call.1} parent=11 // pred_check_branch
          %220 = sbr.rel (%p218) target = $region28
        $region27: #{tpu_custom_call.1} parent=11 // pred_region
          _
        $region28: #{tpu_custom_call.1} parent=11 // pred_fallthru
          _
        // Predicated region
        $region29: #{tpu_custom_call.1} parent=11 // pred_check
          %p221 = pneg %p147
        $region30: #{tpu_custom_call.1} parent=11 // pred_check_branch
          %223 = sbr.rel (%p221) target = $region32
        $region31: #{tpu_custom_call.1} parent=11 // pred_region
          _
        $region32: #{tpu_custom_call.1} parent=11 // pred_fallthru
          _
        // Predicated region
        $region33: #{tpu_custom_call.1} parent=11 // pred_check
          %p224 = pneg %p168
        $region34: #{tpu_custom_call.1} parent=11 // pred_check_branch
          %226 = sbr.rel (%p224) target = $region36
        $region35: #{tpu_custom_call.1} parent=11 // pred_region
          _
        $region36: #{tpu_custom_call.1} parent=11 // pred_fallthru
          _
      $region12: #{tpu_custom_call.1} parent=5 // pred_fallthru
        _
      %p227 = scmp.lt.s32.totalorder %s16, 2
      // Predicated region
      $region37: #{tpu_custom_call.1} parent=5 // pred_check
        %p228 = pneg %p227
      $region38: #{tpu_custom_call.1} parent=5 // pred_check_branch
        %230 = sbr.rel (%p228) target = $region40
      $region39: #{tpu_custom_call.1} parent=5 // pred_region
        // Predicated region
        $region41: #{tpu_custom_call.1} parent=39 // pred_check
          %p231 = pneg %p36
        $region42: #{tpu_custom_call.1} parent=39 // pred_check_branch
          %233 = sbr.rel (%p231) target = $region44
        $region43: #{tpu_custom_call.1} parent=39 // pred_region
          %p234 = scmp.lt.s32.totalorder %s16, 1
          %s235 = scalar_select %p234, %s16, 1
          %s236 = smul.addr %s235, 32
          %s237 = smul.addr %s236, 8
          %s238 = scalar_lea.vmem %s0, %s237
        $region44: #{tpu_custom_call.1} parent=39 // pred_fallthru
          _
      $region40: #{tpu_custom_call.1} parent=5 // pred_fallthru
        _
      %p239 = scmp.le.s32.totalorder 1, %s16
      %p240 = scmp.lt.s32.totalorder %s16, 3
      %p241 = pnand %p239, %p240
      %p242 = pneg %p241
      // Predicated region
      $region45: #{tpu_custom_call.1} parent=5 // pred_check
        _
      $region46: #{tpu_custom_call.1} parent=5 // pred_check_branch
        %244 = sbr.rel (%p241) target = $region48
      $region47: #{tpu_custom_call.1} parent=5 // pred_region
        %s245 = ssub.s32 %s16, 1
        %p246 = scmp.lt.s32.totalorder %s21, 1
        %s247 = scalar_select %p246, %s21, 1
        %s248 = smul.addr %s247, 32
        %s249 = smul.addr %s248, 8
        %s250 = scalar_lea.vmem %s0, %s249
        %p251 = pneg %p42
        %p252 = pneg %p39
        %p253 = pneg %p63
        %p254 = pneg %p60
        %p255 = pneg %p84
        %p256 = pneg %p81
        %p257 = pneg %p105
        %p258 = pneg %p102
        %p259 = pneg %p126
        %p260 = pneg %p123
        %p261 = pneg %p147
        %p262 = pneg %p144
        %p263 = pneg %p168
        %p264 = pneg %p165
        %p265 = pneg %p194
        %p266 = pneg %p191
        %s267 = sand.u32 %s181, 1
        %s268 = scalar_lea.sflag [#allocation5], %s267
        %s269 = sand.u32 %s181, 1
        %s270 = smul.addr %s269, 256
        %s271 = scalar_lea.vmem [#allocation4], %s270
        %p272 = scmp.lt.s32.totalorder %s21, 1
        %s273 = scalar_select %p272, %s21, 1
        %s274 = smul.addr %s273, 32
        %s275 = smul.addr %s274, 8
        %s276 = scalar_lea.vmem %s0, %s275
        %v278 = vld [vmem:[%s276] sm:$0xff]
        %v279 = vld [vmem:[%s276 + $0x8] sm:$0xff]
        %v280 = vld [vmem:[%s276 + $0x10] sm:$0xff]
        %v281 = vld [vmem:[%s276 + $0x18] sm:$0xff]
        %v282 = vld [vmem:[%s276 + $0x20] sm:$0xff]
        %v283 = vld [vmem:[%s276 + $0x28] sm:$0xff]
        %v284 = vld [vmem:[%s276 + $0x30] sm:$0xff]
        %v285 = vld [vmem:[%s276 + $0x38] sm:$0xff]
        %v286 = vld [vmem:[%s276 + $0x40] sm:$0xff]
        %v287 = vld [vmem:[%s276 + $0x48] sm:$0xff]
        %v288 = vld [vmem:[%s276 + $0x50] sm:$0xff]
        %v289 = vld [vmem:[%s276 + $0x58] sm:$0xff]
        %v290 = vld [vmem:[%s276 + $0x60] sm:$0xff]
        %v291 = vld [vmem:[%s276 + $0x68] sm:$0xff]
        %v292 = vld [vmem:[%s276 + $0x70] sm:$0xff]
        %v293 = vld [vmem:[%s276 + $0x78] sm:$0xff]
        %v294 = vld [vmem:[%s276 + $0x80] sm:$0xff]
        %v295 = vld [vmem:[%s276 + $0x88] sm:$0xff]
        %v296 = vld [vmem:[%s276 + $0x90] sm:$0xff]
        %v297 = vld [vmem:[%s276 + $0x98] sm:$0xff]
        %v298 = vld [vmem:[%s276 + $0xa0] sm:$0xff]
        %v299 = vld [vmem:[%s276 + $0xa8] sm:$0xff]
        %v300 = vld [vmem:[%s276 + $0xb0] sm:$0xff]
        %v301 = vld [vmem:[%s276 + $0xb8] sm:$0xff]
        %v302 = vld [vmem:[%s276 + $0xc0] sm:$0xff]
        %v303 = vld [vmem:[%s276 + $0xc8] sm:$0xff]
        %v304 = vld [vmem:[%s276 + $0xd0] sm:$0xff]
        %v305 = vld [vmem:[%s276 + $0xd8] sm:$0xff]
        %v306 = vld [vmem:[%s276 + $0xe0] sm:$0xff]
        %v307 = vld [vmem:[%s276 + $0xe8] sm:$0xff]
        %v308 = vld [vmem:[%s276 + $0xf0] sm:$0xff]
        %v309 = vld [vmem:[%s276 + $0xf8] sm:$0xff]
        %v310 = vld [vmem:[%s1] sm:$0x1]
        %v312 = vlaneseq
        %v313 = vshrl.u32 %v312, 7
        %v314 = vsub.s32 0, %v313
        %v315 = vrot.slane %v310, %v314
        %v317 = vmul.f32 %v278, %v315
        %v318 = vmul.f32 %v279, %v315
        %v319 = vmul.f32 %v280, %v315
        %v320 = vmul.f32 %v281, %v315
        %v321 = vmul.f32 %v282, %v315
        %v322 = vmul.f32 %v283, %v315
        %v323 = vmul.f32 %v284, %v315
        %v324 = vmul.f32 %v285, %v315
        %v325 = vmul.f32 %v286, %v315
        %v326 = vmul.f32 %v287, %v315
        %v327 = vmul.f32 %v288, %v315
        %v328 = vmul.f32 %v289, %v315
        %v329 = vmul.f32 %v290, %v315
        %v330 = vmul.f32 %v291, %v315
        %v331 = vmul.f32 %v292, %v315
        %v332 = vmul.f32 %v293, %v315
        %v333 = vmul.f32 %v294, %v315
        %v334 = vmul.f32 %v295, %v315
        %v335 = vmul.f32 %v296, %v315
        %v336 = vmul.f32 %v297, %v315
        %v337 = vmul.f32 %v298, %v315
        %v338 = vmul.f32 %v299, %v315
        %v339 = vmul.f32 %v300, %v315
        %v340 = vmul.f32 %v301, %v315
        %v341 = vmul.f32 %v302, %v315
        %v342 = vmul.f32 %v303, %v315
        %v343 = vmul.f32 %v304, %v315
        %v344 = vmul.f32 %v305, %v315
        %v345 = vmul.f32 %v306, %v315
        %v346 = vmul.f32 %v307, %v315
        %v347 = vmul.f32 %v308, %v315
        %v348 = vmul.f32 %v309, %v315
        %v349 = vld [vmem:[%s2] sm:$0x1]
        %v351 = vlaneseq
        %v352 = vshrl.u32 %v351, 7
        %v353 = vsub.s32 0, %v352
        %v354 = vrot.slane %v349, %v353
        %v356 = vadd.f32 %v317, %v354
        %v357 = vadd.f32 %v318, %v354
        %v358 = vadd.f32 %v319, %v354
        %v359 = vadd.f32 %v320, %v354
        %v360 = vadd.f32 %v321, %v354
        %v361 = vadd.f32 %v322, %v354
        %v362 = vadd.f32 %v323, %v354
        %v363 = vadd.f32 %v324, %v354
        %v364 = vadd.f32 %v325, %v354
        %v365 = vadd.f32 %v326, %v354
        %v366 = vadd.f32 %v327, %v354
        %v367 = vadd.f32 %v328, %v354
        %v368 = vadd.f32 %v329, %v354
        %v369 = vadd.f32 %v330, %v354
        %v370 = vadd.f32 %v331, %v354
        %v371 = vadd.f32 %v332, %v354
        %v372 = vadd.f32 %v333, %v354
        %v373 = vadd.f32 %v334, %v354
        %v374 = vadd.f32 %v335, %v354
        %v375 = vadd.f32 %v336, %v354
        %v376 = vadd.f32 %v337, %v354
        %v377 = vadd.f32 %v338, %v354
        %v378 = vadd.f32 %v339, %v354
        %v379 = vadd.f32 %v340, %v354
        %v380 = vadd.f32 %v341, %v354
        %v381 = vadd.f32 %v342, %v354
        %v382 = vadd.f32 %v343, %v354
        %v383 = vadd.f32 %v344, %v354
        %v384 = vadd.f32 %v345, %v354
        %v385 = vadd.f32 %v346, %v354
        %v386 = vadd.f32 %v347, %v354
        %v387 = vadd.f32 %v348, %v354
        %v388 = vmax.f32 %v356, 0.0
        %v389 = vmax.f32 %v357, 0.0
        %v390 = vmax.f32 %v358, 0.0
        %v391 = vmax.f32 %v359, 0.0
        %v392 = vmax.f32 %v360, 0.0
        %v393 = vmax.f32 %v361, 0.0
        %v394 = vmax.f32 %v362, 0.0
        %v395 = vmax.f32 %v363, 0.0
        %v396 = vmax.f32 %v364, 0.0
        %v397 = vmax.f32 %v365, 0.0
        %v398 = vmax.f32 %v366, 0.0
        %v399 = vmax.f32 %v367, 0.0
        %v400 = vmax.f32 %v368, 0.0
        %v401 = vmax.f32 %v369, 0.0
        %v402 = vmax.f32 %v370, 0.0
        %v403 = vmax.f32 %v371, 0.0
        %v404 = vmax.f32 %v372, 0.0
        %v405 = vmax.f32 %v373, 0.0
        %v406 = vmax.f32 %v374, 0.0
        %v407 = vmax.f32 %v375, 0.0
        %v408 = vmax.f32 %v376, 0.0
        %v409 = vmax.f32 %v377, 0.0
        %v410 = vmax.f32 %v378, 0.0
        %v411 = vmax.f32 %v379, 0.0
        %v412 = vmax.f32 %v380, 0.0
        %v413 = vmax.f32 %v381, 0.0
        %v414 = vmax.f32 %v382, 0.0
        %v415 = vmax.f32 %v383, 0.0
        %v416 = vmax.f32 %v384, 0.0
        %v417 = vmax.f32 %v385, 0.0
        %v418 = vmax.f32 %v386, 0.0
        %v419 = vmax.f32 %v387, 0.0
        %v420 = vpack.c.bf16 %v389, %v388
        %v421 = vpack.c.bf16 %v391, %v390
        %v422 = vpack.c.bf16 %v393, %v392
        %v423 = vpack.c.bf16 %v395, %v394
        %v424 = vpack.c.bf16 %v397, %v396
        %v425 = vpack.c.bf16 %v399, %v398
        %v426 = vpack.c.bf16 %v401, %v400
        %v427 = vpack.c.bf16 %v403, %v402
        %v428 = vpack.c.bf16 %v405, %v404
        %v429 = vpack.c.bf16 %v407, %v406
        %v430 = vpack.c.bf16 %v409, %v408
        %v431 = vpack.c.bf16 %v411, %v410
        %v432 = vpack.c.bf16 %v413, %v412
        %v433 = vpack.c.bf16 %v415, %v414
        %v434 = vpack.c.bf16 %v417, %v416
        %v435 = vpack.c.bf16 %v419, %v418
        %v436 = vld [vmem:[%s3] sm:$0xf]
        %v437 = vld [vmem:[%s3 + $0x4] sm:$0xf]
        %v438 = vld [vmem:[%s3 + $0x8] sm:$0xf]
        %v439 = vld [vmem:[%s3 + $0xc] sm:$0xf]
        %v440 = vld [vmem:[%s3 + $0x10] sm:$0xf]
        %v441 = vld [vmem:[%s3 + $0x14] sm:$0xf]
        %v442 = vld [vmem:[%s3 + $0x18] sm:$0xf]
        %v443 = vld [vmem:[%s3 + $0x1c] sm:$0xf]
        %v452 = vunpack.c.l.b16 %v436
        %v453 = vunpack.c.l.b16 %v437
        %v454 = vunpack.c.l.b16 %v438
        %v455 = vunpack.c.l.b16 %v439
        %v456 = vunpack.c.l.b16 %v440
        %v457 = vunpack.c.l.b16 %v441
        %v458 = vunpack.c.l.b16 %v442
        %v459 = vunpack.c.l.b16 %v443
        %v460 = vpack.c.b16 %v453, %v452
        %v461 = vpack.c.b16 %v455, %v454
        %v462 = vpack.c.b16 %v457, %v456
        %v463 = vpack.c.b16 %v459, %v458
        %vm468 = vcmask 523264
        %v470 = vsel %vm468, %v420, 0
        %v473 = vsel %vm468, %v421, 0
        %v476 = vsel %vm468, %v422, 0
        %v479 = vsel %vm468, %v423, 0
        %v482 = vsel %vm468, %v424, 0
        %v485 = vsel %vm468, %v425, 0
        %v488 = vsel %vm468, %v426, 0
        %v491 = vsel %vm468, %v427, 0
        %v494 = vsel %vm468, %v428, 0
        %v497 = vsel %vm468, %v429, 0
        %v500 = vsel %vm468, %v430, 0
        %v503 = vsel %vm468, %v431, 0
        %v506 = vsel %vm468, %v432, 0
        %v509 = vsel %vm468, %v433, 0
        %v512 = vsel %vm468, %v434, 0
        %v515 = vsel %vm468, %v435, 0
        %517 = vmatprep.subr.bf16.mxu0 0
        %518 = vmatpush1.bf16.msra.mxu0 0
        %519 = vmatprep.subr.bf16.mxu0 0
        %520 = vmatpush1.bf16.msra.mxu0 0
        %521 = vmatprep.subr.bf16.mxu0 0
        %522 = vmatpush1.bf16.msra.mxu0 0
        %523 = vmatprep.subr.bf16.mxu0 0
        %524 = vmatpush1.bf16.msra.mxu0 0
        %525 = vmatprep.subr.bf16.mxu0 0
        %526 = vmatpush1.bf16.msra.mxu0 %v463
        %527 = vmatprep.subr.bf16.mxu0 0
        %528 = vmatpush1.bf16.msra.mxu0 %v462
        %529 = vmatprep.subr.bf16.mxu0 0
        %530 = vmatpush1.bf16.msra.mxu0 %v461
        %531 = vmatprep.subr.bf16.mxu0 0
        %532 = vmatpush1.bf16.msra.mxu0 %v460
        %533 = vmatprep.subr.bf16.mxu0 0
        %534 = vmatpush2.bf16.msra.mxu0 0
        %535 = vmatprep.subr.bf16.mxu0 0
        %536 = vmatpush2.bf16.msra.mxu0 0
        %537 = vmatprep.subr.bf16.mxu0 0
        %538 = vmatpush2.bf16.msra.mxu0 0
        %539 = vmatprep.subr.bf16.mxu0 0
        %540 = vmatpush2.bf16.msra.mxu0 0
        %541 = vmatprep.subr.bf16.mxu0 0
        %542 = vmatpush2.bf16.msra.mxu0 0
        %543 = vmatprep.subr.bf16.mxu0 0
        %544 = vmatpush2.bf16.msra.mxu0 0
        %545 = vmatprep.subr.bf16.mxu0 0
        %546 = vmatpush2.bf16.msra.mxu0 0
        %547 = vmatprep.subr.bf16.mxu0 0
        %548 = vmatpush2.bf16.msra.mxu0 0
        %549 = vmatprep.mubr.bf16.mxu0 0
        %550 = vmatmul.mubr.bf16.gmra.mxu0 %v470
        %v551 = vpop.f32.mrf.mxu0
        %v552 = vadd.f32 0.0, %v551
        %v553 = vpop.f32.mrf.mxu0
        %v554 = vpop.f32.mrf.mxu0
        %v555 = vadd.f32 0.0, %v554
        %v556 = vpop.f32.mrf.mxu0
        %557 = vmatprep.mubr.bf16.mxu0 0
        %558 = vmatmul.mubr.bf16.gmra.mxu0 %v473
        %v559 = vpop.f32.mrf.mxu0
        %v560 = vadd.f32 0.0, %v559
        %v561 = vpop.f32.mrf.mxu0
        %v562 = vpop.f32.mrf.mxu0
        %v563 = vadd.f32 0.0, %v562
        %v564 = vpop.f32.mrf.mxu0
        %565 = vmatprep.mubr.bf16.mxu0 0
        %566 = vmatmul.mubr.bf16.gmra.mxu0 %v476
        %v567 = vpop.f32.mrf.mxu0
        %v568 = vadd.f32 0.0, %v567
        %v569 = vpop.f32.mrf.mxu0
        %v570 = vpop.f32.mrf.mxu0
        %v571 = vadd.f32 0.0, %v570
        %v572 = vpop.f32.mrf.mxu0
        %573 = vmatprep.mubr.bf16.mxu0 0
        %574 = vmatmul.mubr.bf16.gmra.mxu0 %v479
        %v575 = vpop.f32.mrf.mxu0
        %v576 = vadd.f32 0.0, %v575
        %v577 = vpop.f32.mrf.mxu0
        %v578 = vpop.f32.mrf.mxu0
        %v579 = vadd.f32 0.0, %v578
        %v580 = vpop.f32.mrf.mxu0
        %581 = vmatprep.mubr.bf16.mxu0 0
        %582 = vmatmul.mubr.bf16.gmra.mxu0 %v482
        %v583 = vpop.f32.mrf.mxu0
        %v584 = vadd.f32 0.0, %v583
        %v585 = vpop.f32.mrf.mxu0
        %v586 = vpop.f32.mrf.mxu0
        %v587 = vadd.f32 0.0, %v586
        %v588 = vpop.f32.mrf.mxu0
        %589 = vmatprep.mubr.bf16.mxu0 0
        %590 = vmatmul.mubr.bf16.gmra.mxu0 %v485
        %v591 = vpop.f32.mrf.mxu0
        %v592 = vadd.f32 0.0, %v591
        %v593 = vpop.f32.mrf.mxu0
        %v594 = vpop.f32.mrf.mxu0
        %v595 = vadd.f32 0.0, %v594
        %v596 = vpop.f32.mrf.mxu0
        %597 = vmatprep.mubr.bf16.mxu0 0
        %598 = vmatmul.mubr.bf16.gmra.mxu0 %v488
        %v599 = vpop.f32.mrf.mxu0
        %v600 = vadd.f32 0.0, %v599
        %v601 = vpop.f32.mrf.mxu0
        %v602 = vpop.f32.mrf.mxu0
        %v603 = vadd.f32 0.0, %v602
        %v604 = vpop.f32.mrf.mxu0
        %605 = vmatprep.mubr.bf16.mxu0 0
        %606 = vmatmul.mubr.bf16.gmra.mxu0 %v491
        %v607 = vpop.f32.mrf.mxu0
        %v608 = vadd.f32 0.0, %v607
        %v609 = vpop.f32.mrf.mxu0
        %v610 = vpop.f32.mrf.mxu0
        %v611 = vadd.f32 0.0, %v610
        %v612 = vpop.f32.mrf.mxu0
        %613 = vmatprep.mubr.bf16.mxu0 0
        %614 = vmatmul.mubr.bf16.gmra.mxu0 %v494
        %v615 = vpop.f32.mrf.mxu0
        %v616 = vadd.f32 0.0, %v615
        %v617 = vpop.f32.mrf.mxu0
        %v618 = vpop.f32.mrf.mxu0
        %v619 = vadd.f32 0.0, %v618
        %v620 = vpop.f32.mrf.mxu0
        %621 = vmatprep.mubr.bf16.mxu0 0
        %622 = vmatmul.mubr.bf16.gmra.mxu0 %v497
        %v623 = vpop.f32.mrf.mxu0
        %v624 = vadd.f32 0.0, %v623
        %v625 = vpop.f32.mrf.mxu0
        %v626 = vpop.f32.mrf.mxu0
        %v627 = vadd.f32 0.0, %v626
        %v628 = vpop.f32.mrf.mxu0
        %629 = vmatprep.mubr.bf16.mxu0 0
        %630 = vmatmul.mubr.bf16.gmra.mxu0 %v500
        %v631 = vpop.f32.mrf.mxu0
        %v632 = vadd.f32 0.0, %v631
        %v633 = vpop.f32.mrf.mxu0
        %v634 = vpop.f32.mrf.mxu0
        %v635 = vadd.f32 0.0, %v634
        %v636 = vpop.f32.mrf.mxu0
        %637 = vmatprep.mubr.bf16.mxu0 0
        %638 = vmatmul.mubr.bf16.gmra.mxu0 %v503
        %v639 = vpop.f32.mrf.mxu0
        %v640 = vadd.f32 0.0, %v639
        %v641 = vpop.f32.mrf.mxu0
        %v642 = vpop.f32.mrf.mxu0
        %v643 = vadd.f32 0.0, %v642
        %v644 = vpop.f32.mrf.mxu0
        %645 = vmatprep.mubr.bf16.mxu0 0
        %646 = vmatmul.mubr.bf16.gmra.mxu0 %v506
        %v647 = vpop.f32.mrf.mxu0
        %v648 = vadd.f32 0.0, %v647
        %v649 = vpop.f32.mrf.mxu0
        %v650 = vpop.f32.mrf.mxu0
        %v651 = vadd.f32 0.0, %v650
        %v652 = vpop.f32.mrf.mxu0
        %653 = vmatprep.mubr.bf16.mxu0 0
        %654 = vmatmul.mubr.bf16.gmra.mxu0 %v509
        %v655 = vpop.f32.mrf.mxu0
        %v656 = vadd.f32 0.0, %v655
        %v657 = vpop.f32.mrf.mxu0
        %v658 = vpop.f32.mrf.mxu0
        %v659 = vadd.f32 0.0, %v658
        %v660 = vpop.f32.mrf.mxu0
        %661 = vmatprep.mubr.bf16.mxu0 0
        %662 = vmatmul.mubr.bf16.gmra.mxu0 %v512
        %v663 = vpop.f32.mrf.mxu0
        %v664 = vadd.f32 0.0, %v663
        %v665 = vpop.f32.mrf.mxu0
        %v666 = vpop.f32.mrf.mxu0
        %v667 = vadd.f32 0.0, %v666
        %v668 = vpop.f32.mrf.mxu0
        %669 = vmatprep.mubr.bf16.mxu0 0
        %670 = vmatmul.mubr.bf16.gmra.mxu0 %v515
        %v671 = vpop.f32.mrf.mxu0
        %v672 = vadd.f32 0.0, %v671
        %v673 = vpop.f32.mrf.mxu0
        %v674 = vpop.f32.mrf.mxu0
        %v675 = vadd.f32 0.0, %v674
        %v676 = vpop.f32.mrf.mxu0
        %677 = vdwg.mxu0
        %v678 = vld [vmem:[%s4] sm:$0x1]
        %v680 = vlaneseq
        %v681 = vshrl.u32 %v680, 7
        %v682 = vsub.s32 0, %v681
        %v683 = vrot.slane %v678, %v682
        %v685 = vmul.f32 %v552, %v683
        %v686 = vmul.f32 %v555, %v683
        %v687 = vmul.f32 %v560, %v683
        %v688 = vmul.f32 %v563, %v683
        %v689 = vmul.f32 %v568, %v683
        %v690 = vmul.f32 %v571, %v683
        %v691 = vmul.f32 %v576, %v683
        %v692 = vmul.f32 %v579, %v683
        %v693 = vmul.f32 %v584, %v683
        %v694 = vmul.f32 %v587, %v683
        %v695 = vmul.f32 %v592, %v683
        %v696 = vmul.f32 %v595, %v683
        %v697 = vmul.f32 %v600, %v683
        %v698 = vmul.f32 %v603, %v683
        %v699 = vmul.f32 %v608, %v683
        %v700 = vmul.f32 %v611, %v683
        %v701 = vmul.f32 %v616, %v683
        %v702 = vmul.f32 %v619, %v683
        %v703 = vmul.f32 %v624, %v683
        %v704 = vmul.f32 %v627, %v683
        %v705 = vmul.f32 %v632, %v683
        %v706 = vmul.f32 %v635, %v683
        %v707 = vmul.f32 %v640, %v683
        %v708 = vmul.f32 %v643, %v683
        %v709 = vmul.f32 %v648, %v683
        %v710 = vmul.f32 %v651, %v683
        %v711 = vmul.f32 %v656, %v683
        %v712 = vmul.f32 %v659, %v683
        %v713 = vmul.f32 %v664, %v683
        %v714 = vmul.f32 %v667, %v683
        %v715 = vmul.f32 %v672, %v683
        %v716 = vmul.f32 %v675, %v683
        %v717 = vld [vmem:[%s5] sm:$0x1]
        %v719 = vlaneseq
        %v720 = vshrl.u32 %v719, 7
        %v721 = vsub.s32 0, %v720
        %v722 = vrot.slane %v717, %v721
        %v724 = vadd.f32 %v685, %v722
        %v725 = vadd.f32 %v686, %v722
        %v726 = vadd.f32 %v687, %v722
        %v727 = vadd.f32 %v688, %v722
        %v728 = vadd.f32 %v689, %v722
        %v729 = vadd.f32 %v690, %v722
        %v730 = vadd.f32 %v691, %v722
        %v731 = vadd.f32 %v692, %v722
        %v732 = vadd.f32 %v693, %v722
        %v733 = vadd.f32 %v694, %v722
        %v734 = vadd.f32 %v695, %v722
        %v735 = vadd.f32 %v696, %v722
        %v736 = vadd.f32 %v697, %v722
        %v737 = vadd.f32 %v698, %v722
        %v738 = vadd.f32 %v699, %v722
        %v739 = vadd.f32 %v700, %v722
        %v740 = vadd.f32 %v701, %v722
        %v741 = vadd.f32 %v702, %v722
        %v742 = vadd.f32 %v703, %v722
        %v743 = vadd.f32 %v704, %v722
        %v744 = vadd.f32 %v705, %v722
        %v745 = vadd.f32 %v706, %v722
        %v746 = vadd.f32 %v707, %v722
        %v747 = vadd.f32 %v708, %v722
        %v748 = vadd.f32 %v709, %v722
        %v749 = vadd.f32 %v710, %v722
        %v750 = vadd.f32 %v711, %v722
        %v751 = vadd.f32 %v712, %v722
        %v752 = vadd.f32 %v713, %v722
        %v753 = vadd.f32 %v714, %v722
        %v754 = vadd.f32 %v715, %v722
        %v755 = vadd.f32 %v716, %v722
        %v756 = vmax.f32 %v724, 0.0
        %v757 = vmax.f32 %v725, 0.0
        %v758 = vmax.f32 %v726, 0.0
        %v759 = vmax.f32 %v727, 0.0
        %v760 = vmax.f32 %v728, 0.0
        %v761 = vmax.f32 %v729, 0.0
        %v762 = vmax.f32 %v730, 0.0
        %v763 = vmax.f32 %v731, 0.0
        %v764 = vmax.f32 %v732, 0.0
        %v765 = vmax.f32 %v733, 0.0
        %v766 = vmax.f32 %v734, 0.0
        %v767 = vmax.f32 %v735, 0.0
        %v768 = vmax.f32 %v736, 0.0
        %v769 = vmax.f32 %v737, 0.0
        %v770 = vmax.f32 %v738, 0.0
        %v771 = vmax.f32 %v739, 0.0
        %v772 = vmax.f32 %v740, 0.0
        %v773 = vmax.f32 %v741, 0.0
        %v774 = vmax.f32 %v742, 0.0
        %v775 = vmax.f32 %v743, 0.0
        %v776 = vmax.f32 %v744, 0.0
        %v777 = vmax.f32 %v745, 0.0
        %v778 = vmax.f32 %v746, 0.0
        %v779 = vmax.f32 %v747, 0.0
        %v780 = vmax.f32 %v748, 0.0
        %v781 = vmax.f32 %v749, 0.0
        %v782 = vmax.f32 %v750, 0.0
        %v783 = vmax.f32 %v751, 0.0
        %v784 = vmax.f32 %v752, 0.0
        %v785 = vmax.f32 %v753, 0.0
        %v786 = vmax.f32 %v754, 0.0
        %v787 = vmax.f32 %v755, 0.0
        %s788 = scalar_lea.vmem [#allocation2], 24
        %789 = vst [vmem:[%s788 + $0x1] sm:$0xff] %v756
        %790 = vst [vmem:[%s788 + $0x9] sm:$0xff] %v757
        %791 = vst [vmem:[%s788 + $0x19] sm:$0xff] %v758
        %792 = vst [vmem:[%s788 + $0x21] sm:$0xff] %v759
        %793 = vst [vmem:[%s788 + $0x31] sm:$0xff] %v760
        %794 = vst [vmem:[%s788 + $0x39] sm:$0xff] %v761
        %795 = vst [vmem:[%s788 + $0x49] sm:$0xff] %v762
        %796 = vst [vmem:[%s788 + $0x51] sm:$0xff] %v763
        %797 = vst [vmem:[%s788 + $0x61] sm:$0xff] %v764
        %798 = vst [vmem:[%s788 + $0x69] sm:$0xff] %v765
        %799 = vst [vmem:[%s788 + $0x79] sm:$0xff] %v766
        %800 = vst [vmem:[%s788 + $0x81] sm:$0xff] %v767
        %801 = vst [vmem:[%s788 + $0x91] sm:$0xff] %v768
        %802 = vst [vmem:[%s788 + $0x99] sm:$0xff] %v769
        %803 = vst [vmem:[%s788 + $0xa9] sm:$0xff] %v770
        %804 = vst [vmem:[%s788 + $0xb1] sm:$0xff] %v771
        %805 = vst [vmem:[%s788 + $0xc1] sm:$0xff] %v772
        %806 = vst [vmem:[%s788 + $0xc9] sm:$0xff] %v773
        %807 = vst [vmem:[%s788 + $0xd9] sm:$0xff] %v774
        %808 = vst [vmem:[%s788 + $0xe1] sm:$0xff] %v775
        %809 = vst [vmem:[%s788 + $0xf1] sm:$0xff] %v776
        %810 = vst [vmem:[%s788 + $0xf9] sm:$0xff] %v777
        %811 = vst [vmem:[%s788 + $0x109] sm:$0xff] %v778
        %812 = vst [vmem:[%s788 + $0x111] sm:$0xff] %v779
        %813 = vst [vmem:[%s788 + $0x121] sm:$0xff] %v780
        %814 = vst [vmem:[%s788 + $0x129] sm:$0xff] %v781
        %815 = vst [vmem:[%s788 + $0x139] sm:$0xff] %v782
        %816 = vst [vmem:[%s788 + $0x141] sm:$0xff] %v783
        %817 = vst [vmem:[%s788 + $0x151] sm:$0xff] %v784
        %818 = vst [vmem:[%s788 + $0x159] sm:$0xff] %v785
        %819 = vst [vmem:[%s788 + $0x169] sm:$0xff] %v786
        %820 = vst [vmem:[%s788 + $0x171] sm:$0xff] %v787
        %821 = vst [vmem:[#allocation2] sm:$0xff] 0.0
        %822 = vst [vmem:[#allocation2 + $0x8] sm:$0xff] 0.0
        %823 = vst [vmem:[#allocation2 + $0x10] sm:$0x3] 0.0
        %s824 = scalar_lea.vmem [#allocation2], 408
        %825 = vst [vmem:[%s824] sm:$0xff] 0.0
        %826 = vst [vmem:[%s824 + $0x8] sm:$0xff] 0.0
        %827 = vst [vmem:[%s824 + $0x10] sm:$0x3] 0.0
        %828 = vst [vmem:[#allocation2] sm:$0x1] 0.0
        %829 = vst [vmem:[#allocation2 + $0x18] sm:$0x1] 0.0
        %830 = vst [vmem:[#allocation2 + $0x30] sm:$0x1] 0.0
        %831 = vst [vmem:[#allocation2 + $0x48] sm:$0x1] 0.0
        %832 = vst [vmem:[#allocation2 + $0x60] sm:$0x1] 0.0
        %833 = vst [vmem:[#allocation2 + $0x78] sm:$0x1] 0.0
        %834 = vst [vmem:[#allocation2 + $0x90] sm:$0x1] 0.0
        %835 = vst [vmem:[#allocation2 + $0xa8] sm:$0x1] 0.0
        %836 = vst [vmem:[#allocation2 + $0xc0] sm:$0x1] 0.0
        %837 = vst [vmem:[#allocation2 + $0xd8] sm:$0x1] 0.0
        %838 = vst [vmem:[#allocation2 + $0xf0] sm:$0x1] 0.0
        %839 = vst [vmem:[#allocation2 + $0x108] sm:$0x1] 0.0
        %840 = vst [vmem:[#allocation2 + $0x120] sm:$0x1] 0.0
        %841 = vst [vmem:[#allocation2 + $0x138] sm:$0x1] 0.0
        %842 = vst [vmem:[#allocation2 + $0x150] sm:$0x1] 0.0
        %843 = vst [vmem:[#allocation2 + $0x168] sm:$0x1] 0.0
        %844 = vst [vmem:[#allocation2 + $0x180] sm:$0x1] 0.0
        %845 = vst [vmem:[#allocation2 + $0x198] sm:$0x1] 0.0
        %846 = vst [vmem:[#allocation2 + $0x11] sm:$0x1] 0.0
        %847 = vst [vmem:[#allocation2 + $0x29] sm:$0x1] 0.0
        %848 = vst [vmem:[#allocation2 + $0x41] sm:$0x1] 0.0
        %849 = vst [vmem:[#allocation2 + $0x59] sm:$0x1] 0.0
        %850 = vst [vmem:[#allocation2 + $0x71] sm:$0x1] 0.0
        %851 = vst [vmem:[#allocation2 + $0x89] sm:$0x1] 0.0
        %852 = vst [vmem:[#allocation2 + $0xa1] sm:$0x1] 0.0
        %853 = vst [vmem:[#allocation2 + $0xb9] sm:$0x1] 0.0
        %854 = vst [vmem:[#allocation2 + $0xd1] sm:$0x1] 0.0
        %855 = vst [vmem:[#allocation2 + $0xe9] sm:$0x1] 0.0
        %856 = vst [vmem:[#allocation2 + $0x101] sm:$0x1] 0.0
        %857 = vst [vmem:[#allocation2 + $0x119] sm:$0x1] 0.0
        %858 = vst [vmem:[#allocation2 + $0x131] sm:$0x1] 0.0
        %859 = vst [vmem:[#allocation2 + $0x149] sm:$0x1] 0.0
        %860 = vst [vmem:[#allocation2 + $0x161] sm:$0x1] 0.0
        %861 = vst [vmem:[#allocation2 + $0x179] sm:$0x1] 0.0
        %862 = vst [vmem:[#allocation2 + $0x191] sm:$0x1] 0.0
        %863 = vst [vmem:[#allocation2 + $0x1a9] sm:$0x1] 0.0
        %v864 = vld [vmem:[#allocation2] sm:$0xff]
        %v865 = vld [vmem:[#allocation2 + $0x8] sm:$0xff]
        %v866 = vld [vmem:[#allocation2 + $0x18] sm:$0xff]
        %v867 = vld [vmem:[#allocation2 + $0x20] sm:$0xff]
        %v868 = vld [vmem:[#allocation2 + $0x30] sm:$0xff]
        %v869 = vld [vmem:[#allocation2 + $0x38] sm:$0xff]
        %v870 = vld [vmem:[#allocation2 + $0x48] sm:$0xff]
        %v871 = vld [vmem:[#allocation2 + $0x50] sm:$0xff]
        %v872 = vld [vmem:[#allocation2 + $0x60] sm:$0xff]
        %v873 = vld [vmem:[#allocation2 + $0x68] sm:$0xff]
        %v874 = vld [vmem:[#allocation2 + $0x78] sm:$0xff]
        %v875 = vld [vmem:[#allocation2 + $0x80] sm:$0xff]
        %v876 = vld [vmem:[#allocation2 + $0x90] sm:$0xff]
        %v877 = vld [vmem:[#allocation2 + $0x98] sm:$0xff]
        %v878 = vld [vmem:[#allocation2 + $0xa8] sm:$0xff]
        %v879 = vld [vmem:[#allocation2 + $0xb0] sm:$0xff]
        %v880 = vld [vmem:[#allocation2 + $0xc0] sm:$0xff]
        %v881 = vld [vmem:[#allocation2 + $0xc8] sm:$0xff]
        %v882 = vld [vmem:[#allocation2 + $0xd8] sm:$0xff]
        %v883 = vld [vmem:[#allocation2 + $0xe0] sm:$0xff]
        %v884 = vld [vmem:[#allocation2 + $0xf0] sm:$0xff]
        %v885 = vld [vmem:[#allocation2 + $0xf8] sm:$0xff]
        %v886 = vld [vmem:[#allocation2 + $0x108] sm:$0xff]
        %v887 = vld [vmem:[#allocation2 + $0x110] sm:$0xff]
        %v888 = vld [vmem:[#allocation2 + $0x120] sm:$0xff]
        %v889 = vld [vmem:[#allocation2 + $0x128] sm:$0xff]
        %v890 = vld [vmem:[#allocation2 + $0x138] sm:$0xff]
        %v891 = vld [vmem:[#allocation2 + $0x140] sm:$0xff]
        %v892 = vld [vmem:[#allocation2 + $0x150] sm:$0xff]
        %v893 = vld [vmem:[#allocation2 + $0x158] sm:$0xff]
        %v894 = vld [vmem:[#allocation2 + $0x168] sm:$0xff]
        %v895 = vld [vmem:[#allocation2 + $0x170] sm:$0xff]
        %v896 = vpack.c.bf16 %v865, %v864
        %v897 = vpack.c.bf16 %v867, %v866
        %v898 = vpack.c.bf16 %v869, %v868
        %v899 = vpack.c.bf16 %v871, %v870
        %v900 = vpack.c.bf16 %v873, %v872
        %v901 = vpack.c.bf16 %v875, %v874
        %v902 = vpack.c.bf16 %v877, %v876
        %v903 = vpack.c.bf16 %v879, %v878
        %v904 = vpack.c.bf16 %v881, %v880
        %v905 = vpack.c.bf16 %v883, %v882
        %v906 = vpack.c.bf16 %v885, %v884
        %v907 = vpack.c.bf16 %v887, %v886
        %v908 = vpack.c.bf16 %v889, %v888
        %v909 = vpack.c.bf16 %v891, %v890
        %v910 = vpack.c.bf16 %v893, %v892
        %v911 = vpack.c.bf16 %v895, %v894
        %v928 = vunpack.c.l.b16 %v896
        %v929 = vunpack.c.h.b16 %v896
        %v930 = vunpack.c.l.b16 %v897
        %v931 = vunpack.c.h.b16 %v897
        %v932 = vunpack.c.l.b16 %v898
        %v933 = vunpack.c.h.b16 %v898
        %v934 = vunpack.c.l.b16 %v899
        %v935 = vunpack.c.h.b16 %v899
        %v936 = vunpack.c.l.b16 %v900
        %v937 = vunpack.c.h.b16 %v900
        %v938 = vunpack.c.l.b16 %v901
        %v939 = vunpack.c.h.b16 %v901
        %v940 = vunpack.c.l.b16 %v902
        %v941 = vunpack.c.h.b16 %v902
        %v942 = vunpack.c.l.b16 %v903
        %v943 = vunpack.c.h.b16 %v903
        %v944 = vunpack.c.l.b16 %v904
        %v945 = vunpack.c.h.b16 %v904
        %v946 = vunpack.c.l.b16 %v905
        %v947 = vunpack.c.h.b16 %v905
        %v948 = vunpack.c.l.b16 %v906
        %v949 = vunpack.c.h.b16 %v906
        %v950 = vunpack.c.l.b16 %v907
        %v951 = vunpack.c.h.b16 %v907
        %v952 = vunpack.c.l.b16 %v908
        %v953 = vunpack.c.h.b16 %v908
        %v954 = vunpack.c.l.b16 %v909
        %v955 = vunpack.c.h.b16 %v909
        %v956 = vunpack.c.l.b16 %v910
        %v957 = vunpack.c.h.b16 %v910
        %v958 = vunpack.c.l.b16 %v911
        %v959 = vunpack.c.h.b16 %v911
        %v960 = vpack.c.b16 %v928, %v928
        %v961 = vpack.c.b16 %v929, %v929
        %v962 = vpack.c.b16 %v930, %v930
        %v963 = vpack.c.b16 %v931, %v931
        %v964 = vpack.c.b16 %v932, %v932
        %v965 = vpack.c.b16 %v933, %v933
        %v966 = vpack.c.b16 %v934, %v934
        %v967 = vpack.c.b16 %v935, %v935
        %v968 = vpack.c.b16 %v936, %v936
        %v969 = vpack.c.b16 %v937, %v937
        %v970 = vpack.c.b16 %v938, %v938
        %v971 = vpack.c.b16 %v939, %v939
        %v972 = vpack.c.b16 %v940, %v940
        %v973 = vpack.c.b16 %v941, %v941
        %v974 = vpack.c.b16 %v942, %v942
        %v975 = vpack.c.b16 %v943, %v943
        %v976 = vpack.c.b16 %v944, %v944
        %v977 = vpack.c.b16 %v945, %v945
        %v978 = vpack.c.b16 %v946, %v946
        %v979 = vpack.c.b16 %v947, %v947
        %v980 = vpack.c.b16 %v948, %v948
        %v981 = vpack.c.b16 %v949, %v949
        %v982 = vpack.c.b16 %v950, %v950
        %v983 = vpack.c.b16 %v951, %v951
        %v984 = vpack.c.b16 %v952, %v952
        %v985 = vpack.c.b16 %v953, %v953
        %v986 = vpack.c.b16 %v954, %v954
        %v987 = vpack.c.b16 %v955, %v955
        %v988 = vpack.c.b16 %v956, %v956
        %v989 = vpack.c.b16 %v957, %v957
        %v990 = vpack.c.b16 %v958, %v958
        %v991 = vpack.c.b16 %v959, %v959
        %1024 = vst [vmem:[#allocation3] sm:$0xf] %v960
        %1025 = vst [vmem:[#allocation3 + $0x24] sm:$0xf] %v961
        %1026 = vst [vmem:[#allocation3 + $0x48] sm:$0xf] %v962
        %1027 = vst [vmem:[#allocation3 + $0x6c] sm:$0xf] %v963
        %1028 = vst [vmem:[#allocation3 + $0x90] sm:$0xf] %v964
        %1029 = vst [vmem:[#allocation3 + $0xb4] sm:$0xf] %v965
        %1030 = vst [vmem:[#allocation3 + $0xd8] sm:$0xf] %v966
        %1031 = vst [vmem:[#allocation3 + $0xfc] sm:$0xf] %v967
        %1032 = vst [vmem:[#allocation3 + $0x120] sm:$0xf] %v968
        %1033 = vst [vmem:[#allocation3 + $0x144] sm:$0xf] %v969
        %1034 = vst [vmem:[#allocation3 + $0x168] sm:$0xf] %v970
        %1035 = vst [vmem:[#allocation3 + $0x18c] sm:$0xf] %v971
        %1036 = vst [vmem:[#allocation3 + $0x1b0] sm:$0xf] %v972
        %1037 = vst [vmem:[#allocation3 + $0x1d4] sm:$0xf] %v973
        %1038 = vst [vmem:[#allocation3 + $0x1f8] sm:$0xf] %v974
        %1039 = vst [vmem:[#allocation3 + $0x21c] sm:$0xf] %v975
        %1040 = vst [vmem:[#allocation3 + $0x240] sm:$0xf] %v976
        %1041 = vst [vmem:[#allocation3 + $0x264] sm:$0xf] %v977
        %1042 = vst [vmem:[#allocation3 + $0x288] sm:$0xf] %v978
        %1043 = vst [vmem:[#allocation3 + $0x2ac] sm:$0xf] %v979
        %1044 = vst [vmem:[#allocation3 + $0x2d0] sm:$0xf] %v980
        %1045 = vst [vmem:[#allocation3 + $0x2f4] sm:$0xf] %v981
        %1046 = vst [vmem:[#allocation3 + $0x318] sm:$0xf] %v982
        %1047 = vst [vmem:[#allocation3 + $0x33c] sm:$0xf] %v983
        %1048 = vst [vmem:[#allocation3 + $0x360] sm:$0xf] %v984
        %1049 = vst [vmem:[#allocation3 + $0x384] sm:$0xf] %v985
        %1050 = vst [vmem:[#allocation3 + $0x3a8] sm:$0xf] %v986
        %1051 = vst [vmem:[#allocation3 + $0x3cc] sm:$0xf] %v987
        %1052 = vst [vmem:[#allocation3 + $0x3f0] sm:$0xf] %v988
        %1053 = vst [vmem:[#allocation3 + $0x414] sm:$0xf] %v989
        %1054 = vst [vmem:[#allocation3 + $0x438] sm:$0xf] %v990
        %1055 = vst [vmem:[#allocation3 + $0x45c] sm:$0xf] %v991
        %v1056 = vld [vmem:[#allocation2 + $0x1] sm:$0xff]
        %v1057 = vld [vmem:[#allocation2 + $0x9] sm:$0xff]
        %v1058 = vld [vmem:[#allocation2 + $0x19] sm:$0xff]
        %v1059 = vld [vmem:[#allocation2 + $0x21] sm:$0xff]
        %v1060 = vld [vmem:[#allocation2 + $0x31] sm:$0xff]
        %v1061 = vld [vmem:[#allocation2 + $0x39] sm:$0xff]
        %v1062 = vld [vmem:[#allocation2 + $0x49] sm:$0xff]
        %v1063 = vld [vmem:[#allocation2 + $0x51] sm:$0xff]
        %v1064 = vld [vmem:[#allocation2 + $0x61] sm:$0xff]
        %v1065 = vld [vmem:[#allocation2 + $0x69] sm:$0xff]
        %v1066 = vld [vmem:[#allocation2 + $0x79] sm:$0xff]
        %v1067 = vld [vmem:[#allocation2 + $0x81] sm:$0xff]
        %v1068 = vld [vmem:[#allocation2 + $0x91] sm:$0xff]
        %v1069 = vld [vmem:[#allocation2 + $0x99] sm:$0xff]
        %v1070 = vld [vmem:[#allocation2 + $0xa9] sm:$0xff]
        %v1071 = vld [vmem:[#allocation2 + $0xb1] sm:$0xff]
        %v1072 = vld [vmem:[#allocation2 + $0xc1] sm:$0xff]
        %v1073 = vld [vmem:[#allocation2 + $0xc9] sm:$0xff]
        %v1074 = vld [vmem:[#allocation2 + $0xd9] sm:$0xff]
        %v1075 = vld [vmem:[#allocation2 + $0xe1] sm:$0xff]
        %v1076 = vld [vmem:[#allocation2 + $0xf1] sm:$0xff]
        %v1077 = vld [vmem:[#allocation2 + $0xf9] sm:$0xff]
        %v1078 = vld [vmem:[#allocation2 + $0x109] sm:$0xff]
        %v1079 = vld [vmem:[#allocation2 + $0x111] sm:$0xff]
        %v1080 = vld [vmem:[#allocation2 + $0x121] sm:$0xff]
        %v1081 = vld [vmem:[#allocation2 + $0x129] sm:$0xff]
        %v1082 = vld [vmem:[#allocation2 + $0x139] sm:$0xff]
        %v1083 = vld [vmem:[#allocation2 + $0x141] sm:$0xff]
        %v1084 = vld [vmem:[#allocation2 + $0x151] sm:$0xff]
        %v1085 = vld [vmem:[#allocation2 + $0x159] sm:$0xff]
        %v1086 = vld [vmem:[#allocation2 + $0x169] sm:$0xff]
        %v1087 = vld [vmem:[#allocation2 + $0x171] sm:$0xff]
        %v1088 = vpack.c.bf16 %v1057, %v1056
        %v1089 = vpack.c.bf16 %v1059, %v1058
        %v1090 = vpack.c.bf16 %v1061, %v1060
        %v1091 = vpack.c.bf16 %v1063, %v1062
        %v1092 = vpack.c.bf16 %v1065, %v1064
        %v1093 = vpack.c.bf16 %v1067, %v1066
        %v1094 = vpack.c.bf16 %v1069, %v1068
        %v1095 = vpack.c.bf16 %v1071, %v1070
        %v1096 = vpack.c.bf16 %v1073, %v1072
        %v1097 = vpack.c.bf16 %v1075, %v1074
        %v1098 = vpack.c.bf16 %v1077, %v1076
        %v1099 = vpack.c.bf16 %v1079, %v1078
        %v1100 = vpack.c.bf16 %v1081, %v1080
        %v1101 = vpack.c.bf16 %v1083, %v1082
        %v1102 = vpack.c.bf16 %v1085, %v1084
        %v1103 = vpack.c.bf16 %v1087, %v1086
        %v1120 = vunpack.c.l.b16 %v1088
        %v1121 = vunpack.c.h.b16 %v1088
        %v1122 = vunpack.c.l.b16 %v1089
        %v1123 = vunpack.c.h.b16 %v1089
        %v1124 = vunpack.c.l.b16 %v1090
        %v1125 = vunpack.c.h.b16 %v1090
        %v1126 = vunpack.c.l.b16 %v1091
        %v1127 = vunpack.c.h.b16 %v1091
        %v1128 = vunpack.c.l.b16 %v1092
        %v1129 = vunpack.c.h.b16 %v1092
        %v1130 = vunpack.c.l.b16 %v1093
        %v1131 = vunpack.c.h.b16 %v1093
        %v1132 = vunpack.c.l.b16 %v1094
        %v1133 = vunpack.c.h.b16 %v1094
        %v1134 = vunpack.c.l.b16 %v1095
        %v1135 = vunpack.c.h.b16 %v1095
        %v1136 = vunpack.c.l.b16 %v1096
        %v1137 = vunpack.c.h.b16 %v1096
        %v1138 = vunpack.c.l.b16 %v1097
        %v1139 = vunpack.c.h.b16 %v1097
        %v1140 = vunpack.c.l.b16 %v1098
        %v1141 = vunpack.c.h.b16 %v1098
        %v1142 = vunpack.c.l.b16 %v1099
        %v1143 = vunpack.c.h.b16 %v1099
        %v1144 = vunpack.c.l.b16 %v1100
        %v1145 = vunpack.c.h.b16 %v1100
        %v1146 = vunpack.c.l.b16 %v1101
        %v1147 = vunpack.c.h.b16 %v1101
        %v1148 = vunpack.c.l.b16 %v1102
        %v1149 = vunpack.c.h.b16 %v1102
        %v1150 = vunpack.c.l.b16 %v1103
        %v1151 = vunpack.c.h.b16 %v1103
        %v1152 = vpack.c.b16 %v1120, %v1120
        %v1153 = vpack.c.b16 %v1121, %v1121
        %v1154 = vpack.c.b16 %v1122, %v1122
        %v1155 = vpack.c.b16 %v1123, %v1123
        %v1156 = vpack.c.b16 %v1124, %v1124
        %v1157 = vpack.c.b16 %v1125, %v1125
        %v1158 = vpack.c.b16 %v1126, %v1126
        %v1159 = vpack.c.b16 %v1127, %v1127
        %v1160 = vpack.c.b16 %v1128, %v1128
        %v1161 = vpack.c.b16 %v1129, %v1129
        %v1162 = vpack.c.b16 %v1130, %v1130
        %v1163 = vpack.c.b16 %v1131, %v1131
        %v1164 = vpack.c.b16 %v1132, %v1132
        %v1165 = vpack.c.b16 %v1133, %v1133
        %v1166 = vpack.c.b16 %v1134, %v1134
        %v1167 = vpack.c.b16 %v1135, %v1135
        %v1168 = vpack.c.b16 %v1136, %v1136
        %v1169 = vpack.c.b16 %v1137, %v1137
        %v1170 = vpack.c.b16 %v1138, %v1138
        %v1171 = vpack.c.b16 %v1139, %v1139
        %v1172 = vpack.c.b16 %v1140, %v1140
        %v1173 = vpack.c.b16 %v1141, %v1141
        %v1174 = vpack.c.b16 %v1142, %v1142
        %v1175 = vpack.c.b16 %v1143, %v1143
        %v1176 = vpack.c.b16 %v1144, %v1144
        %v1177 = vpack.c.b16 %v1145, %v1145
        %v1178 = vpack.c.b16 %v1146, %v1146
        %v1179 = vpack.c.b16 %v1147, %v1147
        %v1180 = vpack.c.b16 %v1148, %v1148
        %v1181 = vpack.c.b16 %v1149, %v1149
        %v1182 = vpack.c.b16 %v1150, %v1150
        %v1183 = vpack.c.b16 %v1151, %v1151
        %1216 = vst [vmem:[#allocation3 + $0x4] sm:$0xf] %v1152
        %1217 = vst [vmem:[#allocation3 + $0x28] sm:$0xf] %v1153
        %1218 = vst [vmem:[#allocation3 + $0x4c] sm:$0xf] %v1154
        %1219 = vst [vmem:[#allocation3 + $0x70] sm:$0xf] %v1155
        %1220 = vst [vmem:[#allocation3 + $0x94] sm:$0xf] %v1156
        %1221 = vst [vmem:[#allocation3 + $0xb8] sm:$0xf] %v1157
        %1222 = vst [vmem:[#allocation3 + $0xdc] sm:$0xf] %v1158
        %1223 = vst [vmem:[#allocation3 + $0x100] sm:$0xf] %v1159
        %1224 = vst [vmem:[#allocation3 + $0x124] sm:$0xf] %v1160
        %1225 = vst [vmem:[#allocation3 + $0x148] sm:$0xf] %v1161
        %1226 = vst [vmem:[#allocation3 + $0x16c] sm:$0xf] %v1162
        %1227 = vst [vmem:[#allocation3 + $0x190] sm:$0xf] %v1163
        %1228 = vst [vmem:[#allocation3 + $0x1b4] sm:$0xf] %v1164
        %1229 = vst [vmem:[#allocation3 + $0x1d8] sm:$0xf] %v1165
        %1230 = vst [vmem:[#allocation3 + $0x1fc] sm:$0xf] %v1166
        %1231 = vst [vmem:[#allocation3 + $0x220] sm:$0xf] %v1167
        %1232 = vst [vmem:[#allocation3 + $0x244] sm:$0xf] %v1168
        %1233 = vst [vmem:[#allocation3 + $0x268] sm:$0xf] %v1169
        %1234 = vst [vmem:[#allocation3 + $0x28c] sm:$0xf] %v1170
        %1235 = vst [vmem:[#allocation3 + $0x2b0] sm:$0xf] %v1171
        %1236 = vst [vmem:[#allocation3 + $0x2d4] sm:$0xf] %v1172
        %1237 = vst [vmem:[#allocation3 + $0x2f8] sm:$0xf] %v1173
        %1238 = vst [vmem:[#allocation3 + $0x31c] sm:$0xf] %v1174
        %1239 = vst [vmem:[#allocation3 + $0x340] sm:$0xf] %v1175
        %1240 = vst [vmem:[#allocation3 + $0x364] sm:$0xf] %v1176
        %1241 = vst [vmem:[#allocation3 + $0x388] sm:$0xf] %v1177
        %1242 = vst [vmem:[#allocation3 + $0x3ac] sm:$0xf] %v1178
        %1243 = vst [vmem:[#allocation3 + $0x3d0] sm:$0xf] %v1179
        %1244 = vst [vmem:[#allocation3 + $0x3f4] sm:$0xf] %v1180
        %1245 = vst [vmem:[#allocation3 + $0x418] sm:$0xf] %v1181
        %1246 = vst [vmem:[#allocation3 + $0x43c] sm:$0xf] %v1182
        %1247 = vst [vmem:[#allocation3 + $0x460] sm:$0xf] %v1183
        %v1248 = vld [vmem:[#allocation2 + $0x2] sm:$0xff]
        %v1249 = vld [vmem:[#allocation2 + $0xa] sm:$0xff]
        %v1250 = vld [vmem:[#allocation2 + $0x1a] sm:$0xff]
        %v1251 = vld [vmem:[#allocation2 + $0x22] sm:$0xff]
        %v1252 = vld [vmem:[#allocation2 + $0x32] sm:$0xff]
        %v1253 = vld [vmem:[#allocation2 + $0x3a] sm:$0xff]
        %v1254 = vld [vmem:[#allocation2 + $0x4a] sm:$0xff]
        %v1255 = vld [vmem:[#allocation2 + $0x52] sm:$0xff]
        %v1256 = vld [vmem:[#allocation2 + $0x62] sm:$0xff]
        %v1257 = vld [vmem:[#allocation2 + $0x6a] sm:$0xff]
        %v1258 = vld [vmem:[#allocation2 + $0x7a] sm:$0xff]
        %v1259 = vld [vmem:[#allocation2 + $0x82] sm:$0xff]
        %v1260 = vld [vmem:[#allocation2 + $0x92] sm:$0xff]
        %v1261 = vld [vmem:[#allocation2 + $0x9a] sm:$0xff]
        %v1262 = vld [vmem:[#allocation2 + $0xaa] sm:$0xff]
        %v1263 = vld [vmem:[#allocation2 + $0xb2] sm:$0xff]
        %v1264 = vld [vmem:[#allocation2 + $0xc2] sm:$0xff]
        %v1265 = vld [vmem:[#allocation2 + $0xca] sm:$0xff]
        %v1266 = vld [vmem:[#allocation2 + $0xda] sm:$0xff]
        %v1267 = vld [vmem:[#allocation2 + $0xe2] sm:$0xff]
        %v1268 = vld [vmem:[#allocation2 + $0xf2] sm:$0xff]
        %v1269 = vld [vmem:[#allocation2 + $0xfa] sm:$0xff]
        %v1270 = vld [vmem:[#allocation2 + $0x10a] sm:$0xff]
        %v1271 = vld [vmem:[#allocation2 + $0x112] sm:$0xff]
        %v1272 = vld [vmem:[#allocation2 + $0x122] sm:$0xff]
        %v1273 = vld [vmem:[#allocation2 + $0x12a] sm:$0xff]
        %v1274 = vld [vmem:[#allocation2 + $0x13a] sm:$0xff]
        %v1275 = vld [vmem:[#allocation2 + $0x142] sm:$0xff]
        %v1276 = vld [vmem:[#allocation2 + $0x152] sm:$0xff]
        %v1277 = vld [vmem:[#allocation2 + $0x15a] sm:$0xff]
        %v1278 = vld [vmem:[#allocation2 + $0x16a] sm:$0xff]
        %v1279 = vld [vmem:[#allocation2 + $0x172] sm:$0xff]
        %v1280 = vpack.c.bf16 %v1249, %v1248
        %v1281 = vpack.c.bf16 %v1251, %v1250
        %v1282 = vpack.c.bf16 %v1253, %v1252
        %v1283 = vpack.c.bf16 %v1255, %v1254
        %v1284 = vpack.c.bf16 %v1257, %v1256
        %v1285 = vpack.c.bf16 %v1259, %v1258
        %v1286 = vpack.c.bf16 %v1261, %v1260
        %v1287 = vpack.c.bf16 %v1263, %v1262
        %v1288 = vpack.c.bf16 %v1265, %v1264
        %v1289 = vpack.c.bf16 %v1267, %v1266
        %v1290 = vpack.c.bf16 %v1269, %v1268
        %v1291 = vpack.c.bf16 %v1271, %v1270
        %v1292 = vpack.c.bf16 %v1273, %v1272
        %v1293 = vpack.c.bf16 %v1275, %v1274
        %v1294 = vpack.c.bf16 %v1277, %v1276
        %v1295 = vpack.c.bf16 %v1279, %v1278
        %v1312 = vunpack.c.l.b16 %v1280
        %v1313 = vunpack.c.h.b16 %v1280
        %v1314 = vunpack.c.l.b16 %v1281
        %v1315 = vunpack.c.h.b16 %v1281
        %v1316 = vunpack.c.l.b16 %v1282
        %v1317 = vunpack.c.h.b16 %v1282
        %v1318 = vunpack.c.l.b16 %v1283
        %v1319 = vunpack.c.h.b16 %v1283
        %v1320 = vunpack.c.l.b16 %v1284
        %v1321 = vunpack.c.h.b16 %v1284
        %v1322 = vunpack.c.l.b16 %v1285
        %v1323 = vunpack.c.h.b16 %v1285
        %v1324 = vunpack.c.l.b16 %v1286
        %v1325 = vunpack.c.h.b16 %v1286
        %v1326 = vunpack.c.l.b16 %v1287
        %v1327 = vunpack.c.h.b16 %v1287
        %v1328 = vunpack.c.l.b16 %v1288
        %v1329 = vunpack.c.h.b16 %v1288
        %v1330 = vunpack.c.l.b16 %v1289
        %v1331 = vunpack.c.h.b16 %v1289
        %v1332 = vunpack.c.l.b16 %v1290
        %v1333 = vunpack.c.h.b16 %v1290
        %v1334 = vunpack.c.l.b16 %v1291
        %v1335 = vunpack.c.h.b16 %v1291
        %v1336 = vunpack.c.l.b16 %v1292
        %v1337 = vunpack.c.h.b16 %v1292
        %v1338 = vunpack.c.l.b16 %v1293
        %v1339 = vunpack.c.h.b16 %v1293
        %v1340 = vunpack.c.l.b16 %v1294
        %v1341 = vunpack.c.h.b16 %v1294
        %v1342 = vunpack.c.l.b16 %v1295
        %v1343 = vunpack.c.h.b16 %v1295
        %v1344 = vpack.c.b16 %v1312, %v1312
        %v1345 = vpack.c.b16 %v1313, %v1313
        %v1346 = vpack.c.b16 %v1314, %v1314
        %v1347 = vpack.c.b16 %v1315, %v1315
        %v1348 = vpack.c.b16 %v1316, %v1316
        %v1349 = vpack.c.b16 %v1317, %v1317
        %v1350 = vpack.c.b16 %v1318, %v1318
        %v1351 = vpack.c.b16 %v1319, %v1319
        %v1352 = vpack.c.b16 %v1320, %v1320
        %v1353 = vpack.c.b16 %v1321, %v1321
        %v1354 = vpack.c.b16 %v1322, %v1322
        %v1355 = vpack.c.b16 %v1323, %v1323
        %v1356 = vpack.c.b16 %v1324, %v1324
        %v1357 = vpack.c.b16 %v1325, %v1325
        %v1358 = vpack.c.b16 %v1326, %v1326
        %v1359 = vpack.c.b16 %v1327, %v1327
        %v1360 = vpack.c.b16 %v1328, %v1328
        %v1361 = vpack.c.b16 %v1329, %v1329
        %v1362 = vpack.c.b16 %v1330, %v1330
        %v1363 = vpack.c.b16 %v1331, %v1331
        %v1364 = vpack.c.b16 %v1332, %v1332
        %v1365 = vpack.c.b16 %v1333, %v1333
        %v1366 = vpack.c.b16 %v1334, %v1334
        %v1367 = vpack.c.b16 %v1335, %v1335
        %v1368 = vpack.c.b16 %v1336, %v1336
        %v1369 = vpack.c.b16 %v1337, %v1337
        %v1370 = vpack.c.b16 %v1338, %v1338
        %v1371 = vpack.c.b16 %v1339, %v1339
        %v1372 = vpack.c.b16 %v1340, %v1340
        %v1373 = vpack.c.b16 %v1341, %v1341
        %v1374 = vpack.c.b16 %v1342, %v1342
        %v1375 = vpack.c.b16 %v1343, %v1343
        %1408 = vst [vmem:[#allocation3 + $0x8] sm:$0xf] %v1344
        %1409 = vst [vmem:[#allocation3 + $0x2c] sm:$0xf] %v1345
        %1410 = vst [vmem:[#allocation3 + $0x50] sm:$0xf] %v1346
        %1411 = vst [vmem:[#allocation3 + $0x74] sm:$0xf] %v1347
        %1412 = vst [vmem:[#allocation3 + $0x98] sm:$0xf] %v1348
        %1413 = vst [vmem:[#allocation3 + $0xbc] sm:$0xf] %v1349
        %1414 = vst [vmem:[#allocation3 + $0xe0] sm:$0xf] %v1350
        %1415 = vst [vmem:[#allocation3 + $0x104] sm:$0xf] %v1351
        %1416 = vst [vmem:[#allocation3 + $0x128] sm:$0xf] %v1352
        %1417 = vst [vmem:[#allocation3 + $0x14c] sm:$0xf] %v1353
        %1418 = vst [vmem:[#allocation3 + $0x170] sm:$0xf] %v1354
        %1419 = vst [vmem:[#allocation3 + $0x194] sm:$0xf] %v1355
        %1420 = vst [vmem:[#allocation3 + $0x1b8] sm:$0xf] %v1356
        %1421 = vst [vmem:[#allocation3 + $0x1dc] sm:$0xf] %v1357
        %1422 = vst [vmem:[#allocation3 + $0x200] sm:$0xf] %v1358
        %1423 = vst [vmem:[#allocation3 + $0x224] sm:$0xf] %v1359
        %1424 = vst [vmem:[#allocation3 + $0x248] sm:$0xf] %v1360
        %1425 = vst [vmem:[#allocation3 + $0x26c] sm:$0xf] %v1361
        %1426 = vst [vmem:[#allocation3 + $0x290] sm:$0xf] %v1362
        %1427 = vst [vmem:[#allocation3 + $0x2b4] sm:$0xf] %v1363
        %1428 = vst [vmem:[#allocation3 + $0x2d8] sm:$0xf] %v1364
        %1429 = vst [vmem:[#allocation3 + $0x2fc] sm:$0xf] %v1365
        %1430 = vst [vmem:[#allocation3 + $0x320] sm:$0xf] %v1366
        %1431 = vst [vmem:[#allocation3 + $0x344] sm:$0xf] %v1367
        %1432 = vst [vmem:[#allocation3 + $0x368] sm:$0xf] %v1368
        %1433 = vst [vmem:[#allocation3 + $0x38c] sm:$0xf] %v1369
        %1434 = vst [vmem:[#allocation3 + $0x3b0] sm:$0xf] %v1370
        %1435 = vst [vmem:[#allocation3 + $0x3d4] sm:$0xf] %v1371
        %1436 = vst [vmem:[#allocation3 + $0x3f8] sm:$0xf] %v1372
        %1437 = vst [vmem:[#allocation3 + $0x41c] sm:$0xf] %v1373
        %1438 = vst [vmem:[#allocation3 + $0x440] sm:$0xf] %v1374
        %1439 = vst [vmem:[#allocation3 + $0x464] sm:$0xf] %v1375
        %v1440 = vld [vmem:[%s788] sm:$0xff]
        %v1441 = vld [vmem:[%s788 + $0x8] sm:$0xff]
        %v1442 = vld [vmem:[%s788 + $0x18] sm:$0xff]
        %v1443 = vld [vmem:[%s788 + $0x20] sm:$0xff]
        %v1444 = vld [vmem:[%s788 + $0x30] sm:$0xff]
        %v1445 = vld [vmem:[%s788 + $0x38] sm:$0xff]
        %v1446 = vld [vmem:[%s788 + $0x48] sm:$0xff]
        %v1447 = vld [vmem:[%s788 + $0x50] sm:$0xff]
        %v1448 = vld [vmem:[%s788 + $0x60] sm:$0xff]
        %v1449 = vld [vmem:[%s788 + $0x68] sm:$0xff]
        %v1450 = vld [vmem:[%s788 + $0x78] sm:$0xff]
        %v1451 = vld [vmem:[%s788 + $0x80] sm:$0xff]
        %v1452 = vld [vmem:[%s788 + $0x90] sm:$0xff]
        %v1453 = vld [vmem:[%s788 + $0x98] sm:$0xff]
        %v1454 = vld [vmem:[%s788 + $0xa8] sm:$0xff]
        %v1455 = vld [vmem:[%s788 + $0xb0] sm:$0xff]
        %v1456 = vld [vmem:[%s788 + $0xc0] sm:$0xff]
        %v1457 = vld [vmem:[%s788 + $0xc8] sm:$0xff]
        %v1458 = vld [vmem:[%s788 + $0xd8] sm:$0xff]
        %v1459 = vld [vmem:[%s788 + $0xe0] sm:$0xff]
        %v1460 = vld [vmem:[%s788 + $0xf0] sm:$0xff]
        %v1461 = vld [vmem:[%s788 + $0xf8] sm:$0xff]
        %v1462 = vld [vmem:[%s788 + $0x108] sm:$0xff]
        %v1463 = vld [vmem:[%s788 + $0x110] sm:$0xff]
        %v1464 = vld [vmem:[%s788 + $0x120] sm:$0xff]
        %v1465 = vld [vmem:[%s788 + $0x128] sm:$0xff]
        %v1466 = vld [vmem:[%s788 + $0x138] sm:$0xff]
        %v1467 = vld [vmem:[%s788 + $0x140] sm:$0xff]
        %v1468 = vld [vmem:[%s788 + $0x150] sm:$0xff]
        %v1469 = vld [vmem:[%s788 + $0x158] sm:$0xff]
        %v1470 = vld [vmem:[%s788 + $0x168] sm:$0xff]
        %v1471 = vld [vmem:[%s788 + $0x170] sm:$0xff]
        %v1472 = vpack.c.bf16 %v1441, %v1440
        %v1473 = vpack.c.bf16 %v1443, %v1442
        %v1474 = vpack.c.bf16 %v1445, %v1444
        %v1475 = vpack.c.bf16 %v1447, %v1446
        %v1476 = vpack.c.bf16 %v1449, %v1448
        %v1477 = vpack.c.bf16 %v1451, %v1450
        %v1478 = vpack.c.bf16 %v1453, %v1452
        %v1479 = vpack.c.bf16 %v1455, %v1454
        %v1480 = vpack.c.bf16 %v1457, %v1456
        %v1481 = vpack.c.bf16 %v1459, %v1458
        %v1482 = vpack.c.bf16 %v1461, %v1460
        %v1483 = vpack.c.bf16 %v1463, %v1462
        %v1484 = vpack.c.bf16 %v1465, %v1464
        %v1485 = vpack.c.bf16 %v1467, %v1466
        %v1486 = vpack.c.bf16 %v1469, %v1468
        %v1487 = vpack.c.bf16 %v1471, %v1470
        %v1504 = vunpack.c.l.b16 %v1472
        %v1505 = vunpack.c.h.b16 %v1472
        %v1506 = vunpack.c.l.b16 %v1473
        %v1507 = vunpack.c.h.b16 %v1473
        %v1508 = vunpack.c.l.b16 %v1474
        %v1509 = vunpack.c.h.b16 %v1474
        %v1510 = vunpack.c.l.b16 %v1475
        %v1511 = vunpack.c.h.b16 %v1475
        %v1512 = vunpack.c.l.b16 %v1476
        %v1513 = vunpack.c.h.b16 %v1476
        %v1514 = vunpack.c.l.b16 %v1477
        %v1515 = vunpack.c.h.b16 %v1477
        %v1516 = vunpack.c.l.b16 %v1478
        %v1517 = vunpack.c.h.b16 %v1478
        %v1518 = vunpack.c.l.b16 %v1479
        %v1519 = vunpack.c.h.b16 %v1479
        %v1520 = vunpack.c.l.b16 %v1480
        %v1521 = vunpack.c.h.b16 %v1480
        %v1522 = vunpack.c.l.b16 %v1481
        %v1523 = vunpack.c.h.b16 %v1481
        %v1524 = vunpack.c.l.b16 %v1482
        %v1525 = vunpack.c.h.b16 %v1482
        %v1526 = vunpack.c.l.b16 %v1483
        %v1527 = vunpack.c.h.b16 %v1483
        %v1528 = vunpack.c.l.b16 %v1484
        %v1529 = vunpack.c.h.b16 %v1484
        %v1530 = vunpack.c.l.b16 %v1485
        %v1531 = vunpack.c.h.b16 %v1485
        %v1532 = vunpack.c.l.b16 %v1486
        %v1533 = vunpack.c.h.b16 %v1486
        %v1534 = vunpack.c.l.b16 %v1487
        %v1535 = vunpack.c.h.b16 %v1487
        %v1536 = vpack.c.b16 %v1504, %v1504
        %v1537 = vpack.c.b16 %v1505, %v1505
        %v1538 = vpack.c.b16 %v1506, %v1506
        %v1539 = vpack.c.b16 %v1507, %v1507
        %v1540 = vpack.c.b16 %v1508, %v1508
        %v1541 = vpack.c.b16 %v1509, %v1509
        %v1542 = vpack.c.b16 %v1510, %v1510
        %v1543 = vpack.c.b16 %v1511, %v1511
        %v1544 = vpack.c.b16 %v1512, %v1512
        %v1545 = vpack.c.b16 %v1513, %v1513
        %v1546 = vpack.c.b16 %v1514, %v1514
        %v1547 = vpack.c.b16 %v1515, %v1515
        %v1548 = vpack.c.b16 %v1516, %v1516
        %v1549 = vpack.c.b16 %v1517, %v1517
        %v1550 = vpack.c.b16 %v1518, %v1518
        %v1551 = vpack.c.b16 %v1519, %v1519
        %v1552 = vpack.c.b16 %v1520, %v1520
        %v1553 = vpack.c.b16 %v1521, %v1521
        %v1554 = vpack.c.b16 %v1522, %v1522
        %v1555 = vpack.c.b16 %v1523, %v1523
        %v1556 = vpack.c.b16 %v1524, %v1524
        %v1557 = vpack.c.b16 %v1525, %v1525
        %v1558 = vpack.c.b16 %v1526, %v1526
        %v1559 = vpack.c.b16 %v1527, %v1527
        %v1560 = vpack.c.b16 %v1528, %v1528
        %v1561 = vpack.c.b16 %v1529, %v1529
        %v1562 = vpack.c.b16 %v1530, %v1530
        %v1563 = vpack.c.b16 %v1531, %v1531
        %v1564 = vpack.c.b16 %v1532, %v1532
        %v1565 = vpack.c.b16 %v1533, %v1533
        %v1566 = vpack.c.b16 %v1534, %v1534
        %v1567 = vpack.c.b16 %v1535, %v1535
        %1600 = vst [vmem:[#allocation3 + $0xc] sm:$0xf] %v1536
        %1601 = vst [vmem:[#allocation3 + $0x30] sm:$0xf] %v1537
        %1602 = vst [vmem:[#allocation3 + $0x54] sm:$0xf] %v1538
        %1603 = vst [vmem:[#allocation3 + $0x78] sm:$0xf] %v1539
        %1604 = vst [vmem:[#allocation3 + $0x9c] sm:$0xf] %v1540
        %1605 = vst [vmem:[#allocation3 + $0xc0] sm:$0xf] %v1541
        %1606 = vst [vmem:[#allocation3 + $0xe4] sm:$0xf] %v1542
        %1607 = vst [vmem:[#allocation3 + $0x108] sm:$0xf] %v1543
        %1608 = vst [vmem:[#allocation3 + $0x12c] sm:$0xf] %v1544
        %1609 = vst [vmem:[#allocation3 + $0x150] sm:$0xf] %v1545
        %1610 = vst [vmem:[#allocation3 + $0x174] sm:$0xf] %v1546
        %1611 = vst [vmem:[#allocation3 + $0x198] sm:$0xf] %v1547
        %1612 = vst [vmem:[#allocation3 + $0x1bc] sm:$0xf] %v1548
        %1613 = vst [vmem:[#allocation3 + $0x1e0] sm:$0xf] %v1549
        %1614 = vst [vmem:[#allocation3 + $0x204] sm:$0xf] %v1550
        %1615 = vst [vmem:[#allocation3 + $0x228] sm:$0xf] %v1551
        %1616 = vst [vmem:[#allocation3 + $0x24c] sm:$0xf] %v1552
        %1617 = vst [vmem:[#allocation3 + $0x270] sm:$0xf] %v1553
        %1618 = vst [vmem:[#allocation3 + $0x294] sm:$0xf] %v1554
        %1619 = vst [vmem:[#allocation3 + $0x2b8] sm:$0xf] %v1555
        %1620 = vst [vmem:[#allocation3 + $0x2dc] sm:$0xf] %v1556
        %1621 = vst [vmem:[#allocation3 + $0x300] sm:$0xf] %v1557
        %1622 = vst [vmem:[#allocation3 + $0x324] sm:$0xf] %v1558
        %1623 = vst [vmem:[#allocation3 + $0x348] sm:$0xf] %v1559
        %1624 = vst [vmem:[#allocation3 + $0x36c] sm:$0xf] %v1560
        %1625 = vst [vmem:[#allocation3 + $0x390] sm:$0xf] %v1561
        %1626 = vst [vmem:[#allocation3 + $0x3b4] sm:$0xf] %v1562
        %1627 = vst [vmem:[#allocation3 + $0x3d8] sm:$0xf] %v1563
        %1628 = vst [vmem:[#allocation3 + $0x3fc] sm:$0xf] %v1564
        %1629 = vst [vmem:[#allocation3 + $0x420] sm:$0xf] %v1565
        %1630 = vst [vmem:[#allocation3 + $0x444] sm:$0xf] %v1566
        %1631 = vst [vmem:[#allocation3 + $0x468] sm:$0xf] %v1567
        %v1632 = vld [vmem:[%s788 + $0x1] sm:$0xff]
        %v1633 = vld [vmem:[%s788 + $0x9] sm:$0xff]
        %v1634 = vld [vmem:[%s788 + $0x19] sm:$0xff]
        %v1635 = vld [vmem:[%s788 + $0x21] sm:$0xff]
        %v1636 = vld [vmem:[%s788 + $0x31] sm:$0xff]
        %v1637 = vld [vmem:[%s788 + $0x39] sm:$0xff]
        %v1638 = vld [vmem:[%s788 + $0x49] sm:$0xff]
        %v1639 = vld [vmem:[%s788 + $0x51] sm:$0xff]
        %v1640 = vld [vmem:[%s788 + $0x61] sm:$0xff]
        %v1641 = vld [vmem:[%s788 + $0x69] sm:$0xff]
        %v1642 = vld [vmem:[%s788 + $0x79] sm:$0xff]
        %v1643 = vld [vmem:[%s788 + $0x81] sm:$0xff]
        %v1644 = vld [vmem:[%s788 + $0x91] sm:$0xff]
        %v1645 = vld [vmem:[%s788 + $0x99] sm:$0xff]
        %v1646 = vld [vmem:[%s788 + $0xa9] sm:$0xff]
        %v1647 = vld [vmem:[%s788 + $0xb1] sm:$0xff]
        %v1648 = vld [vmem:[%s788 + $0xc1] sm:$0xff]
        %v1649 = vld [vmem:[%s788 + $0xc9] sm:$0xff]
        %v1650 = vld [vmem:[%s788 + $0xd9] sm:$0xff]
        %v1651 = vld [vmem:[%s788 + $0xe1] sm:$0xff]
        %v1652 = vld [vmem:[%s788 + $0xf1] sm:$0xff]
        %v1653 = vld [vmem:[%s788 + $0xf9] sm:$0xff]
        %v1654 = vld [vmem:[%s788 + $0x109] sm:$0xff]
        %v1655 = vld [vmem:[%s788 + $0x111] sm:$0xff]
        %v1656 = vld [vmem:[%s788 + $0x121] sm:$0xff]
        %v1657 = vld [vmem:[%s788 + $0x129] sm:$0xff]
        %v1658 = vld [vmem:[%s788 + $0x139] sm:$0xff]
        %v1659 = vld [vmem:[%s788 + $0x141] sm:$0xff]
        %v1660 = vld [vmem:[%s788 + $0x151] sm:$0xff]
        %v1661 = vld [vmem:[%s788 + $0x159] sm:$0xff]
        %v1662 = vld [vmem:[%s788 + $0x169] sm:$0xff]
        %v1663 = vld [vmem:[%s788 + $0x171] sm:$0xff]
        %v1664 = vpack.c.bf16 %v1633, %v1632
        %v1665 = vpack.c.bf16 %v1635, %v1634
        %v1666 = vpack.c.bf16 %v1637, %v1636
        %v1667 = vpack.c.bf16 %v1639, %v1638
        %v1668 = vpack.c.bf16 %v1641, %v1640
        %v1669 = vpack.c.bf16 %v1643, %v1642
        %v1670 = vpack.c.bf16 %v1645, %v1644
        %v1671 = vpack.c.bf16 %v1647, %v1646
        %v1672 = vpack.c.bf16 %v1649, %v1648
        %v1673 = vpack.c.bf16 %v1651, %v1650
        %v1674 = vpack.c.bf16 %v1653, %v1652
        %v1675 = vpack.c.bf16 %v1655, %v1654
        %v1676 = vpack.c.bf16 %v1657, %v1656
        %v1677 = vpack.c.bf16 %v1659, %v1658
        %v1678 = vpack.c.bf16 %v1661, %v1660
        %v1679 = vpack.c.bf16 %v1663, %v1662
        %v1696 = vunpack.c.l.b16 %v1664
        %v1697 = vunpack.c.h.b16 %v1664
        %v1698 = vunpack.c.l.b16 %v1665
        %v1699 = vunpack.c.h.b16 %v1665
        %v1700 = vunpack.c.l.b16 %v1666
        %v1701 = vunpack.c.h.b16 %v1666
        %v1702 = vunpack.c.l.b16 %v1667
        %v1703 = vunpack.c.h.b16 %v1667
        %v1704 = vunpack.c.l.b16 %v1668
        %v1705 = vunpack.c.h.b16 %v1668
        %v1706 = vunpack.c.l.b16 %v1669
        %v1707 = vunpack.c.h.b16 %v1669
        %v1708 = vunpack.c.l.b16 %v1670
        %v1709 = vunpack.c.h.b16 %v1670
        %v1710 = vunpack.c.l.b16 %v1671
        %v1711 = vunpack.c.h.b16 %v1671
        %v1712 = vunpack.c.l.b16 %v1672
        %v1713 = vunpack.c.h.b16 %v1672
        %v1714 = vunpack.c.l.b16 %v1673
        %v1715 = vunpack.c.h.b16 %v1673
        %v1716 = vunpack.c.l.b16 %v1674
        %v1717 = vunpack.c.h.b16 %v1674
        %v1718 = vunpack.c.l.b16 %v1675
        %v1719 = vunpack.c.h.b16 %v1675
        %v1720 = vunpack.c.l.b16 %v1676
        %v1721 = vunpack.c.h.b16 %v1676
        %v1722 = vunpack.c.l.b16 %v1677
        %v1723 = vunpack.c.h.b16 %v1677
        %v1724 = vunpack.c.l.b16 %v1678
        %v1725 = vunpack.c.h.b16 %v1678
        %v1726 = vunpack.c.l.b16 %v1679
        %v1727 = vunpack.c.h.b16 %v1679
        %v1728 = vpack.c.b16 %v1696, %v1696
        %v1729 = vpack.c.b16 %v1697, %v1697
        %v1730 = vpack.c.b16 %v1698, %v1698
        %v1731 = vpack.c.b16 %v1699, %v1699
        %v1732 = vpack.c.b16 %v1700, %v1700
        %v1733 = vpack.c.b16 %v1701, %v1701
        %v1734 = vpack.c.b16 %v1702, %v1702
        %v1735 = vpack.c.b16 %v1703, %v1703
        %v1736 = vpack.c.b16 %v1704, %v1704
        %v1737 = vpack.c.b16 %v1705, %v1705
        %v1738 = vpack.c.b16 %v1706, %v1706
        %v1739 = vpack.c.b16 %v1707, %v1707
        %v1740 = vpack.c.b16 %v1708, %v1708
        %v1741 = vpack.c.b16 %v1709, %v1709
        %v1742 = vpack.c.b16 %v1710, %v1710
        %v1743 = vpack.c.b16 %v1711, %v1711
        %v1744 = vpack.c.b16 %v1712, %v1712
        %v1745 = vpack.c.b16 %v1713, %v1713
        %v1746 = vpack.c.b16 %v1714, %v1714
        %v1747 = vpack.c.b16 %v1715, %v1715
        %v1748 = vpack.c.b16 %v1716, %v1716
        %v1749 = vpack.c.b16 %v1717, %v1717
        %v1750 = vpack.c.b16 %v1718, %v1718
        %v1751 = vpack.c.b16 %v1719, %v1719
        %v1752 = vpack.c.b16 %v1720, %v1720
        %v1753 = vpack.c.b16 %v1721, %v1721
        %v1754 = vpack.c.b16 %v1722, %v1722
        %v1755 = vpack.c.b16 %v1723, %v1723
        %v1756 = vpack.c.b16 %v1724, %v1724
        %v1757 = vpack.c.b16 %v1725, %v1725
        %v1758 = vpack.c.b16 %v1726, %v1726
        %v1759 = vpack.c.b16 %v1727, %v1727
        %1792 = vst [vmem:[#allocation3 + $0x10] sm:$0xf] %v1728
        %1793 = vst [vmem:[#allocation3 + $0x34] sm:$0xf] %v1729
        %1794 = vst [vmem:[#allocation3 + $0x58] sm:$0xf] %v1730
        %1795 = vst [vmem:[#allocation3 + $0x7c] sm:$0xf] %v1731
        %1796 = vst [vmem:[#allocation3 + $0xa0] sm:$0xf] %v1732
        %1797 = vst [vmem:[#allocation3 + $0xc4] sm:$0xf] %v1733
        %1798 = vst [vmem:[#allocation3 + $0xe8] sm:$0xf] %v1734
        %1799 = vst [vmem:[#allocation3 + $0x10c] sm:$0xf] %v1735
        %1800 = vst [vmem:[#allocation3 + $0x130] sm:$0xf] %v1736
        %1801 = vst [vmem:[#allocation3 + $0x154] sm:$0xf] %v1737
        %1802 = vst [vmem:[#allocation3 + $0x178] sm:$0xf] %v1738
        %1803 = vst [vmem:[#allocation3 + $0x19c] sm:$0xf] %v1739
        %1804 = vst [vmem:[#allocation3 + $0x1c0] sm:$0xf] %v1740
        %1805 = vst [vmem:[#allocation3 + $0x1e4] sm:$0xf] %v1741
        %1806 = vst [vmem:[#allocation3 + $0x208] sm:$0xf] %v1742
        %1807 = vst [vmem:[#allocation3 + $0x22c] sm:$0xf] %v1743
        %1808 = vst [vmem:[#allocation3 + $0x250] sm:$0xf] %v1744
        %1809 = vst [vmem:[#allocation3 + $0x274] sm:$0xf] %v1745
        %1810 = vst [vmem:[#allocation3 + $0x298] sm:$0xf] %v1746
        %1811 = vst [vmem:[#allocation3 + $0x2bc] sm:$0xf] %v1747
        %1812 = vst [vmem:[#allocation3 + $0x2e0] sm:$0xf] %v1748
        %1813 = vst [vmem:[#allocation3 + $0x304] sm:$0xf] %v1749
        %1814 = vst [vmem:[#allocation3 + $0x328] sm:$0xf] %v1750
        %1815 = vst [vmem:[#allocation3 + $0x34c] sm:$0xf] %v1751
        %1816 = vst [vmem:[#allocation3 + $0x370] sm:$0xf] %v1752
        %1817 = vst [vmem:[#allocation3 + $0x394] sm:$0xf] %v1753
        %1818 = vst [vmem:[#allocation3 + $0x3b8] sm:$0xf] %v1754
        %1819 = vst [vmem:[#allocation3 + $0x3dc] sm:$0xf] %v1755
        %1820 = vst [vmem:[#allocation3 + $0x400] sm:$0xf] %v1756
        %1821 = vst [vmem:[#allocation3 + $0x424] sm:$0xf] %v1757
        %1822 = vst [vmem:[#allocation3 + $0x448] sm:$0xf] %v1758
        %1823 = vst [vmem:[#allocation3 + $0x46c] sm:$0xf] %v1759
        %v1824 = vld [vmem:[%s788 + $0x2] sm:$0xff]
        %v1825 = vld [vmem:[%s788 + $0xa] sm:$0xff]
        %v1826 = vld [vmem:[%s788 + $0x1a] sm:$0xff]
        %v1827 = vld [vmem:[%s788 + $0x22] sm:$0xff]
        %v1828 = vld [vmem:[%s788 + $0x32] sm:$0xff]
        %v1829 = vld [vmem:[%s788 + $0x3a] sm:$0xff]
        %v1830 = vld [vmem:[%s788 + $0x4a] sm:$0xff]
        %v1831 = vld [vmem:[%s788 + $0x52] sm:$0xff]
        %v1832 = vld [vmem:[%s788 + $0x62] sm:$0xff]
        %v1833 = vld [vmem:[%s788 + $0x6a] sm:$0xff]
        %v1834 = vld [vmem:[%s788 + $0x7a] sm:$0xff]
        %v1835 = vld [vmem:[%s788 + $0x82] sm:$0xff]
        %v1836 = vld [vmem:[%s788 + $0x92] sm:$0xff]
        %v1837 = vld [vmem:[%s788 + $0x9a] sm:$0xff]
        %v1838 = vld [vmem:[%s788 + $0xaa] sm:$0xff]
        %v1839 = vld [vmem:[%s788 + $0xb2] sm:$0xff]
        %v1840 = vld [vmem:[%s788 + $0xc2] sm:$0xff]
        %v1841 = vld [vmem:[%s788 + $0xca] sm:$0xff]
        %v1842 = vld [vmem:[%s788 + $0xda] sm:$0xff]
        %v1843 = vld [vmem:[%s788 + $0xe2] sm:$0xff]
        %v1844 = vld [vmem:[%s788 + $0xf2] sm:$0xff]
        %v1845 = vld [vmem:[%s788 + $0xfa] sm:$0xff]
        %v1846 = vld [vmem:[%s788 + $0x10a] sm:$0xff]
        %v1847 = vld [vmem:[%s788 + $0x112] sm:$0xff]
        %v1848 = vld [vmem:[%s788 + $0x122] sm:$0xff]
        %v1849 = vld [vmem:[%s788 + $0x12a] sm:$0xff]
        %v1850 = vld [vmem:[%s788 + $0x13a] sm:$0xff]
        %v1851 = vld [vmem:[%s788 + $0x142] sm:$0xff]
        %v1852 = vld [vmem:[%s788 + $0x152] sm:$0xff]
        %v1853 = vld [vmem:[%s788 + $0x15a] sm:$0xff]
        %v1854 = vld [vmem:[%s788 + $0x16a] sm:$0xff]
        %v1855 = vld [vmem:[%s788 + $0x172] sm:$0xff]
        %v1856 = vpack.c.bf16 %v1825, %v1824
        %v1857 = vpack.c.bf16 %v1827, %v1826
        %v1858 = vpack.c.bf16 %v1829, %v1828
        %v1859 = vpack.c.bf16 %v1831, %v1830
        %v1860 = vpack.c.bf16 %v1833, %v1832
        %v1861 = vpack.c.bf16 %v1835, %v1834
        %v1862 = vpack.c.bf16 %v1837, %v1836
        %v1863 = vpack.c.bf16 %v1839, %v1838
        %v1864 = vpack.c.bf16 %v1841, %v1840
        %v1865 = vpack.c.bf16 %v1843, %v1842
        %v1866 = vpack.c.bf16 %v1845, %v1844
        %v1867 = vpack.c.bf16 %v1847, %v1846
        %v1868 = vpack.c.bf16 %v1849, %v1848
        %v1869 = vpack.c.bf16 %v1851, %v1850
        %v1870 = vpack.c.bf16 %v1853, %v1852
        %v1871 = vpack.c.bf16 %v1855, %v1854
        %v1888 = vunpack.c.l.b16 %v1856
        %v1889 = vunpack.c.h.b16 %v1856
        %v1890 = vunpack.c.l.b16 %v1857
        %v1891 = vunpack.c.h.b16 %v1857
        %v1892 = vunpack.c.l.b16 %v1858
        %v1893 = vunpack.c.h.b16 %v1858
        %v1894 = vunpack.c.l.b16 %v1859
        %v1895 = vunpack.c.h.b16 %v1859
        %v1896 = vunpack.c.l.b16 %v1860
        %v1897 = vunpack.c.h.b16 %v1860
        %v1898 = vunpack.c.l.b16 %v1861
        %v1899 = vunpack.c.h.b16 %v1861
        %v1900 = vunpack.c.l.b16 %v1862
        %v1901 = vunpack.c.h.b16 %v1862
        %v1902 = vunpack.c.l.b16 %v1863
        %v1903 = vunpack.c.h.b16 %v1863
        %v1904 = vunpack.c.l.b16 %v1864
        %v1905 = vunpack.c.h.b16 %v1864
        %v1906 = vunpack.c.l.b16 %v1865
        %v1907 = vunpack.c.h.b16 %v1865
        %v1908 = vunpack.c.l.b16 %v1866
        %v1909 = vunpack.c.h.b16 %v1866
        %v1910 = vunpack.c.l.b16 %v1867
        %v1911 = vunpack.c.h.b16 %v1867
        %v1912 = vunpack.c.l.b16 %v1868
        %v1913 = vunpack.c.h.b16 %v1868
        %v1914 = vunpack.c.l.b16 %v1869
        %v1915 = vunpack.c.h.b16 %v1869
        %v1916 = vunpack.c.l.b16 %v1870
        %v1917 = vunpack.c.h.b16 %v1870
        %v1918 = vunpack.c.l.b16 %v1871
        %v1919 = vunpack.c.h.b16 %v1871
        %v1920 = vpack.c.b16 %v1888, %v1888
        %v1921 = vpack.c.b16 %v1889, %v1889
        %v1922 = vpack.c.b16 %v1890, %v1890
        %v1923 = vpack.c.b16 %v1891, %v1891
        %v1924 = vpack.c.b16 %v1892, %v1892
        %v1925 = vpack.c.b16 %v1893, %v1893
        %v1926 = vpack.c.b16 %v1894, %v1894
        %v1927 = vpack.c.b16 %v1895, %v1895
        %v1928 = vpack.c.b16 %v1896, %v1896
        %v1929 = vpack.c.b16 %v1897, %v1897
        %v1930 = vpack.c.b16 %v1898, %v1898
        %v1931 = vpack.c.b16 %v1899, %v1899
        %v1932 = vpack.c.b16 %v1900, %v1900
        %v1933 = vpack.c.b16 %v1901, %v1901
        %v1934 = vpack.c.b16 %v1902, %v1902
        %v1935 = vpack.c.b16 %v1903, %v1903
        %v1936 = vpack.c.b16 %v1904, %v1904
        %v1937 = vpack.c.b16 %v1905, %v1905
        %v1938 = vpack.c.b16 %v1906, %v1906
        %v1939 = vpack.c.b16 %v1907, %v1907
        %v1940 = vpack.c.b16 %v1908, %v1908
        %v1941 = vpack.c.b16 %v1909, %v1909
        %v1942 = vpack.c.b16 %v1910, %v1910
        %v1943 = vpack.c.b16 %v1911, %v1911
        %v1944 = vpack.c.b16 %v1912, %v1912
        %v1945 = vpack.c.b16 %v1913, %v1913
        %v1946 = vpack.c.b16 %v1914, %v1914
        %v1947 = vpack.c.b16 %v1915, %v1915
        %v1948 = vpack.c.b16 %v1916, %v1916
        %v1949 = vpack.c.b16 %v1917, %v1917
        %v1950 = vpack.c.b16 %v1918, %v1918
        %v1951 = vpack.c.b16 %v1919, %v1919
        %1984 = vst [vmem:[#allocation3 + $0x14] sm:$0xf] %v1920
        %1985 = vst [vmem:[#allocation3 + $0x38] sm:$0xf] %v1921
        %1986 = vst [vmem:[#allocation3 + $0x5c] sm:$0xf] %v1922
        %1987 = vst [vmem:[#allocation3 + $0x80] sm:$0xf] %v1923
        %1988 = vst [vmem:[#allocation3 + $0xa4] sm:$0xf] %v1924
        %1989 = vst [vmem:[#allocation3 + $0xc8] sm:$0xf] %v1925
        %1990 = vst [vmem:[#allocation3 + $0xec] sm:$0xf] %v1926
        %1991 = vst [vmem:[#allocation3 + $0x110] sm:$0xf] %v1927
        %1992 = vst [vmem:[#allocation3 + $0x134] sm:$0xf] %v1928
        %1993 = vst [vmem:[#allocation3 + $0x158] sm:$0xf] %v1929
        %1994 = vst [vmem:[#allocation3 + $0x17c] sm:$0xf] %v1930
        %1995 = vst [vmem:[#allocation3 + $0x1a0] sm:$0xf] %v1931
        %1996 = vst [vmem:[#allocation3 + $0x1c4] sm:$0xf] %v1932
        %1997 = vst [vmem:[#allocation3 + $0x1e8] sm:$0xf] %v1933
        %1998 = vst [vmem:[#allocation3 + $0x20c] sm:$0xf] %v1934
        %1999 = vst [vmem:[#allocation3 + $0x230] sm:$0xf] %v1935
        %2000 = vst [vmem:[#allocation3 + $0x254] sm:$0xf] %v1936
        %2001 = vst [vmem:[#allocation3 + $0x278] sm:$0xf] %v1937
        %2002 = vst [vmem:[#allocation3 + $0x29c] sm:$0xf] %v1938
        %2003 = vst [vmem:[#allocation3 + $0x2c0] sm:$0xf] %v1939
        %2004 = vst [vmem:[#allocation3 + $0x2e4] sm:$0xf] %v1940
        %2005 = vst [vmem:[#allocation3 + $0x308] sm:$0xf] %v1941
        %2006 = vst [vmem:[#allocation3 + $0x32c] sm:$0xf] %v1942
        %2007 = vst [vmem:[#allocation3 + $0x350] sm:$0xf] %v1943
        %2008 = vst [vmem:[#allocation3 + $0x374] sm:$0xf] %v1944
        %2009 = vst [vmem:[#allocation3 + $0x398] sm:$0xf] %v1945
        %2010 = vst [vmem:[#allocation3 + $0x3bc] sm:$0xf] %v1946
        %2011 = vst [vmem:[#allocation3 + $0x3e0] sm:$0xf] %v1947
        %2012 = vst [vmem:[#allocation3 + $0x404] sm:$0xf] %v1948
        %2013 = vst [vmem:[#allocation3 + $0x428] sm:$0xf] %v1949
        %2014 = vst [vmem:[#allocation3 + $0x44c] sm:$0xf] %v1950
        %2015 = vst [vmem:[#allocation3 + $0x470] sm:$0xf] %v1951
        %s2016 = scalar_lea.vmem [#allocation2], 48
        %v2017 = vld [vmem:[%s2016] sm:$0xff]
        %v2018 = vld [vmem:[%s2016 + $0x8] sm:$0xff]
        %v2019 = vld [vmem:[%s2016 + $0x18] sm:$0xff]
        %v2020 = vld [vmem:[%s2016 + $0x20] sm:$0xff]
        %v2021 = vld [vmem:[%s2016 + $0x30] sm:$0xff]
        %v2022 = vld [vmem:[%s2016 + $0x38] sm:$0xff]
        %v2023 = vld [vmem:[%s2016 + $0x48] sm:$0xff]
        %v2024 = vld [vmem:[%s2016 + $0x50] sm:$0xff]
        %v2025 = vld [vmem:[%s2016 + $0x60] sm:$0xff]
        %v2026 = vld [vmem:[%s2016 + $0x68] sm:$0xff]
        %v2027 = vld [vmem:[%s2016 + $0x78] sm:$0xff]
        %v2028 = vld [vmem:[%s2016 + $0x80] sm:$0xff]
        %v2029 = vld [vmem:[%s2016 + $0x90] sm:$0xff]
        %v2030 = vld [vmem:[%s2016 + $0x98] sm:$0xff]
        %v2031 = vld [vmem:[%s2016 + $0xa8] sm:$0xff]
        %v2032 = vld [vmem:[%s2016 + $0xb0] sm:$0xff]
        %v2033 = vld [vmem:[%s2016 + $0xc0] sm:$0xff]
        %v2034 = vld [vmem:[%s2016 + $0xc8] sm:$0xff]
        %v2035 = vld [vmem:[%s2016 + $0xd8] sm:$0xff]
        %v2036 = vld [vmem:[%s2016 + $0xe0] sm:$0xff]
        %v2037 = vld [vmem:[%s2016 + $0xf0] sm:$0xff]
        %v2038 = vld [vmem:[%s2016 + $0xf8] sm:$0xff]
        %v2039 = vld [vmem:[%s2016 + $0x108] sm:$0xff]
        %v2040 = vld [vmem:[%s2016 + $0x110] sm:$0xff]
        %v2041 = vld [vmem:[%s2016 + $0x120] sm:$0xff]
        %v2042 = vld [vmem:[%s2016 + $0x128] sm:$0xff]
        %v2043 = vld [vmem:[%s2016 + $0x138] sm:$0xff]
        %v2044 = vld [vmem:[%s2016 + $0x140] sm:$0xff]
        %v2045 = vld [vmem:[%s2016 + $0x150] sm:$0xff]
        %v2046 = vld [vmem:[%s2016 + $0x158] sm:$0xff]
        %v2047 = vld [vmem:[%s2016 + $0x168] sm:$0xff]
        %v2048 = vld [vmem:[%s2016 + $0x170] sm:$0xff]
        %v2049 = vpack.c.bf16 %v2018, %v2017
        %v2050 = vpack.c.bf16 %v2020, %v2019
        %v2051 = vpack.c.bf16 %v2022, %v2021
        %v2052 = vpack.c.bf16 %v2024, %v2023
        %v2053 = vpack.c.bf16 %v2026, %v2025
        %v2054 = vpack.c.bf16 %v2028, %v2027
        %v2055 = vpack.c.bf16 %v2030, %v2029
        %v2056 = vpack.c.bf16 %v2032, %v2031
        %v2057 = vpack.c.bf16 %v2034, %v2033
        %v2058 = vpack.c.bf16 %v2036, %v2035
        %v2059 = vpack.c.bf16 %v2038, %v2037
        %v2060 = vpack.c.bf16 %v2040, %v2039
        %v2061 = vpack.c.bf16 %v2042, %v2041
        %v2062 = vpack.c.bf16 %v2044, %v2043
        %v2063 = vpack.c.bf16 %v2046, %v2045
        %v2064 = vpack.c.bf16 %v2048, %v2047
        %v2081 = vunpack.c.l.b16 %v2049
        %v2082 = vunpack.c.h.b16 %v2049
        %v2083 = vunpack.c.l.b16 %v2050
        %v2084 = vunpack.c.h.b16 %v2050
        %v2085 = vunpack.c.l.b16 %v2051
        %v2086 = vunpack.c.h.b16 %v2051
        %v2087 = vunpack.c.l.b16 %v2052
        %v2088 = vunpack.c.h.b16 %v2052
        %v2089 = vunpack.c.l.b16 %v2053
        %v2090 = vunpack.c.h.b16 %v2053
        %v2091 = vunpack.c.l.b16 %v2054
        %v2092 = vunpack.c.h.b16 %v2054
        %v2093 = vunpack.c.l.b16 %v2055
        %v2094 = vunpack.c.h.b16 %v2055
        %v2095 = vunpack.c.l.b16 %v2056
        %v2096 = vunpack.c.h.b16 %v2056
        %v2097 = vunpack.c.l.b16 %v2057
        %v2098 = vunpack.c.h.b16 %v2057
        %v2099 = vunpack.c.l.b16 %v2058
        %v2100 = vunpack.c.h.b16 %v2058
        %v2101 = vunpack.c.l.b16 %v2059
        %v2102 = vunpack.c.h.b16 %v2059
        %v2103 = vunpack.c.l.b16 %v2060
        %v2104 = vunpack.c.h.b16 %v2060
        %v2105 = vunpack.c.l.b16 %v2061
        %v2106 = vunpack.c.h.b16 %v2061
        %v2107 = vunpack.c.l.b16 %v2062
        %v2108 = vunpack.c.h.b16 %v2062
        %v2109 = vunpack.c.l.b16 %v2063
        %v2110 = vunpack.c.h.b16 %v2063
        %v2111 = vunpack.c.l.b16 %v2064
        %v2112 = vunpack.c.h.b16 %v2064
        %v2113 = vpack.c.b16 %v2081, %v2081
        %v2114 = vpack.c.b16 %v2082, %v2082
        %v2115 = vpack.c.b16 %v2083, %v2083
        %v2116 = vpack.c.b16 %v2084, %v2084
        %v2117 = vpack.c.b16 %v2085, %v2085
        %v2118 = vpack.c.b16 %v2086, %v2086
        %v2119 = vpack.c.b16 %v2087, %v2087
        %v2120 = vpack.c.b16 %v2088, %v2088
        %v2121 = vpack.c.b16 %v2089, %v2089
        %v2122 = vpack.c.b16 %v2090, %v2090
        %v2123 = vpack.c.b16 %v2091, %v2091
        %v2124 = vpack.c.b16 %v2092, %v2092
        %v2125 = vpack.c.b16 %v2093, %v2093
        %v2126 = vpack.c.b16 %v2094, %v2094
        %v2127 = vpack.c.b16 %v2095, %v2095
        %v2128 = vpack.c.b16 %v2096, %v2096
        %v2129 = vpack.c.b16 %v2097, %v2097
        %v2130 = vpack.c.b16 %v2098, %v2098
        %v2131 = vpack.c.b16 %v2099, %v2099
        %v2132 = vpack.c.b16 %v2100, %v2100
        %v2133 = vpack.c.b16 %v2101, %v2101
        %v2134 = vpack.c.b16 %v2102, %v2102
        %v2135 = vpack.c.b16 %v2103, %v2103
        %v2136 = vpack.c.b16 %v2104, %v2104
        %v2137 = vpack.c.b16 %v2105, %v2105
        %v2138 = vpack.c.b16 %v2106, %v2106
        %v2139 = vpack.c.b16 %v2107, %v2107
        %v2140 = vpack.c.b16 %v2108, %v2108
        %v2141 = vpack.c.b16 %v2109, %v2109
        %v2142 = vpack.c.b16 %v2110, %v2110
        %v2143 = vpack.c.b16 %v2111, %v2111
        %v2144 = vpack.c.b16 %v2112, %v2112
        %2177 = vst [vmem:[#allocation3 + $0x18] sm:$0xf] %v2113
        %2178 = vst [vmem:[#allocation3 + $0x3c] sm:$0xf] %v2114
        %2179 = vst [vmem:[#allocation3 + $0x60] sm:$0xf] %v2115
        %2180 = vst [vmem:[#allocation3 + $0x84] sm:$0xf] %v2116
        %2181 = vst [vmem:[#allocation3 + $0xa8] sm:$0xf] %v2117
        %2182 = vst [vmem:[#allocation3 + $0xcc] sm:$0xf] %v2118
        %2183 = vst [vmem:[#allocation3 + $0xf0] sm:$0xf] %v2119
        %2184 = vst [vmem:[#allocation3 + $0x114] sm:$0xf] %v2120
        %2185 = vst [vmem:[#allocation3 + $0x138] sm:$0xf] %v2121
        %2186 = vst [vmem:[#allocation3 + $0x15c] sm:$0xf] %v2122
        %2187 = vst [vmem:[#allocation3 + $0x180] sm:$0xf] %v2123
        %2188 = vst [vmem:[#allocation3 + $0x1a4] sm:$0xf] %v2124
        %2189 = vst [vmem:[#allocation3 + $0x1c8] sm:$0xf] %v2125
        %2190 = vst [vmem:[#allocation3 + $0x1ec] sm:$0xf] %v2126
        %2191 = vst [vmem:[#allocation3 + $0x210] sm:$0xf] %v2127
        %2192 = vst [vmem:[#allocation3 + $0x234] sm:$0xf] %v2128
        %2193 = vst [vmem:[#allocation3 + $0x258] sm:$0xf] %v2129
        %2194 = vst [vmem:[#allocation3 + $0x27c] sm:$0xf] %v2130
        %2195 = vst [vmem:[#allocation3 + $0x2a0] sm:$0xf] %v2131
        %2196 = vst [vmem:[#allocation3 + $0x2c4] sm:$0xf] %v2132
        %2197 = vst [vmem:[#allocation3 + $0x2e8] sm:$0xf] %v2133
        %2198 = vst [vmem:[#allocation3 + $0x30c] sm:$0xf] %v2134
        %2199 = vst [vmem:[#allocation3 + $0x330] sm:$0xf] %v2135
        %2200 = vst [vmem:[#allocation3 + $0x354] sm:$0xf] %v2136
        %2201 = vst [vmem:[#allocation3 + $0x378] sm:$0xf] %v2137
        %2202 = vst [vmem:[#allocation3 + $0x39c] sm:$0xf] %v2138
        %2203 = vst [vmem:[#allocation3 + $0x3c0] sm:$0xf] %v2139
        %2204 = vst [vmem:[#allocation3 + $0x3e4] sm:$0xf] %v2140
        %2205 = vst [vmem:[#allocation3 + $0x408] sm:$0xf] %v2141
        %2206 = vst [vmem:[#allocation3 + $0x42c] sm:$0xf] %v2142
        %2207 = vst [vmem:[#allocation3 + $0x450] sm:$0xf] %v2143
        %2208 = vst [vmem:[#allocation3 + $0x474] sm:$0xf] %v2144
        %v2209 = vld [vmem:[%s2016 + $0x1] sm:$0xff]
        %v2210 = vld [vmem:[%s2016 + $0x9] sm:$0xff]
        %v2211 = vld [vmem:[%s2016 + $0x19] sm:$0xff]
        %v2212 = vld [vmem:[%s2016 + $0x21] sm:$0xff]
        %v2213 = vld [vmem:[%s2016 + $0x31] sm:$0xff]
        %v2214 = vld [vmem:[%s2016 + $0x39] sm:$0xff]
        %v2215 = vld [vmem:[%s2016 + $0x49] sm:$0xff]
        %v2216 = vld [vmem:[%s2016 + $0x51] sm:$0xff]
        %v2217 = vld [vmem:[%s2016 + $0x61] sm:$0xff]
        %v2218 = vld [vmem:[%s2016 + $0x69] sm:$0xff]
        %v2219 = vld [vmem:[%s2016 + $0x79] sm:$0xff]
        %v2220 = vld [vmem:[%s2016 + $0x81] sm:$0xff]
        %v2221 = vld [vmem:[%s2016 + $0x91] sm:$0xff]
        %v2222 = vld [vmem:[%s2016 + $0x99] sm:$0xff]
        %v2223 = vld [vmem:[%s2016 + $0xa9] sm:$0xff]
        %v2224 = vld [vmem:[%s2016 + $0xb1] sm:$0xff]
        %v2225 = vld [vmem:[%s2016 + $0xc1] sm:$0xff]
        %v2226 = vld [vmem:[%s2016 + $0xc9] sm:$0xff]
        %v2227 = vld [vmem:[%s2016 + $0xd9] sm:$0xff]
        %v2228 = vld [vmem:[%s2016 + $0xe1] sm:$0xff]
        %v2229 = vld [vmem:[%s2016 + $0xf1] sm:$0xff]
        %v2230 = vld [vmem:[%s2016 + $0xf9] sm:$0xff]
        %v2231 = vld [vmem:[%s2016 + $0x109] sm:$0xff]
        %v2232 = vld [vmem:[%s2016 + $0x111] sm:$0xff]
        %v2233 = vld [vmem:[%s2016 + $0x121] sm:$0xff]
        %v2234 = vld [vmem:[%s2016 + $0x129] sm:$0xff]
        %v2235 = vld [vmem:[%s2016 + $0x139] sm:$0xff]
        %v2236 = vld [vmem:[%s2016 + $0x141] sm:$0xff]
        %v2237 = vld [vmem:[%s2016 + $0x151] sm:$0xff]
        %v2238 = vld [vmem:[%s2016 + $0x159] sm:$0xff]
        %v2239 = vld [vmem:[%s2016 + $0x169] sm:$0xff]
        %v2240 = vld [vmem:[%s2016 + $0x171] sm:$0xff]
        %v2241 = vpack.c.bf16 %v2210, %v2209
        %v2242 = vpack.c.bf16 %v2212, %v2211
        %v2243 = vpack.c.bf16 %v2214, %v2213
        %v2244 = vpack.c.bf16 %v2216, %v2215
        %v2245 = vpack.c.bf16 %v2218, %v2217
        %v2246 = vpack.c.bf16 %v2220, %v2219
        %v2247 = vpack.c.bf16 %v2222, %v2221
        %v2248 = vpack.c.bf16 %v2224, %v2223
        %v2249 = vpack.c.bf16 %v2226, %v2225
        %v2250 = vpack.c.bf16 %v2228, %v2227
        %v2251 = vpack.c.bf16 %v2230, %v2229
        %v2252 = vpack.c.bf16 %v2232, %v2231
        %v2253 = vpack.c.bf16 %v2234, %v2233
        %v2254 = vpack.c.bf16 %v2236, %v2235
        %v2255 = vpack.c.bf16 %v2238, %v2237
        %v2256 = vpack.c.bf16 %v2240, %v2239
        %v2273 = vunpack.c.l.b16 %v2241
        %v2274 = vunpack.c.h.b16 %v2241
        %v2275 = vunpack.c.l.b16 %v2242
        %v2276 = vunpack.c.h.b16 %v2242
        %v2277 = vunpack.c.l.b16 %v2243
        %v2278 = vunpack.c.h.b16 %v2243
        %v2279 = vunpack.c.l.b16 %v2244
        %v2280 = vunpack.c.h.b16 %v2244
        %v2281 = vunpack.c.l.b16 %v2245
        %v2282 = vunpack.c.h.b16 %v2245
        %v2283 = vunpack.c.l.b16 %v2246
        %v2284 = vunpack.c.h.b16 %v2246
        %v2285 = vunpack.c.l.b16 %v2247
        %v2286 = vunpack.c.h.b16 %v2247
        %v2287 = vunpack.c.l.b16 %v2248
        %v2288 = vunpack.c.h.b16 %v2248
        %v2289 = vunpack.c.l.b16 %v2249
        %v2290 = vunpack.c.h.b16 %v2249
        %v2291 = vunpack.c.l.b16 %v2250
        %v2292 = vunpack.c.h.b16 %v2250
        %v2293 = vunpack.c.l.b16 %v2251
        %v2294 = vunpack.c.h.b16 %v2251
        %v2295 = vunpack.c.l.b16 %v2252
        %v2296 = vunpack.c.h.b16 %v2252
        %v2297 = vunpack.c.l.b16 %v2253
        %v2298 = vunpack.c.h.b16 %v2253
        %v2299 = vunpack.c.l.b16 %v2254
        %v2300 = vunpack.c.h.b16 %v2254
        %v2301 = vunpack.c.l.b16 %v2255
        %v2302 = vunpack.c.h.b16 %v2255
        %v2303 = vunpack.c.l.b16 %v2256
        %v2304 = vunpack.c.h.b16 %v2256
        %v2305 = vpack.c.b16 %v2273, %v2273
        %v2306 = vpack.c.b16 %v2274, %v2274
        %v2307 = vpack.c.b16 %v2275, %v2275
        %v2308 = vpack.c.b16 %v2276, %v2276
        %v2309 = vpack.c.b16 %v2277, %v2277
        %v2310 = vpack.c.b16 %v2278, %v2278
        %v2311 = vpack.c.b16 %v2279, %v2279
        %v2312 = vpack.c.b16 %v2280, %v2280
        %v2313 = vpack.c.b16 %v2281, %v2281
        %v2314 = vpack.c.b16 %v2282, %v2282
        %v2315 = vpack.c.b16 %v2283, %v2283
        %v2316 = vpack.c.b16 %v2284, %v2284
        %v2317 = vpack.c.b16 %v2285, %v2285
        %v2318 = vpack.c.b16 %v2286, %v2286
        %v2319 = vpack.c.b16 %v2287, %v2287
        %v2320 = vpack.c.b16 %v2288, %v2288
        %v2321 = vpack.c.b16 %v2289, %v2289
        %v2322 = vpack.c.b16 %v2290, %v2290
        %v2323 = vpack.c.b16 %v2291, %v2291
        %v2324 = vpack.c.b16 %v2292, %v2292
        %v2325 = vpack.c.b16 %v2293, %v2293
        %v2326 = vpack.c.b16 %v2294, %v2294
        %v2327 = vpack.c.b16 %v2295, %v2295
        %v2328 = vpack.c.b16 %v2296, %v2296
        %v2329 = vpack.c.b16 %v2297, %v2297
        %v2330 = vpack.c.b16 %v2298, %v2298
        %v2331 = vpack.c.b16 %v2299, %v2299
        %v2332 = vpack.c.b16 %v2300, %v2300
        %v2333 = vpack.c.b16 %v2301, %v2301
        %v2334 = vpack.c.b16 %v2302, %v2302
        %v2335 = vpack.c.b16 %v2303, %v2303
        %v2336 = vpack.c.b16 %v2304, %v2304
        %2369 = vst [vmem:[#allocation3 + $0x1c] sm:$0xf] %v2305
        %2370 = vst [vmem:[#allocation3 + $0x40] sm:$0xf] %v2306
        %2371 = vst [vmem:[#allocation3 + $0x64] sm:$0xf] %v2307
        %2372 = vst [vmem:[#allocation3 + $0x88] sm:$0xf] %v2308
        %2373 = vst [vmem:[#allocation3 + $0xac] sm:$0xf] %v2309
        %2374 = vst [vmem:[#allocation3 + $0xd0] sm:$0xf] %v2310
        %2375 = vst [vmem:[#allocation3 + $0xf4] sm:$0xf] %v2311
        %2376 = vst [vmem:[#allocation3 + $0x118] sm:$0xf] %v2312
        %2377 = vst [vmem:[#allocation3 + $0x13c] sm:$0xf] %v2313
        %2378 = vst [vmem:[#allocation3 + $0x160] sm:$0xf] %v2314
        %2379 = vst [vmem:[#allocation3 + $0x184] sm:$0xf] %v2315
        %2380 = vst [vmem:[#allocation3 + $0x1a8] sm:$0xf] %v2316
        %2381 = vst [vmem:[#allocation3 + $0x1cc] sm:$0xf] %v2317
        %2382 = vst [vmem:[#allocation3 + $0x1f0] sm:$0xf] %v2318
        %2383 = vst [vmem:[#allocation3 + $0x214] sm:$0xf] %v2319
        %2384 = vst [vmem:[#allocation3 + $0x238] sm:$0xf] %v2320
        %2385 = vst [vmem:[#allocation3 + $0x25c] sm:$0xf] %v2321
        %2386 = vst [vmem:[#allocation3 + $0x280] sm:$0xf] %v2322
        %2387 = vst [vmem:[#allocation3 + $0x2a4] sm:$0xf] %v2323
        %2388 = vst [vmem:[#allocation3 + $0x2c8] sm:$0xf] %v2324
        %2389 = vst [vmem:[#allocation3 + $0x2ec] sm:$0xf] %v2325
        %2390 = vst [vmem:[#allocation3 + $0x310] sm:$0xf] %v2326
        %2391 = vst [vmem:[#allocation3 + $0x334] sm:$0xf] %v2327
        %2392 = vst [vmem:[#allocation3 + $0x358] sm:$0xf] %v2328
        %2393 = vst [vmem:[#allocation3 + $0x37c] sm:$0xf] %v2329
        %2394 = vst [vmem:[#allocation3 + $0x3a0] sm:$0xf] %v2330
        %2395 = vst [vmem:[#allocation3 + $0x3c4] sm:$0xf] %v2331
        %2396 = vst [vmem:[#allocation3 + $0x3e8] sm:$0xf] %v2332
        %2397 = vst [vmem:[#allocation3 + $0x40c] sm:$0xf] %v2333
        %2398 = vst [vmem:[#allocation3 + $0x430] sm:$0xf] %v2334
        %2399 = vst [vmem:[#allocation3 + $0x454] sm:$0xf] %v2335
        %2400 = vst [vmem:[#allocation3 + $0x478] sm:$0xf] %v2336
        %v2401 = vld [vmem:[%s2016 + $0x2] sm:$0xff]
        %v2402 = vld [vmem:[%s2016 + $0xa] sm:$0xff]
        %v2403 = vld [vmem:[%s2016 + $0x1a] sm:$0xff]
        %v2404 = vld [vmem:[%s2016 + $0x22] sm:$0xff]
        %v2405 = vld [vmem:[%s2016 + $0x32] sm:$0xff]
        %v2406 = vld [vmem:[%s2016 + $0x3a] sm:$0xff]
        %v2407 = vld [vmem:[%s2016 + $0x4a] sm:$0xff]
        %v2408 = vld [vmem:[%s2016 + $0x52] sm:$0xff]
        %v2409 = vld [vmem:[%s2016 + $0x62] sm:$0xff]
        %v2410 = vld [vmem:[%s2016 + $0x6a] sm:$0xff]
        %v2411 = vld [vmem:[%s2016 + $0x7a] sm:$0xff]
        %v2412 = vld [vmem:[%s2016 + $0x82] sm:$0xff]
        %v2413 = vld [vmem:[%s2016 + $0x92] sm:$0xff]
        %v2414 = vld [vmem:[%s2016 + $0x9a] sm:$0xff]
        %v2415 = vld [vmem:[%s2016 + $0xaa] sm:$0xff]
        %v2416 = vld [vmem:[%s2016 + $0xb2] sm:$0xff]
        %v2417 = vld [vmem:[%s2016 + $0xc2] sm:$0xff]
        %v2418 = vld [vmem:[%s2016 + $0xca] sm:$0xff]
        %v2419 = vld [vmem:[%s2016 + $0xda] sm:$0xff]
        %v2420 = vld [vmem:[%s2016 + $0xe2] sm:$0xff]
        %v2421 = vld [vmem:[%s2016 + $0xf2] sm:$0xff]
        %v2422 = vld [vmem:[%s2016 + $0xfa] sm:$0xff]
        %v2423 = vld [vmem:[%s2016 + $0x10a] sm:$0xff]
        %v2424 = vld [vmem:[%s2016 + $0x112] sm:$0xff]
        %v2425 = vld [vmem:[%s2016 + $0x122] sm:$0xff]
        %v2426 = vld [vmem:[%s2016 + $0x12a] sm:$0xff]
        %v2427 = vld [vmem:[%s2016 + $0x13a] sm:$0xff]
        %v2428 = vld [vmem:[%s2016 + $0x142] sm:$0xff]
        %v2429 = vld [vmem:[%s2016 + $0x152] sm:$0xff]
        %v2430 = vld [vmem:[%s2016 + $0x15a] sm:$0xff]
        %v2431 = vld [vmem:[%s2016 + $0x16a] sm:$0xff]
        %v2432 = vld [vmem:[%s2016 + $0x172] sm:$0xff]
        %v2433 = vpack.c.bf16 %v2402, %v2401
        %v2434 = vpack.c.bf16 %v2404, %v2403
        %v2435 = vpack.c.bf16 %v2406, %v2405
        %v2436 = vpack.c.bf16 %v2408, %v2407
        %v2437 = vpack.c.bf16 %v2410, %v2409
        %v2438 = vpack.c.bf16 %v2412, %v2411
        %v2439 = vpack.c.bf16 %v2414, %v2413
        %v2440 = vpack.c.bf16 %v2416, %v2415
        %v2441 = vpack.c.bf16 %v2418, %v2417
        %v2442 = vpack.c.bf16 %v2420, %v2419
        %v2443 = vpack.c.bf16 %v2422, %v2421
        %v2444 = vpack.c.bf16 %v2424, %v2423
        %v2445 = vpack.c.bf16 %v2426, %v2425
        %v2446 = vpack.c.bf16 %v2428, %v2427
        %v2447 = vpack.c.bf16 %v2430, %v2429
        %v2448 = vpack.c.bf16 %v2432, %v2431
        %v2465 = vunpack.c.l.b16 %v2433
        %v2466 = vunpack.c.h.b16 %v2433
        %v2467 = vunpack.c.l.b16 %v2434
        %v2468 = vunpack.c.h.b16 %v2434
        %v2469 = vunpack.c.l.b16 %v2435
        %v2470 = vunpack.c.h.b16 %v2435
        %v2471 = vunpack.c.l.b16 %v2436
        %v2472 = vunpack.c.h.b16 %v2436
        %v2473 = vunpack.c.l.b16 %v2437
        %v2474 = vunpack.c.h.b16 %v2437
        %v2475 = vunpack.c.l.b16 %v2438
        %v2476 = vunpack.c.h.b16 %v2438
        %v2477 = vunpack.c.l.b16 %v2439
        %v2478 = vunpack.c.h.b16 %v2439
        %v2479 = vunpack.c.l.b16 %v2440
        %v2480 = vunpack.c.h.b16 %v2440
        %v2481 = vunpack.c.l.b16 %v2441
        %v2482 = vunpack.c.h.b16 %v2441
        %v2483 = vunpack.c.l.b16 %v2442
        %v2484 = vunpack.c.h.b16 %v2442
        %v2485 = vunpack.c.l.b16 %v2443
        %v2486 = vunpack.c.h.b16 %v2443
        %v2487 = vunpack.c.l.b16 %v2444
        %v2488 = vunpack.c.h.b16 %v2444
        %v2489 = vunpack.c.l.b16 %v2445
        %v2490 = vunpack.c.h.b16 %v2445
        %v2491 = vunpack.c.l.b16 %v2446
        %v2492 = vunpack.c.h.b16 %v2446
        %v2493 = vunpack.c.l.b16 %v2447
        %v2494 = vunpack.c.h.b16 %v2447
        %v2495 = vunpack.c.l.b16 %v2448
        %v2496 = vunpack.c.h.b16 %v2448
        %v2497 = vpack.c.b16 %v2465, %v2465
        %v2498 = vpack.c.b16 %v2466, %v2466
        %v2499 = vpack.c.b16 %v2467, %v2467
        %v2500 = vpack.c.b16 %v2468, %v2468
        %v2501 = vpack.c.b16 %v2469, %v2469
        %v2502 = vpack.c.b16 %v2470, %v2470
        %v2503 = vpack.c.b16 %v2471, %v2471
        %v2504 = vpack.c.b16 %v2472, %v2472
        %v2505 = vpack.c.b16 %v2473, %v2473
        %v2506 = vpack.c.b16 %v2474, %v2474
        %v2507 = vpack.c.b16 %v2475, %v2475
        %v2508 = vpack.c.b16 %v2476, %v2476
        %v2509 = vpack.c.b16 %v2477, %v2477
        %v2510 = vpack.c.b16 %v2478, %v2478
        %v2511 = vpack.c.b16 %v2479, %v2479
        %v2512 = vpack.c.b16 %v2480, %v2480
        %v2513 = vpack.c.b16 %v2481, %v2481
        %v2514 = vpack.c.b16 %v2482, %v2482
        %v2515 = vpack.c.b16 %v2483, %v2483
        %v2516 = vpack.c.b16 %v2484, %v2484
        %v2517 = vpack.c.b16 %v2485, %v2485
        %v2518 = vpack.c.b16 %v2486, %v2486
        %v2519 = vpack.c.b16 %v2487, %v2487
        %v2520 = vpack.c.b16 %v2488, %v2488
        %v2521 = vpack.c.b16 %v2489, %v2489
        %v2522 = vpack.c.b16 %v2490, %v2490
        %v2523 = vpack.c.b16 %v2491, %v2491
        %v2524 = vpack.c.b16 %v2492, %v2492
        %v2525 = vpack.c.b16 %v2493, %v2493
        %v2526 = vpack.c.b16 %v2494, %v2494
        %v2527 = vpack.c.b16 %v2495, %v2495
        %v2528 = vpack.c.b16 %v2496, %v2496
        %2561 = vst [vmem:[#allocation3 + $0x20] sm:$0xf] %v2497
        %2562 = vst [vmem:[#allocation3 + $0x44] sm:$0xf] %v2498
        %2563 = vst [vmem:[#allocation3 + $0x68] sm:$0xf] %v2499
        %2564 = vst [vmem:[#allocation3 + $0x8c] sm:$0xf] %v2500
        %2565 = vst [vmem:[#allocation3 + $0xb0] sm:$0xf] %v2501
        %2566 = vst [vmem:[#allocation3 + $0xd4] sm:$0xf] %v2502
        %2567 = vst [vmem:[#allocation3 + $0xf8] sm:$0xf] %v2503
        %2568 = vst [vmem:[#allocation3 + $0x11c] sm:$0xf] %v2504
        %2569 = vst [vmem:[#allocation3 + $0x140] sm:$0xf] %v2505
        %2570 = vst [vmem:[#allocation3 + $0x164] sm:$0xf] %v2506
        %2571 = vst [vmem:[#allocation3 + $0x188] sm:$0xf] %v2507
        %2572 = vst [vmem:[#allocation3 + $0x1ac] sm:$0xf] %v2508
        %2573 = vst [vmem:[#allocation3 + $0x1d0] sm:$0xf] %v2509
        %2574 = vst [vmem:[#allocation3 + $0x1f4] sm:$0xf] %v2510
        %2575 = vst [vmem:[#allocation3 + $0x218] sm:$0xf] %v2511
        %2576 = vst [vmem:[#allocation3 + $0x23c] sm:$0xf] %v2512
        %2577 = vst [vmem:[#allocation3 + $0x260] sm:$0xf] %v2513
        %2578 = vst [vmem:[#allocation3 + $0x284] sm:$0xf] %v2514
        %2579 = vst [vmem:[#allocation3 + $0x2a8] sm:$0xf] %v2515
        %2580 = vst [vmem:[#allocation3 + $0x2cc] sm:$0xf] %v2516
        %2581 = vst [vmem:[#allocation3 + $0x2f0] sm:$0xf] %v2517
        %2582 = vst [vmem:[#allocation3 + $0x314] sm:$0xf] %v2518
        %2583 = vst [vmem:[#allocation3 + $0x338] sm:$0xf] %v2519
        %2584 = vst [vmem:[#allocation3 + $0x35c] sm:$0xf] %v2520
        %2585 = vst [vmem:[#allocation3 + $0x380] sm:$0xf] %v2521
        %2586 = vst [vmem:[#allocation3 + $0x3a4] sm:$0xf] %v2522
        %2587 = vst [vmem:[#allocation3 + $0x3c8] sm:$0xf] %v2523
        %2588 = vst [vmem:[#allocation3 + $0x3ec] sm:$0xf] %v2524
        %2589 = vst [vmem:[#allocation3 + $0x410] sm:$0xf] %v2525
        %2590 = vst [vmem:[#allocation3 + $0x434] sm:$0xf] %v2526
        %2591 = vst [vmem:[#allocation3 + $0x458] sm:$0xf] %v2527
        %2592 = vst [vmem:[#allocation3 + $0x47c] sm:$0xf] %v2528
        %v2593 = vld [vmem:[#allocation3] sm:$0xff]
        %v2594 = vld [vmem:[#allocation3 + $0x8] sm:$0xff]
        %v2595 = vld [vmem:[#allocation3 + $0x10] sm:$0xff]
        %v2596 = vld [vmem:[#allocation3 + $0x18] sm:$0xff]
        %v2597 = vld [vmem:[#allocation3 + $0x20] sm:$0xf]
        %v2598 = vld [vmem:[#allocation3 + $0x24] sm:$0xff]
        %v2599 = vld [vmem:[#allocation3 + $0x2c] sm:$0xff]
        %v2600 = vld [vmem:[#allocation3 + $0x34] sm:$0xff]
        %v2601 = vld [vmem:[#allocation3 + $0x3c] sm:$0xff]
        %v2602 = vld [vmem:[#allocation3 + $0x44] sm:$0xf]
        %v2603 = vld [vmem:[#allocation3 + $0x48] sm:$0xff]
        %v2604 = vld [vmem:[#allocation3 + $0x50] sm:$0xff]
        %v2605 = vld [vmem:[#allocation3 + $0x58] sm:$0xff]
        %v2606 = vld [vmem:[#allocation3 + $0x60] sm:$0xff]
        %v2607 = vld [vmem:[#allocation3 + $0x68] sm:$0xf]
        %v2608 = vld [vmem:[#allocation3 + $0x6c] sm:$0xff]
        %v2609 = vld [vmem:[#allocation3 + $0x74] sm:$0xff]
        %v2610 = vld [vmem:[#allocation3 + $0x7c] sm:$0xff]
        %v2611 = vld [vmem:[#allocation3 + $0x84] sm:$0xff]
        %v2612 = vld [vmem:[#allocation3 + $0x8c] sm:$0xf]
        %v2613 = vld [vmem:[#allocation3 + $0x90] sm:$0xff]
        %v2614 = vld [vmem:[#allocation3 + $0x98] sm:$0xff]
        %v2615 = vld [vmem:[#allocation3 + $0xa0] sm:$0xff]
        %v2616 = vld [vmem:[#allocation3 + $0xa8] sm:$0xff]
        %v2617 = vld [vmem:[#allocation3 + $0xb0] sm:$0xf]
        %v2618 = vld [vmem:[#allocation3 + $0xb4] sm:$0xff]
        %v2619 = vld [vmem:[#allocation3 + $0xbc] sm:$0xff]
        %v2620 = vld [vmem:[#allocation3 + $0xc4] sm:$0xff]
        %v2621 = vld [vmem:[#allocation3 + $0xcc] sm:$0xff]
        %v2622 = vld [vmem:[#allocation3 + $0xd4] sm:$0xf]
        %v2623 = vld [vmem:[#allocation3 + $0xd8] sm:$0xff]
        %v2624 = vld [vmem:[#allocation3 + $0xe0] sm:$0xff]
        %v2625 = vld [vmem:[#allocation3 + $0xe8] sm:$0xff]
        %v2626 = vld [vmem:[#allocation3 + $0xf0] sm:$0xff]
        %v2627 = vld [vmem:[#allocation3 + $0xf8] sm:$0xf]
        %v2628 = vld [vmem:[#allocation3 + $0xfc] sm:$0xff]
        %v2629 = vld [vmem:[#allocation3 + $0x104] sm:$0xff]
        %v2630 = vld [vmem:[#allocation3 + $0x10c] sm:$0xff]
        %v2631 = vld [vmem:[#allocation3 + $0x114] sm:$0xff]
        %v2632 = vld [vmem:[#allocation3 + $0x11c] sm:$0xf]
        %v2633 = vld [vmem:[#allocation3 + $0x120] sm:$0xff]
        %v2634 = vld [vmem:[#allocation3 + $0x128] sm:$0xff]
        %v2635 = vld [vmem:[#allocation3 + $0x130] sm:$0xff]
        %v2636 = vld [vmem:[#allocation3 + $0x138] sm:$0xff]
        %v2637 = vld [vmem:[#allocation3 + $0x140] sm:$0xf]
        %v2638 = vld [vmem:[#allocation3 + $0x144] sm:$0xff]
        %v2639 = vld [vmem:[#allocation3 + $0x14c] sm:$0xff]
        %v2640 = vld [vmem:[#allocation3 + $0x154] sm:$0xff]
        %v2641 = vld [vmem:[#allocation3 + $0x15c] sm:$0xff]
        %v2642 = vld [vmem:[#allocation3 + $0x164] sm:$0xf]
        %v2643 = vld [vmem:[#allocation3 + $0x168] sm:$0xff]
        %v2644 = vld [vmem:[#allocation3 + $0x170] sm:$0xff]
        %v2645 = vld [vmem:[#allocation3 + $0x178] sm:$0xff]
        %v2646 = vld [vmem:[#allocation3 + $0x180] sm:$0xff]
        %v2647 = vld [vmem:[#allocation3 + $0x188] sm:$0xf]
        %v2648 = vld [vmem:[#allocation3 + $0x18c] sm:$0xff]
        %v2649 = vld [vmem:[#allocation3 + $0x194] sm:$0xff]
        %v2650 = vld [vmem:[#allocation3 + $0x19c] sm:$0xff]
        %v2651 = vld [vmem:[#allocation3 + $0x1a4] sm:$0xff]
        %v2652 = vld [vmem:[#allocation3 + $0x1ac] sm:$0xf]
        %v2653 = vld [vmem:[#allocation3 + $0x1b0] sm:$0xff]
        %v2654 = vld [vmem:[#allocation3 + $0x1b8] sm:$0xff]
        %v2655 = vld [vmem:[#allocation3 + $0x1c0] sm:$0xff]
        %v2656 = vld [vmem:[#allocation3 + $0x1c8] sm:$0xff]
        %v2657 = vld [vmem:[#allocation3 + $0x1d0] sm:$0xf]
        %v2658 = vld [vmem:[#allocation3 + $0x1d4] sm:$0xff]
        %v2659 = vld [vmem:[#allocation3 + $0x1dc] sm:$0xff]
        %v2660 = vld [vmem:[#allocation3 + $0x1e4] sm:$0xff]
        %v2661 = vld [vmem:[#allocation3 + $0x1ec] sm:$0xff]
        %v2662 = vld [vmem:[#allocation3 + $0x1f4] sm:$0xf]
        %v2663 = vld [vmem:[#allocation3 + $0x1f8] sm:$0xff]
        %v2664 = vld [vmem:[#allocation3 + $0x200] sm:$0xff]
        %v2665 = vld [vmem:[#allocation3 + $0x208] sm:$0xff]
        %v2666 = vld [vmem:[#allocation3 + $0x210] sm:$0xff]
        %v2667 = vld [vmem:[#allocation3 + $0x218] sm:$0xf]
        %v2668 = vld [vmem:[#allocation3 + $0x21c] sm:$0xff]
        %v2669 = vld [vmem:[#allocation3 + $0x224] sm:$0xff]
        %v2670 = vld [vmem:[#allocation3 + $0x22c] sm:$0xff]
        %v2671 = vld [vmem:[#allocation3 + $0x234] sm:$0xff]
        %v2672 = vld [vmem:[#allocation3 + $0x23c] sm:$0xf]
        %v2673 = vld [vmem:[#allocation3 + $0x240] sm:$0xff]
        %v2674 = vld [vmem:[#allocation3 + $0x248] sm:$0xff]
        %v2675 = vld [vmem:[#allocation3 + $0x250] sm:$0xff]
        %v2676 = vld [vmem:[#allocation3 + $0x258] sm:$0xff]
        %v2677 = vld [vmem:[#allocation3 + $0x260] sm:$0xf]
        %v2678 = vld [vmem:[#allocation3 + $0x264] sm:$0xff]
        %v2679 = vld [vmem:[#allocation3 + $0x26c] sm:$0xff]
        %v2680 = vld [vmem:[#allocation3 + $0x274] sm:$0xff]
        %v2681 = vld [vmem:[#allocation3 + $0x27c] sm:$0xff]
        %v2682 = vld [vmem:[#allocation3 + $0x284] sm:$0xf]
        %v2683 = vld [vmem:[#allocation3 + $0x288] sm:$0xff]
        %v2684 = vld [vmem:[#allocation3 + $0x290] sm:$0xff]
        %v2685 = vld [vmem:[#allocation3 + $0x298] sm:$0xff]
        %v2686 = vld [vmem:[#allocation3 + $0x2a0] sm:$0xff]
        %v2687 = vld [vmem:[#allocation3 + $0x2a8] sm:$0xf]
        %v2688 = vld [vmem:[#allocation3 + $0x2ac] sm:$0xff]
        %v2689 = vld [vmem:[#allocation3 + $0x2b4] sm:$0xff]
        %v2690 = vld [vmem:[#allocation3 + $0x2bc] sm:$0xff]
        %v2691 = vld [vmem:[#allocation3 + $0x2c4] sm:$0xff]
        %v2692 = vld [vmem:[#allocation3 + $0x2cc] sm:$0xf]
        %v2693 = vld [vmem:[#allocation3 + $0x2d0] sm:$0xff]
        %v2694 = vld [vmem:[#allocation3 + $0x2d8] sm:$0xff]
        %v2695 = vld [vmem:[#allocation3 + $0x2e0] sm:$0xff]
        %v2696 = vld [vmem:[#allocation3 + $0x2e8] sm:$0xff]
        %v2697 = vld [vmem:[#allocation3 + $0x2f0] sm:$0xf]
        %v2698 = vld [vmem:[#allocation3 + $0x2f4] sm:$0xff]
        %v2699 = vld [vmem:[#allocation3 + $0x2fc] sm:$0xff]
        %v2700 = vld [vmem:[#allocation3 + $0x304] sm:$0xff]
        %v2701 = vld [vmem:[#allocation3 + $0x30c] sm:$0xff]
        %v2702 = vld [vmem:[#allocation3 + $0x314] sm:$0xf]
        %v2703 = vld [vmem:[#allocation3 + $0x318] sm:$0xff]
        %v2704 = vld [vmem:[#allocation3 + $0x320] sm:$0xff]
        %v2705 = vld [vmem:[#allocation3 + $0x328] sm:$0xff]
        %v2706 = vld [vmem:[#allocation3 + $0x330] sm:$0xff]
        %v2707 = vld [vmem:[#allocation3 + $0x338] sm:$0xf]
        %v2708 = vld [vmem:[#allocation3 + $0x33c] sm:$0xff]
        %v2709 = vld [vmem:[#allocation3 + $0x344] sm:$0xff]
        %v2710 = vld [vmem:[#allocation3 + $0x34c] sm:$0xff]
        %v2711 = vld [vmem:[#allocation3 + $0x354] sm:$0xff]
        %v2712 = vld [vmem:[#allocation3 + $0x35c] sm:$0xf]
        %v2713 = vld [vmem:[#allocation3 + $0x360] sm:$0xff]
        %v2714 = vld [vmem:[#allocation3 + $0x368] sm:$0xff]
        %v2715 = vld [vmem:[#allocation3 + $0x370] sm:$0xff]
        %v2716 = vld [vmem:[#allocation3 + $0x378] sm:$0xff]
        %v2717 = vld [vmem:[#allocation3 + $0x380] sm:$0xf]
        %v2718 = vld [vmem:[#allocation3 + $0x384] sm:$0xff]
        %v2719 = vld [vmem:[#allocation3 + $0x38c] sm:$0xff]
        %v2720 = vld [vmem:[#allocation3 + $0x394] sm:$0xff]
        %v2721 = vld [vmem:[#allocation3 + $0x39c] sm:$0xff]
        %v2722 = vld [vmem:[#allocation3 + $0x3a4] sm:$0xf]
        %v2723 = vld [vmem:[#allocation3 + $0x3a8] sm:$0xff]
        %v2724 = vld [vmem:[#allocation3 + $0x3b0] sm:$0xff]
        %v2725 = vld [vmem:[#allocation3 + $0x3b8] sm:$0xff]
        %v2726 = vld [vmem:[#allocation3 + $0x3c0] sm:$0xff]
        %v2727 = vld [vmem:[#allocation3 + $0x3c8] sm:$0xf]
        %v2728 = vld [vmem:[#allocation3 + $0x3cc] sm:$0xff]
        %v2729 = vld [vmem:[#allocation3 + $0x3d4] sm:$0xff]
        %v2730 = vld [vmem:[#allocation3 + $0x3dc] sm:$0xff]
        %v2731 = vld [vmem:[#allocation3 + $0x3e4] sm:$0xff]
        %v2732 = vld [vmem:[#allocation3 + $0x3ec] sm:$0xf]
        %v2733 = vld [vmem:[#allocation3 + $0x3f0] sm:$0xff]
        %v2734 = vld [vmem:[#allocation3 + $0x3f8] sm:$0xff]
        %v2735 = vld [vmem:[#allocation3 + $0x400] sm:$0xff]
        %v2736 = vld [vmem:[#allocation3 + $0x408] sm:$0xff]
        %v2737 = vld [vmem:[#allocation3 + $0x410] sm:$0xf]
        %v2738 = vld [vmem:[#allocation3 + $0x414] sm:$0xff]
        %v2739 = vld [vmem:[#allocation3 + $0x41c] sm:$0xff]
        %v2740 = vld [vmem:[#allocation3 + $0x424] sm:$0xff]
        %v2741 = vld [vmem:[#allocation3 + $0x42c] sm:$0xff]
        %v2742 = vld [vmem:[#allocation3 + $0x434] sm:$0xf]
        %v2743 = vld [vmem:[#allocation3 + $0x438] sm:$0xff]
        %v2744 = vld [vmem:[#allocation3 + $0x440] sm:$0xff]
        %v2745 = vld [vmem:[#allocation3 + $0x448] sm:$0xff]
        %v2746 = vld [vmem:[#allocation3 + $0x450] sm:$0xff]
        %v2747 = vld [vmem:[#allocation3 + $0x458] sm:$0xf]
        %v2748 = vld [vmem:[#allocation3 + $0x45c] sm:$0xff]
        %v2749 = vld [vmem:[#allocation3 + $0x464] sm:$0xff]
        %v2750 = vld [vmem:[#allocation3 + $0x46c] sm:$0xff]
        %v2751 = vld [vmem:[#allocation3 + $0x474] sm:$0xff]
        %v2752 = vld [vmem:[#allocation3 + $0x47c] sm:$0xf]
        %v2753 = vld [vmem:[%s6] sm:$0xf]
        %v2754 = vld [vmem:[%s6 + $0x4] sm:$0xf]
        %v2755 = vld [vmem:[%s6 + $0x8] sm:$0xf]
        %v2756 = vld [vmem:[%s6 + $0xc] sm:$0xf]
        %v2757 = vld [vmem:[%s6 + $0x10] sm:$0xf]
        %v2758 = vld [vmem:[%s6 + $0x14] sm:$0xf]
        %v2759 = vld [vmem:[%s6 + $0x18] sm:$0xf]
        %v2760 = vld [vmem:[%s6 + $0x1c] sm:$0xf]
        %v2761 = vld [vmem:[%s6 + $0x20] sm:$0xf]
        %v2762 = vld [vmem:[%s6 + $0x24] sm:$0xf]
        %v2763 = vld [vmem:[%s6 + $0x28] sm:$0xf]
        %v2764 = vld [vmem:[%s6 + $0x2c] sm:$0xf]
        %v2765 = vld [vmem:[%s6 + $0x30] sm:$0xf]
        %v2766 = vld [vmem:[%s6 + $0x34] sm:$0xf]
        %v2767 = vld [vmem:[%s6 + $0x38] sm:$0xf]
        %v2768 = vld [vmem:[%s6 + $0x3c] sm:$0xf]
        %v2769 = vld [vmem:[%s6 + $0x40] sm:$0xf]
        %v2770 = vld [vmem:[%s6 + $0x44] sm:$0xf]
        %v2771 = vld [vmem:[%s6 + $0x48] sm:$0xf]
        %v2772 = vld [vmem:[%s6 + $0x4c] sm:$0xf]
        %v2773 = vld [vmem:[%s6 + $0x50] sm:$0xf]
        %v2774 = vld [vmem:[%s6 + $0x54] sm:$0xf]
        %v2775 = vld [vmem:[%s6 + $0x58] sm:$0xf]
        %v2776 = vld [vmem:[%s6 + $0x5c] sm:$0xf]
        %v2777 = vld [vmem:[%s6 + $0x60] sm:$0xf]
        %v2778 = vld [vmem:[%s6 + $0x64] sm:$0xf]
        %v2779 = vld [vmem:[%s6 + $0x68] sm:$0xf]
        %v2780 = vld [vmem:[%s6 + $0x6c] sm:$0xf]
        %v2781 = vld [vmem:[%s6 + $0x70] sm:$0xf]
        %v2782 = vld [vmem:[%s6 + $0x74] sm:$0xf]
        %v2783 = vld [vmem:[%s6 + $0x78] sm:$0xf]
        %v2784 = vld [vmem:[%s6 + $0x7c] sm:$0xf]
        %v2785 = vld [vmem:[%s6 + $0x80] sm:$0xf]
        %v2786 = vld [vmem:[%s6 + $0x84] sm:$0xf]
        %v2787 = vld [vmem:[%s6 + $0x88] sm:$0xf]
        %v2788 = vld [vmem:[%s6 + $0x8c] sm:$0xf]
        %v2789 = vld [vmem:[%s6 + $0x90] sm:$0xf]
        %v2790 = vld [vmem:[%s6 + $0x94] sm:$0xf]
        %v2791 = vld [vmem:[%s6 + $0x98] sm:$0xf]
        %v2792 = vld [vmem:[%s6 + $0x9c] sm:$0xf]
        %v2793 = vld [vmem:[%s6 + $0xa0] sm:$0xf]
        %v2794 = vld [vmem:[%s6 + $0xa4] sm:$0xf]
        %v2795 = vld [vmem:[%s6 + $0xa8] sm:$0xf]
        %v2796 = vld [vmem:[%s6 + $0xac] sm:$0xf]
        %v2797 = vld [vmem:[%s6 + $0xb0] sm:$0xf]
        %v2798 = vld [vmem:[%s6 + $0xb4] sm:$0xf]
        %v2799 = vld [vmem:[%s6 + $0xb8] sm:$0xf]
        %v2800 = vld [vmem:[%s6 + $0xbc] sm:$0xf]
        %v2801 = vld [vmem:[%s6 + $0xc0] sm:$0xf]
        %v2802 = vld [vmem:[%s6 + $0xc4] sm:$0xf]
        %v2803 = vld [vmem:[%s6 + $0xc8] sm:$0xf]
        %v2804 = vld [vmem:[%s6 + $0xcc] sm:$0xf]
        %v2805 = vld [vmem:[%s6 + $0xd0] sm:$0xf]
        %v2806 = vld [vmem:[%s6 + $0xd4] sm:$0xf]
        %v2807 = vld [vmem:[%s6 + $0xd8] sm:$0xf]
        %v2808 = vld [vmem:[%s6 + $0xdc] sm:$0xf]
        %v2809 = vld [vmem:[%s6 + $0xe0] sm:$0xf]
        %v2810 = vld [vmem:[%s6 + $0xe4] sm:$0xf]
        %v2811 = vld [vmem:[%s6 + $0xe8] sm:$0xf]
        %v2812 = vld [vmem:[%s6 + $0xec] sm:$0xf]
        %v2813 = vld [vmem:[%s6 + $0xf0] sm:$0xf]
        %v2814 = vld [vmem:[%s6 + $0xf4] sm:$0xf]
        %v2815 = vld [vmem:[%s6 + $0xf8] sm:$0xf]
        %v2816 = vld [vmem:[%s6 + $0xfc] sm:$0xf]
        %v2817 = vld [vmem:[%s6 + $0x100] sm:$0xf]
        %v2818 = vld [vmem:[%s6 + $0x104] sm:$0xf]
        %v2819 = vld [vmem:[%s6 + $0x108] sm:$0xf]
        %v2820 = vld [vmem:[%s6 + $0x10c] sm:$0xf]
        %v2821 = vld [vmem:[%s6 + $0x110] sm:$0xf]
        %v2822 = vld [vmem:[%s6 + $0x114] sm:$0xf]
        %v2823 = vld [vmem:[%s6 + $0x118] sm:$0xf]
        %v2824 = vld [vmem:[%s6 + $0x11c] sm:$0xf]
        %v2825 = vld [vmem:[%s6 + $0x120] sm:$0xf]
        %v2826 = vld [vmem:[%s6 + $0x124] sm:$0xf]
        %v2827 = vld [vmem:[%s6 + $0x128] sm:$0xf]
        %v2828 = vld [vmem:[%s6 + $0x12c] sm:$0xf]
        %v2829 = vld [vmem:[%s6 + $0x130] sm:$0xf]
        %v2830 = vld [vmem:[%s6 + $0x134] sm:$0xf]
        %v2831 = vld [vmem:[%s6 + $0x138] sm:$0xf]
        %v2832 = vld [vmem:[%s6 + $0x13c] sm:$0xf]
        %v2833 = vld [vmem:[%s6 + $0x140] sm:$0xf]
        %v2834 = vld [vmem:[%s6 + $0x144] sm:$0xf]
        %v2835 = vld [vmem:[%s6 + $0x148] sm:$0xf]
        %v2836 = vld [vmem:[%s6 + $0x14c] sm:$0xf]
        %v2837 = vld [vmem:[%s6 + $0x150] sm:$0xf]
        %v2838 = vld [vmem:[%s6 + $0x154] sm:$0xf]
        %v2839 = vld [vmem:[%s6 + $0x158] sm:$0xf]
        %v2840 = vld [vmem:[%s6 + $0x15c] sm:$0xf]
        %v2841 = vld [vmem:[%s6 + $0x160] sm:$0xf]
        %v2842 = vld [vmem:[%s6 + $0x164] sm:$0xf]
        %v2843 = vld [vmem:[%s6 + $0x168] sm:$0xf]
        %v2844 = vld [vmem:[%s6 + $0x16c] sm:$0xf]
        %v2845 = vld [vmem:[%s6 + $0x170] sm:$0xf]
        %v2846 = vld [vmem:[%s6 + $0x174] sm:$0xf]
        %v2847 = vld [vmem:[%s6 + $0x178] sm:$0xf]
        %v2848 = vld [vmem:[%s6 + $0x17c] sm:$0xf]
        %v2849 = vld [vmem:[%s6 + $0x180] sm:$0xf]
        %v2850 = vld [vmem:[%s6 + $0x184] sm:$0xf]
        %v2851 = vld [vmem:[%s6 + $0x188] sm:$0xf]
        %v2852 = vld [vmem:[%s6 + $0x18c] sm:$0xf]
        %v2853 = vld [vmem:[%s6 + $0x190] sm:$0xf]
        %v2854 = vld [vmem:[%s6 + $0x194] sm:$0xf]
        %v2855 = vld [vmem:[%s6 + $0x198] sm:$0xf]
        %v2856 = vld [vmem:[%s6 + $0x19c] sm:$0xf]
        %v2857 = vld [vmem:[%s6 + $0x1a0] sm:$0xf]
        %v2858 = vld [vmem:[%s6 + $0x1a4] sm:$0xf]
        %v2859 = vld [vmem:[%s6 + $0x1a8] sm:$0xf]
        %v2860 = vld [vmem:[%s6 + $0x1ac] sm:$0xf]
        %v2861 = vld [vmem:[%s6 + $0x1b0] sm:$0xf]
        %v2862 = vld [vmem:[%s6 + $0x1b4] sm:$0xf]
        %v2863 = vld [vmem:[%s6 + $0x1b8] sm:$0xf]
        %v2864 = vld [vmem:[%s6 + $0x1bc] sm:$0xf]
        %v2865 = vld [vmem:[%s6 + $0x1c0] sm:$0xf]
        %v2866 = vld [vmem:[%s6 + $0x1c4] sm:$0xf]
        %v2867 = vld [vmem:[%s6 + $0x1c8] sm:$0xf]
        %v2868 = vld [vmem:[%s6 + $0x1cc] sm:$0xf]
        %v2869 = vld [vmem:[%s6 + $0x1d0] sm:$0xf]
        %v2870 = vld [vmem:[%s6 + $0x1d4] sm:$0xf]
        %v2871 = vld [vmem:[%s6 + $0x1d8] sm:$0xf]
        %v2872 = vld [vmem:[%s6 + $0x1dc] sm:$0xf]
        %v2873 = vld [vmem:[%s6 + $0x1e0] sm:$0xf]
        %v2874 = vld [vmem:[%s6 + $0x1e4] sm:$0xf]
        %v2875 = vld [vmem:[%s6 + $0x1e8] sm:$0xf]
        %v2876 = vld [vmem:[%s6 + $0x1ec] sm:$0xf]
        %v2877 = vld [vmem:[%s6 + $0x1f0] sm:$0xf]
        %v2878 = vld [vmem:[%s6 + $0x1f4] sm:$0xf]
        %v2879 = vld [vmem:[%s6 + $0x1f8] sm:$0xf]
        %v2880 = vld [vmem:[%s6 + $0x1fc] sm:$0xf]
        %v2881 = vld [vmem:[%s6 + $0x200] sm:$0xf]
        %v2882 = vld [vmem:[%s6 + $0x204] sm:$0xf]
        %v2883 = vld [vmem:[%s6 + $0x208] sm:$0xf]
        %v2884 = vld [vmem:[%s6 + $0x20c] sm:$0xf]
        %v2885 = vld [vmem:[%s6 + $0x210] sm:$0xf]
        %v2886 = vld [vmem:[%s6 + $0x214] sm:$0xf]
        %v2887 = vld [vmem:[%s6 + $0x218] sm:$0xf]
        %v2888 = vld [vmem:[%s6 + $0x21c] sm:$0xf]
        %v2889 = vld [vmem:[%s6 + $0x220] sm:$0xf]
        %v2890 = vld [vmem:[%s6 + $0x224] sm:$0xf]
        %v2891 = vld [vmem:[%s6 + $0x228] sm:$0xf]
        %v2892 = vld [vmem:[%s6 + $0x22c] sm:$0xf]
        %v2893 = vld [vmem:[%s6 + $0x230] sm:$0xf]
        %v2894 = vld [vmem:[%s6 + $0x234] sm:$0xf]
        %v2895 = vld [vmem:[%s6 + $0x238] sm:$0xf]
        %v2896 = vld [vmem:[%s6 + $0x23c] sm:$0xf]
        %v3057 = vunpack.c.l.b16 %v2593
        %v3058 = vunpack.c.h.b16 %v2593
        %v3059 = vunpack.c.l.b16 %v2594
        %v3060 = vunpack.c.h.b16 %v2594
        %v3061 = vunpack.c.l.b16 %v2595
        %v3062 = vunpack.c.h.b16 %v2595
        %v3063 = vunpack.c.l.b16 %v2596
        %v3064 = vunpack.c.h.b16 %v2596
        %v3065 = vunpack.c.l.b16 %v2597
        %v3066 = vunpack.c.l.b16 %v2598
        %v3067 = vunpack.c.h.b16 %v2598
        %v3068 = vunpack.c.l.b16 %v2599
        %v3069 = vunpack.c.h.b16 %v2599
        %v3070 = vunpack.c.l.b16 %v2600
        %v3071 = vunpack.c.h.b16 %v2600
        %v3072 = vunpack.c.l.b16 %v2601
        %v3073 = vunpack.c.h.b16 %v2601
        %v3074 = vunpack.c.l.b16 %v2602
        %v3075 = vunpack.c.l.b16 %v2603
        %v3076 = vunpack.c.h.b16 %v2603
        %v3077 = vunpack.c.l.b16 %v2604
        %v3078 = vunpack.c.h.b16 %v2604
        %v3079 = vunpack.c.l.b16 %v2605
        %v3080 = vunpack.c.h.b16 %v2605
        %v3081 = vunpack.c.l.b16 %v2606
        %v3082 = vunpack.c.h.b16 %v2606
        %v3083 = vunpack.c.l.b16 %v2607
        %v3084 = vunpack.c.l.b16 %v2608
        %v3085 = vunpack.c.h.b16 %v2608
        %v3086 = vunpack.c.l.b16 %v2609
        %v3087 = vunpack.c.h.b16 %v2609
        %v3088 = vunpack.c.l.b16 %v2610
        %v3089 = vunpack.c.h.b16 %v2610
        %v3090 = vunpack.c.l.b16 %v2611
        %v3091 = vunpack.c.h.b16 %v2611
        %v3092 = vunpack.c.l.b16 %v2612
        %v3093 = vunpack.c.l.b16 %v2613
        %v3094 = vunpack.c.h.b16 %v2613
        %v3095 = vunpack.c.l.b16 %v2614
        %v3096 = vunpack.c.h.b16 %v2614
        %v3097 = vunpack.c.l.b16 %v2615
        %v3098 = vunpack.c.h.b16 %v2615
        %v3099 = vunpack.c.l.b16 %v2616
        %v3100 = vunpack.c.h.b16 %v2616
        %v3101 = vunpack.c.l.b16 %v2617
        %v3102 = vunpack.c.l.b16 %v2618
        %v3103 = vunpack.c.h.b16 %v2618
        %v3104 = vunpack.c.l.b16 %v2619
        %v3105 = vunpack.c.h.b16 %v2619
        %v3106 = vunpack.c.l.b16 %v2620
        %v3107 = vunpack.c.h.b16 %v2620
        %v3108 = vunpack.c.l.b16 %v2621
        %v3109 = vunpack.c.h.b16 %v2621
        %v3110 = vunpack.c.l.b16 %v2622
        %v3111 = vunpack.c.l.b16 %v2623
        %v3112 = vunpack.c.h.b16 %v2623
        %v3113 = vunpack.c.l.b16 %v2624
        %v3114 = vunpack.c.h.b16 %v2624
        %v3115 = vunpack.c.l.b16 %v2625
        %v3116 = vunpack.c.h.b16 %v2625
        %v3117 = vunpack.c.l.b16 %v2626
        %v3118 = vunpack.c.h.b16 %v2626
        %v3119 = vunpack.c.l.b16 %v2627
        %v3120 = vunpack.c.l.b16 %v2628
        %v3121 = vunpack.c.h.b16 %v2628
        %v3122 = vunpack.c.l.b16 %v2629
        %v3123 = vunpack.c.h.b16 %v2629
        %v3124 = vunpack.c.l.b16 %v2630
        %v3125 = vunpack.c.h.b16 %v2630
        %v3126 = vunpack.c.l.b16 %v2631
        %v3127 = vunpack.c.h.b16 %v2631
        %v3128 = vunpack.c.l.b16 %v2632
        %v3129 = vunpack.c.l.b16 %v2633
        %v3130 = vunpack.c.h.b16 %v2633
        %v3131 = vunpack.c.l.b16 %v2634
        %v3132 = vunpack.c.h.b16 %v2634
        %v3133 = vunpack.c.l.b16 %v2635
        %v3134 = vunpack.c.h.b16 %v2635
        %v3135 = vunpack.c.l.b16 %v2636
        %v3136 = vunpack.c.h.b16 %v2636
        %v3137 = vunpack.c.l.b16 %v2637
        %v3138 = vunpack.c.l.b16 %v2638
        %v3139 = vunpack.c.h.b16 %v2638
        %v3140 = vunpack.c.l.b16 %v2639
        %v3141 = vunpack.c.h.b16 %v2639
        %v3142 = vunpack.c.l.b16 %v2640
        %v3143 = vunpack.c.h.b16 %v2640
        %v3144 = vunpack.c.l.b16 %v2641
        %v3145 = vunpack.c.h.b16 %v2641
        %v3146 = vunpack.c.l.b16 %v2642
        %v3147 = vunpack.c.l.b16 %v2643
        %v3148 = vunpack.c.h.b16 %v2643
        %v3149 = vunpack.c.l.b16 %v2644
        %v3150 = vunpack.c.h.b16 %v2644
        %v3151 = vunpack.c.l.b16 %v2645
        %v3152 = vunpack.c.h.b16 %v2645
        %v3153 = vunpack.c.l.b16 %v2646
        %v3154 = vunpack.c.h.b16 %v2646
        %v3155 = vunpack.c.l.b16 %v2647
        %v3156 = vunpack.c.l.b16 %v2648
        %v3157 = vunpack.c.h.b16 %v2648
        %v3158 = vunpack.c.l.b16 %v2649
        %v3159 = vunpack.c.h.b16 %v2649
        %v3160 = vunpack.c.l.b16 %v2650
        %v3161 = vunpack.c.h.b16 %v2650
        %v3162 = vunpack.c.l.b16 %v2651
        %v3163 = vunpack.c.h.b16 %v2651
        %v3164 = vunpack.c.l.b16 %v2652
        %v3165 = vunpack.c.l.b16 %v2653
        %v3166 = vunpack.c.h.b16 %v2653
        %v3167 = vunpack.c.l.b16 %v2654
        %v3168 = vunpack.c.h.b16 %v2654
        %v3169 = vunpack.c.l.b16 %v2655
        %v3170 = vunpack.c.h.b16 %v2655
        %v3171 = vunpack.c.l.b16 %v2656
        %v3172 = vunpack.c.h.b16 %v2656
        %v3173 = vunpack.c.l.b16 %v2657
        %v3174 = vunpack.c.l.b16 %v2658
        %v3175 = vunpack.c.h.b16 %v2658
        %v3176 = vunpack.c.l.b16 %v2659
        %v3177 = vunpack.c.h.b16 %v2659
        %v3178 = vunpack.c.l.b16 %v2660
        %v3179 = vunpack.c.h.b16 %v2660
        %v3180 = vunpack.c.l.b16 %v2661
        %v3181 = vunpack.c.h.b16 %v2661
        %v3182 = vunpack.c.l.b16 %v2662
        %v3183 = vunpack.c.l.b16 %v2663
        %v3184 = vunpack.c.h.b16 %v2663
        %v3185 = vunpack.c.l.b16 %v2664
        %v3186 = vunpack.c.h.b16 %v2664
        %v3187 = vunpack.c.l.b16 %v2665
        %v3188 = vunpack.c.h.b16 %v2665
        %v3189 = vunpack.c.l.b16 %v2666
        %v3190 = vunpack.c.h.b16 %v2666
        %v3191 = vunpack.c.l.b16 %v2667
        %v3192 = vunpack.c.l.b16 %v2668
        %v3193 = vunpack.c.h.b16 %v2668
        %v3194 = vunpack.c.l.b16 %v2669
        %v3195 = vunpack.c.h.b16 %v2669
        %v3196 = vunpack.c.l.b16 %v2670
        %v3197 = vunpack.c.h.b16 %v2670
        %v3198 = vunpack.c.l.b16 %v2671
        %v3199 = vunpack.c.h.b16 %v2671
        %v3200 = vunpack.c.l.b16 %v2672
        %v3201 = vunpack.c.l.b16 %v2673
        %v3202 = vunpack.c.h.b16 %v2673
        %v3203 = vunpack.c.l.b16 %v2674
        %v3204 = vunpack.c.h.b16 %v2674
        %v3205 = vunpack.c.l.b16 %v2675
        %v3206 = vunpack.c.h.b16 %v2675
        %v3207 = vunpack.c.l.b16 %v2676
        %v3208 = vunpack.c.h.b16 %v2676
        %v3209 = vunpack.c.l.b16 %v2677
        %v3210 = vunpack.c.l.b16 %v2678
        %v3211 = vunpack.c.h.b16 %v2678
        %v3212 = vunpack.c.l.b16 %v2679
        %v3213 = vunpack.c.h.b16 %v2679
        %v3214 = vunpack.c.l.b16 %v2680
        %v3215 = vunpack.c.h.b16 %v2680
        %v3216 = vunpack.c.l.b16 %v2681
        %v3217 = vunpack.c.h.b16 %v2681
        %v3218 = vunpack.c.l.b16 %v2682
        %v3219 = vunpack.c.l.b16 %v2683
        %v3220 = vunpack.c.h.b16 %v2683
        %v3221 = vunpack.c.l.b16 %v2684
        %v3222 = vunpack.c.h.b16 %v2684
        %v3223 = vunpack.c.l.b16 %v2685
        %v3224 = vunpack.c.h.b16 %v2685
        %v3225 = vunpack.c.l.b16 %v2686
        %v3226 = vunpack.c.h.b16 %v2686
        %v3227 = vunpack.c.l.b16 %v2687
        %v3228 = vunpack.c.l.b16 %v2688
        %v3229 = vunpack.c.h.b16 %v2688
        %v3230 = vunpack.c.l.b16 %v2689
        %v3231 = vunpack.c.h.b16 %v2689
        %v3232 = vunpack.c.l.b16 %v2690
        %v3233 = vunpack.c.h.b16 %v2690
        %v3234 = vunpack.c.l.b16 %v2691
        %v3235 = vunpack.c.h.b16 %v2691
        %v3236 = vunpack.c.l.b16 %v2692
        %v3237 = vunpack.c.l.b16 %v2693
        %v3238 = vunpack.c.h.b16 %v2693
        %v3239 = vunpack.c.l.b16 %v2694
        %v3240 = vunpack.c.h.b16 %v2694
        %v3241 = vunpack.c.l.b16 %v2695
        %v3242 = vunpack.c.h.b16 %v2695
        %v3243 = vunpack.c.l.b16 %v2696
        %v3244 = vunpack.c.h.b16 %v2696
        %v3245 = vunpack.c.l.b16 %v2697
        %v3246 = vunpack.c.l.b16 %v2698
        %v3247 = vunpack.c.h.b16 %v2698
        %v3248 = vunpack.c.l.b16 %v2699
        %v3249 = vunpack.c.h.b16 %v2699
        %v3250 = vunpack.c.l.b16 %v2700
        %v3251 = vunpack.c.h.b16 %v2700
        %v3252 = vunpack.c.l.b16 %v2701
        %v3253 = vunpack.c.h.b16 %v2701
        %v3254 = vunpack.c.l.b16 %v2702
        %v3255 = vunpack.c.l.b16 %v2703
        %v3256 = vunpack.c.h.b16 %v2703
        %v3257 = vunpack.c.l.b16 %v2704
        %v3258 = vunpack.c.h.b16 %v2704
        %v3259 = vunpack.c.l.b16 %v2705
        %v3260 = vunpack.c.h.b16 %v2705
        %v3261 = vunpack.c.l.b16 %v2706
        %v3262 = vunpack.c.h.b16 %v2706
        %v3263 = vunpack.c.l.b16 %v2707
        %v3264 = vunpack.c.l.b16 %v2708
        %v3265 = vunpack.c.h.b16 %v2708
        %v3266 = vunpack.c.l.b16 %v2709
        %v3267 = vunpack.c.h.b16 %v2709
        %v3268 = vunpack.c.l.b16 %v2710
        %v3269 = vunpack.c.h.b16 %v2710
        %v3270 = vunpack.c.l.b16 %v2711
        %v3271 = vunpack.c.h.b16 %v2711
        %v3272 = vunpack.c.l.b16 %v2712
        %v3273 = vunpack.c.l.b16 %v2713
        %v3274 = vunpack.c.h.b16 %v2713
        %v3275 = vunpack.c.l.b16 %v2714
        %v3276 = vunpack.c.h.b16 %v2714
        %v3277 = vunpack.c.l.b16 %v2715
        %v3278 = vunpack.c.h.b16 %v2715
        %v3279 = vunpack.c.l.b16 %v2716
        %v3280 = vunpack.c.h.b16 %v2716
        %v3281 = vunpack.c.l.b16 %v2717
        %v3282 = vunpack.c.l.b16 %v2718
        %v3283 = vunpack.c.h.b16 %v2718
        %v3284 = vunpack.c.l.b16 %v2719
        %v3285 = vunpack.c.h.b16 %v2719
        %v3286 = vunpack.c.l.b16 %v2720
        %v3287 = vunpack.c.h.b16 %v2720
        %v3288 = vunpack.c.l.b16 %v2721
        %v3289 = vunpack.c.h.b16 %v2721
        %v3290 = vunpack.c.l.b16 %v2722
        %v3291 = vunpack.c.l.b16 %v2723
        %v3292 = vunpack.c.h.b16 %v2723
        %v3293 = vunpack.c.l.b16 %v2724
        %v3294 = vunpack.c.h.b16 %v2724
        %v3295 = vunpack.c.l.b16 %v2725
        %v3296 = vunpack.c.h.b16 %v2725
        %v3297 = vunpack.c.l.b16 %v2726
        %v3298 = vunpack.c.h.b16 %v2726
        %v3299 = vunpack.c.l.b16 %v2727
        %v3300 = vunpack.c.l.b16 %v2728
        %v3301 = vunpack.c.h.b16 %v2728
        %v3302 = vunpack.c.l.b16 %v2729
        %v3303 = vunpack.c.h.b16 %v2729
        %v3304 = vunpack.c.l.b16 %v2730
        %v3305 = vunpack.c.h.b16 %v2730
        %v3306 = vunpack.c.l.b16 %v2731
        %v3307 = vunpack.c.h.b16 %v2731
        %v3308 = vunpack.c.l.b16 %v2732
        %v3309 = vunpack.c.l.b16 %v2733
        %v3310 = vunpack.c.h.b16 %v2733
        %v3311 = vunpack.c.l.b16 %v2734
        %v3312 = vunpack.c.h.b16 %v2734
        %v3313 = vunpack.c.l.b16 %v2735
        %v3314 = vunpack.c.h.b16 %v2735
        %v3315 = vunpack.c.l.b16 %v2736
        %v3316 = vunpack.c.h.b16 %v2736
        %v3317 = vunpack.c.l.b16 %v2737
        %v3318 = vunpack.c.l.b16 %v2738
        %v3319 = vunpack.c.h.b16 %v2738
        %v3320 = vunpack.c.l.b16 %v2739
        %v3321 = vunpack.c.h.b16 %v2739
        %v3322 = vunpack.c.l.b16 %v2740
        %v3323 = vunpack.c.h.b16 %v2740
        %v3324 = vunpack.c.l.b16 %v2741
        %v3325 = vunpack.c.h.b16 %v2741
        %v3326 = vunpack.c.l.b16 %v2742
        %v3327 = vunpack.c.l.b16 %v2743
        %v3328 = vunpack.c.h.b16 %v2743
        %v3329 = vunpack.c.l.b16 %v2744
        %v3330 = vunpack.c.h.b16 %v2744
        %v3331 = vunpack.c.l.b16 %v2745
        %v3332 = vunpack.c.h.b16 %v2745
        %v3333 = vunpack.c.l.b16 %v2746
        %v3334 = vunpack.c.h.b16 %v2746
        %v3335 = vunpack.c.l.b16 %v2747
        %v3336 = vunpack.c.l.b16 %v2748
        %v3337 = vunpack.c.h.b16 %v2748
        %v3338 = vunpack.c.l.b16 %v2749
        %v3339 = vunpack.c.h.b16 %v2749
        %v3340 = vunpack.c.l.b16 %v2750
        %v3341 = vunpack.c.h.b16 %v2750
        %v3342 = vunpack.c.l.b16 %v2751
        %v3343 = vunpack.c.h.b16 %v2751
        %v3344 = vunpack.c.l.b16 %v2752
        %v3345 = vpack.c.b16 %v3066, %v3057
        %v3346 = vpack.c.b16 %v3067, %v3058
        %v3347 = vpack.c.b16 %v3068, %v3059
        %v3348 = vpack.c.b16 %v3069, %v3060
        %v3349 = vpack.c.b16 %v3070, %v3061
        %v3350 = vpack.c.b16 %v3071, %v3062
        %v3351 = vpack.c.b16 %v3072, %v3063
        %v3352 = vpack.c.b16 %v3073, %v3064
        %v3353 = vpack.c.b16 %v3074, %v3065
        %v3354 = vpack.c.b16 %v3084, %v3075
        %v3355 = vpack.c.b16 %v3085, %v3076
        %v3356 = vpack.c.b16 %v3086, %v3077
        %v3357 = vpack.c.b16 %v3087, %v3078
        %v3358 = vpack.c.b16 %v3088, %v3079
        %v3359 = vpack.c.b16 %v3089, %v3080
        %v3360 = vpack.c.b16 %v3090, %v3081
        %v3361 = vpack.c.b16 %v3091, %v3082
        %v3362 = vpack.c.b16 %v3092, %v3083
        %v3363 = vpack.c.b16 %v3102, %v3093
        %v3364 = vpack.c.b16 %v3103, %v3094
        %v3365 = vpack.c.b16 %v3104, %v3095
        %v3366 = vpack.c.b16 %v3105, %v3096
        %v3367 = vpack.c.b16 %v3106, %v3097
        %v3368 = vpack.c.b16 %v3107, %v3098
        %v3369 = vpack.c.b16 %v3108, %v3099
        %v3370 = vpack.c.b16 %v3109, %v3100
        %v3371 = vpack.c.b16 %v3110, %v3101
        %v3372 = vpack.c.b16 %v3120, %v3111
        %v3373 = vpack.c.b16 %v3121, %v3112
        %v3374 = vpack.c.b16 %v3122, %v3113
        %v3375 = vpack.c.b16 %v3123, %v3114
        %v3376 = vpack.c.b16 %v3124, %v3115
        %v3377 = vpack.c.b16 %v3125, %v3116
        %v3378 = vpack.c.b16 %v3126, %v3117
        %v3379 = vpack.c.b16 %v3127, %v3118
        %v3380 = vpack.c.b16 %v3128, %v3119
        %v3381 = vpack.c.b16 %v3138, %v3129
        %v3382 = vpack.c.b16 %v3139, %v3130
        %v3383 = vpack.c.b16 %v3140, %v3131
        %v3384 = vpack.c.b16 %v3141, %v3132
        %v3385 = vpack.c.b16 %v3142, %v3133
        %v3386 = vpack.c.b16 %v3143, %v3134
        %v3387 = vpack.c.b16 %v3144, %v3135
        %v3388 = vpack.c.b16 %v3145, %v3136
        %v3389 = vpack.c.b16 %v3146, %v3137
        %v3390 = vpack.c.b16 %v3156, %v3147
        %v3391 = vpack.c.b16 %v3157, %v3148
        %v3392 = vpack.c.b16 %v3158, %v3149
        %v3393 = vpack.c.b16 %v3159, %v3150
        %v3394 = vpack.c.b16 %v3160, %v3151
        %v3395 = vpack.c.b16 %v3161, %v3152
        %v3396 = vpack.c.b16 %v3162, %v3153
        %v3397 = vpack.c.b16 %v3163, %v3154
        %v3398 = vpack.c.b16 %v3164, %v3155
        %v3399 = vpack.c.b16 %v3174, %v3165
        %v3400 = vpack.c.b16 %v3175, %v3166
        %v3401 = vpack.c.b16 %v3176, %v3167
        %v3402 = vpack.c.b16 %v3177, %v3168
        %v3403 = vpack.c.b16 %v3178, %v3169
        %v3404 = vpack.c.b16 %v3179, %v3170
        %v3405 = vpack.c.b16 %v3180, %v3171
        %v3406 = vpack.c.b16 %v3181, %v3172
        %v3407 = vpack.c.b16 %v3182, %v3173
        %v3408 = vpack.c.b16 %v3192, %v3183
        %v3409 = vpack.c.b16 %v3193, %v3184
        %v3410 = vpack.c.b16 %v3194, %v3185
        %v3411 = vpack.c.b16 %v3195, %v3186
        %v3412 = vpack.c.b16 %v3196, %v3187
        %v3413 = vpack.c.b16 %v3197, %v3188
        %v3414 = vpack.c.b16 %v3198, %v3189
        %v3415 = vpack.c.b16 %v3199, %v3190
        %v3416 = vpack.c.b16 %v3200, %v3191
        %v3417 = vpack.c.b16 %v3210, %v3201
        %v3418 = vpack.c.b16 %v3211, %v3202
        %v3419 = vpack.c.b16 %v3212, %v3203
        %v3420 = vpack.c.b16 %v3213, %v3204
        %v3421 = vpack.c.b16 %v3214, %v3205
        %v3422 = vpack.c.b16 %v3215, %v3206
        %v3423 = vpack.c.b16 %v3216, %v3207
        %v3424 = vpack.c.b16 %v3217, %v3208
        %v3425 = vpack.c.b16 %v3218, %v3209
        %v3426 = vpack.c.b16 %v3228, %v3219
        %v3427 = vpack.c.b16 %v3229, %v3220
        %v3428 = vpack.c.b16 %v3230, %v3221
        %v3429 = vpack.c.b16 %v3231, %v3222
        %v3430 = vpack.c.b16 %v3232, %v3223
        %v3431 = vpack.c.b16 %v3233, %v3224
        %v3432 = vpack.c.b16 %v3234, %v3225
        %v3433 = vpack.c.b16 %v3235, %v3226
        %v3434 = vpack.c.b16 %v3236, %v3227
        %v3435 = vpack.c.b16 %v3246, %v3237
        %v3436 = vpack.c.b16 %v3247, %v3238
        %v3437 = vpack.c.b16 %v3248, %v3239
        %v3438 = vpack.c.b16 %v3249, %v3240
        %v3439 = vpack.c.b16 %v3250, %v3241
        %v3440 = vpack.c.b16 %v3251, %v3242
        %v3441 = vpack.c.b16 %v3252, %v3243
        %v3442 = vpack.c.b16 %v3253, %v3244
        %v3443 = vpack.c.b16 %v3254, %v3245
        %v3444 = vpack.c.b16 %v3264, %v3255
        %v3445 = vpack.c.b16 %v3265, %v3256
        %v3446 = vpack.c.b16 %v3266, %v3257
        %v3447 = vpack.c.b16 %v3267, %v3258
        %v3448 = vpack.c.b16 %v3268, %v3259
        %v3449 = vpack.c.b16 %v3269, %v3260
        %v3450 = vpack.c.b16 %v3270, %v3261
        %v3451 = vpack.c.b16 %v3271, %v3262
        %v3452 = vpack.c.b16 %v3272, %v3263
        %v3453 = vpack.c.b16 %v3282, %v3273
        %v3454 = vpack.c.b16 %v3283, %v3274
        %v3455 = vpack.c.b16 %v3284, %v3275
        %v3456 = vpack.c.b16 %v3285, %v3276
        %v3457 = vpack.c.b16 %v3286, %v3277
        %v3458 = vpack.c.b16 %v3287, %v3278
        %v3459 = vpack.c.b16 %v3288, %v3279
        %v3460 = vpack.c.b16 %v3289, %v3280
        %v3461 = vpack.c.b16 %v3290, %v3281
        %v3462 = vpack.c.b16 %v3300, %v3291
        %v3463 = vpack.c.b16 %v3301, %v3292
        %v3464 = vpack.c.b16 %v3302, %v3293
        %v3465 = vpack.c.b16 %v3303, %v3294
        %v3466 = vpack.c.b16 %v3304, %v3295
        %v3467 = vpack.c.b16 %v3305, %v3296
        %v3468 = vpack.c.b16 %v3306, %v3297
        %v3469 = vpack.c.b16 %v3307, %v3298
        %v3470 = vpack.c.b16 %v3308, %v3299
        %v3471 = vpack.c.b16 %v3318, %v3309
        %v3472 = vpack.c.b16 %v3319, %v3310
        %v3473 = vpack.c.b16 %v3320, %v3311
        %v3474 = vpack.c.b16 %v3321, %v3312
        %v3475 = vpack.c.b16 %v3322, %v3313
        %v3476 = vpack.c.b16 %v3323, %v3314
        %v3477 = vpack.c.b16 %v3324, %v3315
        %v3478 = vpack.c.b16 %v3325, %v3316
        %v3479 = vpack.c.b16 %v3326, %v3317
        %v3480 = vpack.c.b16 %v3336, %v3327
        %v3481 = vpack.c.b16 %v3337, %v3328
        %v3482 = vpack.c.b16 %v3338, %v3329
        %v3483 = vpack.c.b16 %v3339, %v3330
        %v3484 = vpack.c.b16 %v3340, %v3331
        %v3485 = vpack.c.b16 %v3341, %v3332
        %v3486 = vpack.c.b16 %v3342, %v3333
        %v3487 = vpack.c.b16 %v3343, %v3334
        %v3488 = vpack.c.b16 %v3344, %v3335
        %v3777 = vunpack.c.l.b16 %v2753
        %v3778 = vunpack.c.l.b16 %v2754
        %v3779 = vunpack.c.l.b16 %v2755
        %v3780 = vunpack.c.l.b16 %v2756
        %v3781 = vunpack.c.l.b16 %v2757
        %v3782 = vunpack.c.l.b16 %v2758
        %v3783 = vunpack.c.l.b16 %v2759
        %v3784 = vunpack.c.l.b16 %v2760
        %v3785 = vunpack.c.l.b16 %v2761
        %v3786 = vunpack.c.l.b16 %v2762
        %v3787 = vunpack.c.l.b16 %v2763
        %v3788 = vunpack.c.l.b16 %v2764
        %v3789 = vunpack.c.l.b16 %v2765
        %v3790 = vunpack.c.l.b16 %v2766
        %v3791 = vunpack.c.l.b16 %v2767
        %v3792 = vunpack.c.l.b16 %v2768
        %v3793 = vunpack.c.l.b16 %v2769
        %v3794 = vunpack.c.l.b16 %v2770
        %v3795 = vunpack.c.l.b16 %v2771
        %v3796 = vunpack.c.l.b16 %v2772
        %v3797 = vunpack.c.l.b16 %v2773
        %v3798 = vunpack.c.l.b16 %v2774
        %v3799 = vunpack.c.l.b16 %v2775
        %v3800 = vunpack.c.l.b16 %v2776
        %v3801 = vunpack.c.l.b16 %v2777
        %v3802 = vunpack.c.l.b16 %v2778
        %v3803 = vunpack.c.l.b16 %v2779
        %v3804 = vunpack.c.l.b16 %v2780
        %v3805 = vunpack.c.l.b16 %v2781
        %v3806 = vunpack.c.l.b16 %v2782
        %v3807 = vunpack.c.l.b16 %v2783
        %v3808 = vunpack.c.l.b16 %v2784
        %v3809 = vunpack.c.l.b16 %v2785
        %v3810 = vunpack.c.l.b16 %v2786
        %v3811 = vunpack.c.l.b16 %v2787
        %v3812 = vunpack.c.l.b16 %v2788
        %v3813 = vunpack.c.l.b16 %v2789
        %v3814 = vunpack.c.l.b16 %v2790
        %v3815 = vunpack.c.l.b16 %v2791
        %v3816 = vunpack.c.l.b16 %v2792
        %v3817 = vunpack.c.l.b16 %v2793
        %v3818 = vunpack.c.l.b16 %v2794
        %v3819 = vunpack.c.l.b16 %v2795
        %v3820 = vunpack.c.l.b16 %v2796
        %v3821 = vunpack.c.l.b16 %v2797
        %v3822 = vunpack.c.l.b16 %v2798
        %v3823 = vunpack.c.l.b16 %v2799
        %v3824 = vunpack.c.l.b16 %v2800
        %v3825 = vunpack.c.l.b16 %v2801
        %v3826 = vunpack.c.l.b16 %v2802
        %v3827 = vunpack.c.l.b16 %v2803
        %v3828 = vunpack.c.l.b16 %v2804
        %v3829 = vunpack.c.l.b16 %v2805
        %v3830 = vunpack.c.l.b16 %v2806
        %v3831 = vunpack.c.l.b16 %v2807
        %v3832 = vunpack.c.l.b16 %v2808
        %v3833 = vunpack.c.l.b16 %v2809
        %v3834 = vunpack.c.l.b16 %v2810
        %v3835 = vunpack.c.l.b16 %v2811
        %v3836 = vunpack.c.l.b16 %v2812
        %v3837 = vunpack.c.l.b16 %v2813
        %v3838 = vunpack.c.l.b16 %v2814
        %v3839 = vunpack.c.l.b16 %v2815
        %v3840 = vunpack.c.l.b16 %v2816
        %v3841 = vunpack.c.l.b16 %v2817
        %v3842 = vunpack.c.l.b16 %v2818
        %v3843 = vunpack.c.l.b16 %v2819
        %v3844 = vunpack.c.l.b16 %v2820
        %v3845 = vunpack.c.l.b16 %v2821
        %v3846 = vunpack.c.l.b16 %v2822
        %v3847 = vunpack.c.l.b16 %v2823
        %v3848 = vunpack.c.l.b16 %v2824
        %v3849 = vunpack.c.l.b16 %v2825
        %v3850 = vunpack.c.l.b16 %v2826
        %v3851 = vunpack.c.l.b16 %v2827
        %v3852 = vunpack.c.l.b16 %v2828
        %v3853 = vunpack.c.l.b16 %v2829
        %v3854 = vunpack.c.l.b16 %v2830
        %v3855 = vunpack.c.l.b16 %v2831
        %v3856 = vunpack.c.l.b16 %v2832
        %v3857 = vunpack.c.l.b16 %v2833
        %v3858 = vunpack.c.l.b16 %v2834
        %v3859 = vunpack.c.l.b16 %v2835
        %v3860 = vunpack.c.l.b16 %v2836
        %v3861 = vunpack.c.l.b16 %v2837
        %v3862 = vunpack.c.l.b16 %v2838
        %v3863 = vunpack.c.l.b16 %v2839
        %v3864 = vunpack.c.l.b16 %v2840
        %v3865 = vunpack.c.l.b16 %v2841
        %v3866 = vunpack.c.l.b16 %v2842
        %v3867 = vunpack.c.l.b16 %v2843
        %v3868 = vunpack.c.l.b16 %v2844
        %v3869 = vunpack.c.l.b16 %v2845
        %v3870 = vunpack.c.l.b16 %v2846
        %v3871 = vunpack.c.l.b16 %v2847
        %v3872 = vunpack.c.l.b16 %v2848
        %v3873 = vunpack.c.l.b16 %v2849
        %v3874 = vunpack.c.l.b16 %v2850
        %v3875 = vunpack.c.l.b16 %v2851
        %v3876 = vunpack.c.l.b16 %v2852
        %v3877 = vunpack.c.l.b16 %v2853
        %v3878 = vunpack.c.l.b16 %v2854
        %v3879 = vunpack.c.l.b16 %v2855
        %v3880 = vunpack.c.l.b16 %v2856
        %v3881 = vunpack.c.l.b16 %v2857
        %v3882 = vunpack.c.l.b16 %v2858
        %v3883 = vunpack.c.l.b16 %v2859
        %v3884 = vunpack.c.l.b16 %v2860
        %v3885 = vunpack.c.l.b16 %v2861
        %v3886 = vunpack.c.l.b16 %v2862
        %v3887 = vunpack.c.l.b16 %v2863
        %v3888 = vunpack.c.l.b16 %v2864
        %v3889 = vunpack.c.l.b16 %v2865
        %v3890 = vunpack.c.l.b16 %v2866
        %v3891 = vunpack.c.l.b16 %v2867
        %v3892 = vunpack.c.l.b16 %v2868
        %v3893 = vunpack.c.l.b16 %v2869
        %v3894 = vunpack.c.l.b16 %v2870
        %v3895 = vunpack.c.l.b16 %v2871
        %v3896 = vunpack.c.l.b16 %v2872
        %v3897 = vunpack.c.l.b16 %v2873
        %v3898 = vunpack.c.l.b16 %v2874
        %v3899 = vunpack.c.l.b16 %v2875
        %v3900 = vunpack.c.l.b16 %v2876
        %v3901 = vunpack.c.l.b16 %v2877
        %v3902 = vunpack.c.l.b16 %v2878
        %v3903 = vunpack.c.l.b16 %v2879
        %v3904 = vunpack.c.l.b16 %v2880
        %v3905 = vunpack.c.l.b16 %v2881
        %v3906 = vunpack.c.l.b16 %v2882
        %v3907 = vunpack.c.l.b16 %v2883
        %v3908 = vunpack.c.l.b16 %v2884
        %v3909 = vunpack.c.l.b16 %v2885
        %v3910 = vunpack.c.l.b16 %v2886
        %v3911 = vunpack.c.l.b16 %v2887
        %v3912 = vunpack.c.l.b16 %v2888
        %v3913 = vunpack.c.l.b16 %v2889
        %v3914 = vunpack.c.l.b16 %v2890
        %v3915 = vunpack.c.l.b16 %v2891
        %v3916 = vunpack.c.l.b16 %v2892
        %v3917 = vunpack.c.l.b16 %v2893
        %v3918 = vunpack.c.l.b16 %v2894
        %v3919 = vunpack.c.l.b16 %v2895
        %v3920 = vunpack.c.l.b16 %v2896
        %v3921 = vpack.c.b16 %v3778, %v3777
        %v3922 = vpack.c.b16 %v3780, %v3779
        %v3923 = vpack.c.b16 %v3782, %v3781
        %v3924 = vpack.c.b16 %v3784, %v3783
        %v3925 = vpack.c.b16 %v3786, %v3785
        %v3926 = vpack.c.b16 %v3788, %v3787
        %v3927 = vpack.c.b16 %v3790, %v3789
        %v3928 = vpack.c.b16 %v3792, %v3791
        %v3929 = vpack.c.b16 %v3794, %v3793
        %v3930 = vpack.c.b16 %v3796, %v3795
        %v3931 = vpack.c.b16 %v3798, %v3797
        %v3932 = vpack.c.b16 %v3800, %v3799
        %v3933 = vpack.c.b16 %v3802, %v3801
        %v3934 = vpack.c.b16 %v3804, %v3803
        %v3935 = vpack.c.b16 %v3806, %v3805
        %v3936 = vpack.c.b16 %v3808, %v3807
        %v3937 = vpack.c.b16 %v3810, %v3809
        %v3938 = vpack.c.b16 %v3812, %v3811
        %v3939 = vpack.c.b16 %v3814, %v3813
        %v3940 = vpack.c.b16 %v3816, %v3815
        %v3941 = vpack.c.b16 %v3818, %v3817
        %v3942 = vpack.c.b16 %v3820, %v3819
        %v3943 = vpack.c.b16 %v3822, %v3821
        %v3944 = vpack.c.b16 %v3824, %v3823
        %v3945 = vpack.c.b16 %v3826, %v3825
        %v3946 = vpack.c.b16 %v3828, %v3827
        %v3947 = vpack.c.b16 %v3830, %v3829
        %v3948 = vpack.c.b16 %v3832, %v3831
        %v3949 = vpack.c.b16 %v3834, %v3833
        %v3950 = vpack.c.b16 %v3836, %v3835
        %v3951 = vpack.c.b16 %v3838, %v3837
        %v3952 = vpack.c.b16 %v3840, %v3839
        %v3953 = vpack.c.b16 %v3842, %v3841
        %v3954 = vpack.c.b16 %v3844, %v3843
        %v3955 = vpack.c.b16 %v3846, %v3845
        %v3956 = vpack.c.b16 %v3848, %v3847
        %v3957 = vpack.c.b16 %v3850, %v3849
        %v3958 = vpack.c.b16 %v3852, %v3851
        %v3959 = vpack.c.b16 %v3854, %v3853
        %v3960 = vpack.c.b16 %v3856, %v3855
        %v3961 = vpack.c.b16 %v3858, %v3857
        %v3962 = vpack.c.b16 %v3860, %v3859
        %v3963 = vpack.c.b16 %v3862, %v3861
        %v3964 = vpack.c.b16 %v3864, %v3863
        %v3965 = vpack.c.b16 %v3866, %v3865
        %v3966 = vpack.c.b16 %v3868, %v3867
        %v3967 = vpack.c.b16 %v3870, %v3869
        %v3968 = vpack.c.b16 %v3872, %v3871
        %v3969 = vpack.c.b16 %v3874, %v3873
        %v3970 = vpack.c.b16 %v3876, %v3875
        %v3971 = vpack.c.b16 %v3878, %v3877
        %v3972 = vpack.c.b16 %v3880, %v3879
        %v3973 = vpack.c.b16 %v3882, %v3881
        %v3974 = vpack.c.b16 %v3884, %v3883
        %v3975 = vpack.c.b16 %v3886, %v3885
        %v3976 = vpack.c.b16 %v3888, %v3887
        %v3977 = vpack.c.b16 %v3890, %v3889
        %v3978 = vpack.c.b16 %v3892, %v3891
        %v3979 = vpack.c.b16 %v3894, %v3893
        %v3980 = vpack.c.b16 %v3896, %v3895
        %v3981 = vpack.c.b16 %v3898, %v3897
        %v3982 = vpack.c.b16 %v3900, %v3899
        %v3983 = vpack.c.b16 %v3902, %v3901
        %v3984 = vpack.c.b16 %v3904, %v3903
        %v3985 = vpack.c.b16 %v3906, %v3905
        %v3986 = vpack.c.b16 %v3908, %v3907
        %v3987 = vpack.c.b16 %v3910, %v3909
        %v3988 = vpack.c.b16 %v3912, %v3911
        %v3989 = vpack.c.b16 %v3914, %v3913
        %v3990 = vpack.c.b16 %v3916, %v3915
        %v3991 = vpack.c.b16 %v3918, %v3917
        %v3992 = vpack.c.b16 %v3920, %v3919
        %4065 = vmatprep.subr.bf16.mxu0 0
        %4066 = vmatpush1.bf16.msra.mxu0 %v3928
        %4067 = vmatprep.subr.bf16.mxu0 0
        %4068 = vmatpush1.bf16.msra.mxu0 %v3927
        %4069 = vmatprep.subr.bf16.mxu0 0
        %4070 = vmatpush1.bf16.msra.mxu0 %v3926
        %4071 = vmatprep.subr.bf16.mxu0 0
        %4072 = vmatpush1.bf16.msra.mxu0 %v3925
        %4073 = vmatprep.subr.bf16.mxu0 0
        %4074 = vmatpush1.bf16.msra.mxu0 %v3924
        %4075 = vmatprep.subr.bf16.mxu0 0
        %4076 = vmatpush1.bf16.msra.mxu0 %v3923
        %4077 = vmatprep.subr.bf16.mxu0 0
        %4078 = vmatpush1.bf16.msra.mxu0 %v3922
        %4079 = vmatprep.subr.bf16.mxu0 0
        %4080 = vmatpush1.bf16.msra.mxu0 %v3921
        %4081 = vmatprep.subr.bf16.mxu0 0
        %4082 = vmatpush2.bf16.msra.mxu0 %v3936
        %4083 = vmatprep.subr.bf16.mxu0 0
        %4084 = vmatpush2.bf16.msra.mxu0 %v3935
        %4085 = vmatprep.subr.bf16.mxu0 0
        %4086 = vmatpush2.bf16.msra.mxu0 %v3934
        %4087 = vmatprep.subr.bf16.mxu0 0
        %4088 = vmatpush2.bf16.msra.mxu0 %v3933
        %4089 = vmatprep.subr.bf16.mxu0 0
        %4090 = vmatpush2.bf16.msra.mxu0 %v3932
        %4091 = vmatprep.subr.bf16.mxu0 0
        %4092 = vmatpush2.bf16.msra.mxu0 %v3931
        %4093 = vmatprep.subr.bf16.mxu0 0
        %4094 = vmatpush2.bf16.msra.mxu0 %v3930
        %4095 = vmatprep.subr.bf16.mxu0 0
        %4096 = vmatpush2.bf16.msra.mxu0 %v3929
        %4097 = vmatprep.mubr.bf16.mxu0 %v3346
        %4098 = vmatmul.mubr.bf16.gmra.mxu0 %v3345
        %v4099 = vpop.f32.mrf.mxu0
        %v4100 = vadd.f32 0.0, %v4099
        %v4101 = vpop.f32.mrf.mxu0
        %v4102 = vpop.f32.mrf.mxu0
        %v4103 = vadd.f32 0.0, %v4102
        %v4104 = vpop.f32.mrf.mxu0
        %4105 = vmatprep.mubr.bf16.mxu0 %v3355
        %4106 = vmatmul.mubr.bf16.gmra.mxu0 %v3354
        %v4107 = vpop.f32.mrf.mxu0
        %v4108 = vadd.f32 0.0, %v4107
        %v4109 = vpop.f32.mrf.mxu0
        %v4110 = vpop.f32.mrf.mxu0
        %v4111 = vadd.f32 0.0, %v4110
        %v4112 = vpop.f32.mrf.mxu0
        %4113 = vmatprep.mubr.bf16.mxu0 %v3364
        %4114 = vmatmul.mubr.bf16.gmra.mxu0 %v3363
        %v4115 = vpop.f32.mrf.mxu0
        %v4116 = vadd.f32 0.0, %v4115
        %v4117 = vpop.f32.mrf.mxu0
        %v4118 = vpop.f32.mrf.mxu0
        %v4119 = vadd.f32 0.0, %v4118
        %v4120 = vpop.f32.mrf.mxu0
        %4121 = vmatprep.mubr.bf16.mxu0 %v3373
        %4122 = vmatmul.mubr.bf16.gmra.mxu0 %v3372
        %v4123 = vpop.f32.mrf.mxu0
        %v4124 = vadd.f32 0.0, %v4123
        %v4125 = vpop.f32.mrf.mxu0
        %v4126 = vpop.f32.mrf.mxu0
        %v4127 = vadd.f32 0.0, %v4126
        %v4128 = vpop.f32.mrf.mxu0
        %4129 = vmatprep.mubr.bf16.mxu0 %v3382
        %4130 = vmatmul.mubr.bf16.gmra.mxu0 %v3381
        %v4131 = vpop.f32.mrf.mxu0
        %v4132 = vadd.f32 0.0, %v4131
        %v4133 = vpop.f32.mrf.mxu0
        %v4134 = vpop.f32.mrf.mxu0
        %v4135 = vadd.f32 0.0, %v4134
        %v4136 = vpop.f32.mrf.mxu0
        %4137 = vmatprep.mubr.bf16.mxu0 %v3391
        %4138 = vmatmul.mubr.bf16.gmra.mxu0 %v3390
        %v4139 = vpop.f32.mrf.mxu0
        %v4140 = vadd.f32 0.0, %v4139
        %v4141 = vpop.f32.mrf.mxu0
        %v4142 = vpop.f32.mrf.mxu0
        %v4143 = vadd.f32 0.0, %v4142
        %v4144 = vpop.f32.mrf.mxu0
        %4145 = vmatprep.mubr.bf16.mxu0 %v3400
        %4146 = vmatmul.mubr.bf16.gmra.mxu0 %v3399
        %v4147 = vpop.f32.mrf.mxu0
        %v4148 = vadd.f32 0.0, %v4147
        %v4149 = vpop.f32.mrf.mxu0
        %v4150 = vpop.f32.mrf.mxu0
        %v4151 = vadd.f32 0.0, %v4150
        %v4152 = vpop.f32.mrf.mxu0
        %4153 = vmatprep.mubr.bf16.mxu0 %v3409
        %4154 = vmatmul.mubr.bf16.gmra.mxu0 %v3408
        %v4155 = vpop.f32.mrf.mxu0
        %v4156 = vadd.f32 0.0, %v4155
        %v4157 = vpop.f32.mrf.mxu0
        %v4158 = vpop.f32.mrf.mxu0
        %v4159 = vadd.f32 0.0, %v4158
        %v4160 = vpop.f32.mrf.mxu0
        %4161 = vmatprep.mubr.bf16.mxu0 %v3418
        %4162 = vmatmul.mubr.bf16.gmra.mxu0 %v3417
        %v4163 = vpop.f32.mrf.mxu0
        %v4164 = vadd.f32 0.0, %v4163
        %v4165 = vpop.f32.mrf.mxu0
        %v4166 = vpop.f32.mrf.mxu0
        %v4167 = vadd.f32 0.0, %v4166
        %v4168 = vpop.f32.mrf.mxu0
        %4169 = vmatprep.mubr.bf16.mxu0 %v3427
        %4170 = vmatmul.mubr.bf16.gmra.mxu0 %v3426
        %v4171 = vpop.f32.mrf.mxu0
        %v4172 = vadd.f32 0.0, %v4171
        %v4173 = vpop.f32.mrf.mxu0
        %v4174 = vpop.f32.mrf.mxu0
        %v4175 = vadd.f32 0.0, %v4174
        %v4176 = vpop.f32.mrf.mxu0
        %4177 = vmatprep.mubr.bf16.mxu0 %v3436
        %4178 = vmatmul.mubr.bf16.gmra.mxu0 %v3435
        %v4179 = vpop.f32.mrf.mxu0
        %v4180 = vadd.f32 0.0, %v4179
        %v4181 = vpop.f32.mrf.mxu0
        %v4182 = vpop.f32.mrf.mxu0
        %v4183 = vadd.f32 0.0, %v4182
        %v4184 = vpop.f32.mrf.mxu0
        %4185 = vmatprep.mubr.bf16.mxu0 %v3445
        %4186 = vmatmul.mubr.bf16.gmra.mxu0 %v3444
        %v4187 = vpop.f32.mrf.mxu0
        %v4188 = vadd.f32 0.0, %v4187
        %v4189 = vpop.f32.mrf.mxu0
        %v4190 = vpop.f32.mrf.mxu0
        %v4191 = vadd.f32 0.0, %v4190
        %v4192 = vpop.f32.mrf.mxu0
        %4193 = vmatprep.mubr.bf16.mxu0 %v3454
        %4194 = vmatmul.mubr.bf16.gmra.mxu0 %v3453
        %v4195 = vpop.f32.mrf.mxu0
        %v4196 = vadd.f32 0.0, %v4195
        %v4197 = vpop.f32.mrf.mxu0
        %v4198 = vpop.f32.mrf.mxu0
        %v4199 = vadd.f32 0.0, %v4198
        %v4200 = vpop.f32.mrf.mxu0
        %4201 = vmatprep.mubr.bf16.mxu0 %v3463
        %4202 = vmatmul.mubr.bf16.gmra.mxu0 %v3462
        %v4203 = vpop.f32.mrf.mxu0
        %v4204 = vadd.f32 0.0, %v4203
        %v4205 = vpop.f32.mrf.mxu0
        %v4206 = vpop.f32.mrf.mxu0
        %v4207 = vadd.f32 0.0, %v4206
        %v4208 = vpop.f32.mrf.mxu0
        %4209 = vmatprep.mubr.bf16.mxu0 %v3472
        %4210 = vmatmul.mubr.bf16.gmra.mxu0 %v3471
        %v4211 = vpop.f32.mrf.mxu0
        %v4212 = vadd.f32 0.0, %v4211
        %v4213 = vpop.f32.mrf.mxu0
        %v4214 = vpop.f32.mrf.mxu0
        %v4215 = vadd.f32 0.0, %v4214
        %v4216 = vpop.f32.mrf.mxu0
        %4217 = vmatprep.mubr.bf16.mxu0 %v3481
        %4218 = vmatmul.mubr.bf16.gmra.mxu0 %v3480
        %v4219 = vpop.f32.mrf.mxu0
        %v4220 = vadd.f32 0.0, %v4219
        %v4221 = vpop.f32.mrf.mxu0
        %v4222 = vpop.f32.mrf.mxu0
        %v4223 = vadd.f32 0.0, %v4222
        %v4224 = vpop.f32.mrf.mxu0
        %4225 = vdwg.mxu0
        %4226 = vmatprep.subr.bf16.mxu0 0
        %4227 = vmatpush1.bf16.msra.mxu0 %v3944
        %4228 = vmatprep.subr.bf16.mxu0 0
        %4229 = vmatpush1.bf16.msra.mxu0 %v3943
        %4230 = vmatprep.subr.bf16.mxu0 0
        %4231 = vmatpush1.bf16.msra.mxu0 %v3942
        %4232 = vmatprep.subr.bf16.mxu0 0
        %4233 = vmatpush1.bf16.msra.mxu0 %v3941
        %4234 = vmatprep.subr.bf16.mxu0 0
        %4235 = vmatpush1.bf16.msra.mxu0 %v3940
        %4236 = vmatprep.subr.bf16.mxu0 0
        %4237 = vmatpush1.bf16.msra.mxu0 %v3939
        %4238 = vmatprep.subr.bf16.mxu0 0
        %4239 = vmatpush1.bf16.msra.mxu0 %v3938
        %4240 = vmatprep.subr.bf16.mxu0 0
        %4241 = vmatpush1.bf16.msra.mxu0 %v3937
        %4242 = vmatprep.subr.bf16.mxu0 0
        %4243 = vmatpush2.bf16.msra.mxu0 %v3952
        %4244 = vmatprep.subr.bf16.mxu0 0
        %4245 = vmatpush2.bf16.msra.mxu0 %v3951
        %4246 = vmatprep.subr.bf16.mxu0 0
        %4247 = vmatpush2.bf16.msra.mxu0 %v3950
        %4248 = vmatprep.subr.bf16.mxu0 0
        %4249 = vmatpush2.bf16.msra.mxu0 %v3949
        %4250 = vmatprep.subr.bf16.mxu0 0
        %4251 = vmatpush2.bf16.msra.mxu0 %v3948
        %4252 = vmatprep.subr.bf16.mxu0 0
        %4253 = vmatpush2.bf16.msra.mxu0 %v3947
        %4254 = vmatprep.subr.bf16.mxu0 0
        %4255 = vmatpush2.bf16.msra.mxu0 %v3946
        %4256 = vmatprep.subr.bf16.mxu0 0
        %4257 = vmatpush2.bf16.msra.mxu0 %v3945
        %4258 = vmatprep.mubr.bf16.mxu0 %v3348
        %4259 = vmatmul.mubr.bf16.gmra.mxu0 %v3347
        %v4260 = vpop.f32.mrf.mxu0
        %v4261 = vadd.f32 %v4100, %v4260
        %v4262 = vpop.f32.mrf.mxu0
        %v4263 = vpop.f32.mrf.mxu0
        %v4264 = vadd.f32 %v4103, %v4263
        %v4265 = vpop.f32.mrf.mxu0
        %4266 = vmatprep.mubr.bf16.mxu0 %v3357
        %4267 = vmatmul.mubr.bf16.gmra.mxu0 %v3356
        %v4268 = vpop.f32.mrf.mxu0
        %v4269 = vadd.f32 %v4108, %v4268
        %v4270 = vpop.f32.mrf.mxu0
        %v4271 = vpop.f32.mrf.mxu0
        %v4272 = vadd.f32 %v4111, %v4271
        %v4273 = vpop.f32.mrf.mxu0
        %4274 = vmatprep.mubr.bf16.mxu0 %v3366
        %4275 = vmatmul.mubr.bf16.gmra.mxu0 %v3365
        %v4276 = vpop.f32.mrf.mxu0
        %v4277 = vadd.f32 %v4116, %v4276
        %v4278 = vpop.f32.mrf.mxu0
        %v4279 = vpop.f32.mrf.mxu0
        %v4280 = vadd.f32 %v4119, %v4279
        %v4281 = vpop.f32.mrf.mxu0
        %4282 = vmatprep.mubr.bf16.mxu0 %v3375
        %4283 = vmatmul.mubr.bf16.gmra.mxu0 %v3374
        %v4284 = vpop.f32.mrf.mxu0
        %v4285 = vadd.f32 %v4124, %v4284
        %v4286 = vpop.f32.mrf.mxu0
        %v4287 = vpop.f32.mrf.mxu0
        %v4288 = vadd.f32 %v4127, %v4287
        %v4289 = vpop.f32.mrf.mxu0
        %4290 = vmatprep.mubr.bf16.mxu0 %v3384
        %4291 = vmatmul.mubr.bf16.gmra.mxu0 %v3383
        %v4292 = vpop.f32.mrf.mxu0
        %v4293 = vadd.f32 %v4132, %v4292
        %v4294 = vpop.f32.mrf.mxu0
        %v4295 = vpop.f32.mrf.mxu0
        %v4296 = vadd.f32 %v4135, %v4295
        %v4297 = vpop.f32.mrf.mxu0
        %4298 = vmatprep.mubr.bf16.mxu0 %v3393
        %4299 = vmatmul.mubr.bf16.gmra.mxu0 %v3392
        %v4300 = vpop.f32.mrf.mxu0
        %v4301 = vadd.f32 %v4140, %v4300
        %v4302 = vpop.f32.mrf.mxu0
        %v4303 = vpop.f32.mrf.mxu0
        %v4304 = vadd.f32 %v4143, %v4303
        %v4305 = vpop.f32.mrf.mxu0
        %4306 = vmatprep.mubr.bf16.mxu0 %v3402
        %4307 = vmatmul.mubr.bf16.gmra.mxu0 %v3401
        %v4308 = vpop.f32.mrf.mxu0
        %v4309 = vadd.f32 %v4148, %v4308
        %v4310 = vpop.f32.mrf.mxu0
        %v4311 = vpop.f32.mrf.mxu0
        %v4312 = vadd.f32 %v4151, %v4311
        %v4313 = vpop.f32.mrf.mxu0
        %4314 = vmatprep.mubr.bf16.mxu0 %v3411
        %4315 = vmatmul.mubr.bf16.gmra.mxu0 %v3410
        %v4316 = vpop.f32.mrf.mxu0
        %v4317 = vadd.f32 %v4156, %v4316
        %v4318 = vpop.f32.mrf.mxu0
        %v4319 = vpop.f32.mrf.mxu0
        %v4320 = vadd.f32 %v4159, %v4319
        %v4321 = vpop.f32.mrf.mxu0
        %4322 = vmatprep.mubr.bf16.mxu0 %v3420
        %4323 = vmatmul.mubr.bf16.gmra.mxu0 %v3419
        %v4324 = vpop.f32.mrf.mxu0
        %v4325 = vadd.f32 %v4164, %v4324
        %v4326 = vpop.f32.mrf.mxu0
        %v4327 = vpop.f32.mrf.mxu0
        %v4328 = vadd.f32 %v4167, %v4327
        %v4329 = vpop.f32.mrf.mxu0
        %4330 = vmatprep.mubr.bf16.mxu0 %v3429
        %4331 = vmatmul.mubr.bf16.gmra.mxu0 %v3428
        %v4332 = vpop.f32.mrf.mxu0
        %v4333 = vadd.f32 %v4172, %v4332
        %v4334 = vpop.f32.mrf.mxu0
        %v4335 = vpop.f32.mrf.mxu0
        %v4336 = vadd.f32 %v4175, %v4335
        %v4337 = vpop.f32.mrf.mxu0
        %4338 = vmatprep.mubr.bf16.mxu0 %v3438
        %4339 = vmatmul.mubr.bf16.gmra.mxu0 %v3437
        %v4340 = vpop.f32.mrf.mxu0
        %v4341 = vadd.f32 %v4180, %v4340
        %v4342 = vpop.f32.mrf.mxu0
        %v4343 = vpop.f32.mrf.mxu0
        %v4344 = vadd.f32 %v4183, %v4343
        %v4345 = vpop.f32.mrf.mxu0
        %4346 = vmatprep.mubr.bf16.mxu0 %v3447
        %4347 = vmatmul.mubr.bf16.gmra.mxu0 %v3446
        %v4348 = vpop.f32.mrf.mxu0
        %v4349 = vadd.f32 %v4188, %v4348
        %v4350 = vpop.f32.mrf.mxu0
        %v4351 = vpop.f32.mrf.mxu0
        %v4352 = vadd.f32 %v4191, %v4351
        %v4353 = vpop.f32.mrf.mxu0
        %4354 = vmatprep.mubr.bf16.mxu0 %v3456
        %4355 = vmatmul.mubr.bf16.gmra.mxu0 %v3455
        %v4356 = vpop.f32.mrf.mxu0
        %v4357 = vadd.f32 %v4196, %v4356
        %v4358 = vpop.f32.mrf.mxu0
        %v4359 = vpop.f32.mrf.mxu0
        %v4360 = vadd.f32 %v4199, %v4359
        %v4361 = vpop.f32.mrf.mxu0
        %4362 = vmatprep.mubr.bf16.mxu0 %v3465
        %4363 = vmatmul.mubr.bf16.gmra.mxu0 %v3464
        %v4364 = vpop.f32.mrf.mxu0
        %v4365 = vadd.f32 %v4204, %v4364
        %v4366 = vpop.f32.mrf.mxu0
        %v4367 = vpop.f32.mrf.mxu0
        %v4368 = vadd.f32 %v4207, %v4367
        %v4369 = vpop.f32.mrf.mxu0
        %4370 = vmatprep.mubr.bf16.mxu0 %v3474
        %4371 = vmatmul.mubr.bf16.gmra.mxu0 %v3473
        %v4372 = vpop.f32.mrf.mxu0
        %v4373 = vadd.f32 %v4212, %v4372
        %v4374 = vpop.f32.mrf.mxu0
        %v4375 = vpop.f32.mrf.mxu0
        %v4376 = vadd.f32 %v4215, %v4375
        %v4377 = vpop.f32.mrf.mxu0
        %4378 = vmatprep.mubr.bf16.mxu0 %v3483
        %4379 = vmatmul.mubr.bf16.gmra.mxu0 %v3482
        %v4380 = vpop.f32.mrf.mxu0
        %v4381 = vadd.f32 %v4220, %v4380
        %v4382 = vpop.f32.mrf.mxu0
        %v4383 = vpop.f32.mrf.mxu0
        %v4384 = vadd.f32 %v4223, %v4383
        %v4385 = vpop.f32.mrf.mxu0
        %4386 = vdwg.mxu0
        %4387 = vmatprep.subr.bf16.mxu0 0
        %4388 = vmatpush1.bf16.msra.mxu0 %v3960
        %4389 = vmatprep.subr.bf16.mxu0 0
        %4390 = vmatpush1.bf16.msra.mxu0 %v3959
        %4391 = vmatprep.subr.bf16.mxu0 0
        %4392 = vmatpush1.bf16.msra.mxu0 %v3958
        %4393 = vmatprep.subr.bf16.mxu0 0
        %4394 = vmatpush1.bf16.msra.mxu0 %v3957
        %4395 = vmatprep.subr.bf16.mxu0 0
        %4396 = vmatpush1.bf16.msra.mxu0 %v3956
        %4397 = vmatprep.subr.bf16.mxu0 0
        %4398 = vmatpush1.bf16.msra.mxu0 %v3955
        %4399 = vmatprep.subr.bf16.mxu0 0
        %4400 = vmatpush1.bf16.msra.mxu0 %v3954
        %4401 = vmatprep.subr.bf16.mxu0 0
        %4402 = vmatpush1.bf16.msra.mxu0 %v3953
        %4403 = vmatprep.subr.bf16.mxu0 0
        %4404 = vmatpush2.bf16.msra.mxu0 %v3968
        %4405 = vmatprep.subr.bf16.mxu0 0
        %4406 = vmatpush2.bf16.msra.mxu0 %v3967
        %4407 = vmatprep.subr.bf16.mxu0 0
        %4408 = vmatpush2.bf16.msra.mxu0 %v3966
        %4409 = vmatprep.subr.bf16.mxu0 0
        %4410 = vmatpush2.bf16.msra.mxu0 %v3965
        %4411 = vmatprep.subr.bf16.mxu0 0
        %4412 = vmatpush2.bf16.msra.mxu0 %v3964
        %4413 = vmatprep.subr.bf16.mxu0 0
        %4414 = vmatpush2.bf16.msra.mxu0 %v3963
        %4415 = vmatprep.subr.bf16.mxu0 0
        %4416 = vmatpush2.bf16.msra.mxu0 %v3962
        %4417 = vmatprep.subr.bf16.mxu0 0
        %4418 = vmatpush2.bf16.msra.mxu0 %v3961
        %4419 = vmatprep.mubr.bf16.mxu0 %v3350
        %4420 = vmatmul.mubr.bf16.gmra.mxu0 %v3349
        %v4421 = vpop.f32.mrf.mxu0
        %v4422 = vadd.f32 %v4261, %v4421
        %v4423 = vpop.f32.mrf.mxu0
        %v4424 = vpop.f32.mrf.mxu0
        %v4425 = vadd.f32 %v4264, %v4424
        %v4426 = vpop.f32.mrf.mxu0
        %4427 = vmatprep.mubr.bf16.mxu0 %v3359
        %4428 = vmatmul.mubr.bf16.gmra.mxu0 %v3358
        %v4429 = vpop.f32.mrf.mxu0
        %v4430 = vadd.f32 %v4269, %v4429
        %v4431 = vpop.f32.mrf.mxu0
        %v4432 = vpop.f32.mrf.mxu0
        %v4433 = vadd.f32 %v4272, %v4432
        %v4434 = vpop.f32.mrf.mxu0
        %4435 = vmatprep.mubr.bf16.mxu0 %v3368
        %4436 = vmatmul.mubr.bf16.gmra.mxu0 %v3367
        %v4437 = vpop.f32.mrf.mxu0
        %v4438 = vadd.f32 %v4277, %v4437
        %v4439 = vpop.f32.mrf.mxu0
        %v4440 = vpop.f32.mrf.mxu0
        %v4441 = vadd.f32 %v4280, %v4440
        %v4442 = vpop.f32.mrf.mxu0
        %4443 = vmatprep.mubr.bf16.mxu0 %v3377
        %4444 = vmatmul.mubr.bf16.gmra.mxu0 %v3376
        %v4445 = vpop.f32.mrf.mxu0
        %v4446 = vadd.f32 %v4285, %v4445
        %v4447 = vpop.f32.mrf.mxu0
        %v4448 = vpop.f32.mrf.mxu0
        %v4449 = vadd.f32 %v4288, %v4448
        %v4450 = vpop.f32.mrf.mxu0
        %4451 = vmatprep.mubr.bf16.mxu0 %v3386
        %4452 = vmatmul.mubr.bf16.gmra.mxu0 %v3385
        %v4453 = vpop.f32.mrf.mxu0
        %v4454 = vadd.f32 %v4293, %v4453
        %v4455 = vpop.f32.mrf.mxu0
        %v4456 = vpop.f32.mrf.mxu0
        %v4457 = vadd.f32 %v4296, %v4456
        %v4458 = vpop.f32.mrf.mxu0
        %4459 = vmatprep.mubr.bf16.mxu0 %v3395
        %4460 = vmatmul.mubr.bf16.gmra.mxu0 %v3394
        %v4461 = vpop.f32.mrf.mxu0
        %v4462 = vadd.f32 %v4301, %v4461
        %v4463 = vpop.f32.mrf.mxu0
        %v4464 = vpop.f32.mrf.mxu0
        %v4465 = vadd.f32 %v4304, %v4464
        %v4466 = vpop.f32.mrf.mxu0
        %4467 = vmatprep.mubr.bf16.mxu0 %v3404
        %4468 = vmatmul.mubr.bf16.gmra.mxu0 %v3403
        %v4469 = vpop.f32.mrf.mxu0
        %v4470 = vadd.f32 %v4309, %v4469
        %v4471 = vpop.f32.mrf.mxu0
        %v4472 = vpop.f32.mrf.mxu0
        %v4473 = vadd.f32 %v4312, %v4472
        %v4474 = vpop.f32.mrf.mxu0
        %4475 = vmatprep.mubr.bf16.mxu0 %v3413
        %4476 = vmatmul.mubr.bf16.gmra.mxu0 %v3412
        %v4477 = vpop.f32.mrf.mxu0
        %v4478 = vadd.f32 %v4317, %v4477
        %v4479 = vpop.f32.mrf.mxu0
        %v4480 = vpop.f32.mrf.mxu0
        %v4481 = vadd.f32 %v4320, %v4480
        %v4482 = vpop.f32.mrf.mxu0
        %4483 = vmatprep.mubr.bf16.mxu0 %v3422
        %4484 = vmatmul.mubr.bf16.gmra.mxu0 %v3421
        %v4485 = vpop.f32.mrf.mxu0
        %v4486 = vadd.f32 %v4325, %v4485
        %v4487 = vpop.f32.mrf.mxu0
        %v4488 = vpop.f32.mrf.mxu0
        %v4489 = vadd.f32 %v4328, %v4488
        %v4490 = vpop.f32.mrf.mxu0
        %4491 = vmatprep.mubr.bf16.mxu0 %v3431
        %4492 = vmatmul.mubr.bf16.gmra.mxu0 %v3430
        %v4493 = vpop.f32.mrf.mxu0
        %v4494 = vadd.f32 %v4333, %v4493
        %v4495 = vpop.f32.mrf.mxu0
        %v4496 = vpop.f32.mrf.mxu0
        %v4497 = vadd.f32 %v4336, %v4496
        %v4498 = vpop.f32.mrf.mxu0
        %4499 = vmatprep.mubr.bf16.mxu0 %v3440
        %4500 = vmatmul.mubr.bf16.gmra.mxu0 %v3439
        %v4501 = vpop.f32.mrf.mxu0
        %v4502 = vadd.f32 %v4341, %v4501
        %v4503 = vpop.f32.mrf.mxu0
        %v4504 = vpop.f32.mrf.mxu0
        %v4505 = vadd.f32 %v4344, %v4504
        %v4506 = vpop.f32.mrf.mxu0
        %4507 = vmatprep.mubr.bf16.mxu0 %v3449
        %4508 = vmatmul.mubr.bf16.gmra.mxu0 %v3448
        %v4509 = vpop.f32.mrf.mxu0
        %v4510 = vadd.f32 %v4349, %v4509
        %v4511 = vpop.f32.mrf.mxu0
        %v4512 = vpop.f32.mrf.mxu0
        %v4513 = vadd.f32 %v4352, %v4512
        %v4514 = vpop.f32.mrf.mxu0
        %4515 = vmatprep.mubr.bf16.mxu0 %v3458
        %4516 = vmatmul.mubr.bf16.gmra.mxu0 %v3457
        %v4517 = vpop.f32.mrf.mxu0
        %v4518 = vadd.f32 %v4357, %v4517
        %v4519 = vpop.f32.mrf.mxu0
        %v4520 = vpop.f32.mrf.mxu0
        %v4521 = vadd.f32 %v4360, %v4520
        %v4522 = vpop.f32.mrf.mxu0
        %4523 = vmatprep.mubr.bf16.mxu0 %v3467
        %4524 = vmatmul.mubr.bf16.gmra.mxu0 %v3466
        %v4525 = vpop.f32.mrf.mxu0
        %v4526 = vadd.f32 %v4365, %v4525
        %v4527 = vpop.f32.mrf.mxu0
        %v4528 = vpop.f32.mrf.mxu0
        %v4529 = vadd.f32 %v4368, %v4528
        %v4530 = vpop.f32.mrf.mxu0
        %4531 = vmatprep.mubr.bf16.mxu0 %v3476
        %4532 = vmatmul.mubr.bf16.gmra.mxu0 %v3475
        %v4533 = vpop.f32.mrf.mxu0
        %v4534 = vadd.f32 %v4373, %v4533
        %v4535 = vpop.f32.mrf.mxu0
        %v4536 = vpop.f32.mrf.mxu0
        %v4537 = vadd.f32 %v4376, %v4536
        %v4538 = vpop.f32.mrf.mxu0
        %4539 = vmatprep.mubr.bf16.mxu0 %v3485
        %4540 = vmatmul.mubr.bf16.gmra.mxu0 %v3484
        %v4541 = vpop.f32.mrf.mxu0
        %v4542 = vadd.f32 %v4381, %v4541
        %v4543 = vpop.f32.mrf.mxu0
        %v4544 = vpop.f32.mrf.mxu0
        %v4545 = vadd.f32 %v4384, %v4544
        %v4546 = vpop.f32.mrf.mxu0
        %4547 = vdwg.mxu0
        %4548 = vmatprep.subr.bf16.mxu0 0
        %4549 = vmatpush1.bf16.msra.mxu0 %v3976
        %4550 = vmatprep.subr.bf16.mxu0 0
        %4551 = vmatpush1.bf16.msra.mxu0 %v3975
        %4552 = vmatprep.subr.bf16.mxu0 0
        %4553 = vmatpush1.bf16.msra.mxu0 %v3974
        %4554 = vmatprep.subr.bf16.mxu0 0
        %4555 = vmatpush1.bf16.msra.mxu0 %v3973
        %4556 = vmatprep.subr.bf16.mxu0 0
        %4557 = vmatpush1.bf16.msra.mxu0 %v3972
        %4558 = vmatprep.subr.bf16.mxu0 0
        %4559 = vmatpush1.bf16.msra.mxu0 %v3971
        %4560 = vmatprep.subr.bf16.mxu0 0
        %4561 = vmatpush1.bf16.msra.mxu0 %v3970
        %4562 = vmatprep.subr.bf16.mxu0 0
        %4563 = vmatpush1.bf16.msra.mxu0 %v3969
        %4564 = vmatprep.subr.bf16.mxu0 0
        %4565 = vmatpush2.bf16.msra.mxu0 %v3984
        %4566 = vmatprep.subr.bf16.mxu0 0
        %4567 = vmatpush2.bf16.msra.mxu0 %v3983
        %4568 = vmatprep.subr.bf16.mxu0 0
        %4569 = vmatpush2.bf16.msra.mxu0 %v3982
        %4570 = vmatprep.subr.bf16.mxu0 0
        %4571 = vmatpush2.bf16.msra.mxu0 %v3981
        %4572 = vmatprep.subr.bf16.mxu0 0
        %4573 = vmatpush2.bf16.msra.mxu0 %v3980
        %4574 = vmatprep.subr.bf16.mxu0 0
        %4575 = vmatpush2.bf16.msra.mxu0 %v3979
        %4576 = vmatprep.subr.bf16.mxu0 0
        %4577 = vmatpush2.bf16.msra.mxu0 %v3978
        %4578 = vmatprep.subr.bf16.mxu0 0
        %4579 = vmatpush2.bf16.msra.mxu0 %v3977
        %4580 = vmatprep.mubr.bf16.mxu0 %v3352
        %4581 = vmatmul.mubr.bf16.gmra.mxu0 %v3351
        %v4582 = vpop.f32.mrf.mxu0
        %v4583 = vadd.f32 %v4422, %v4582
        %v4584 = vpop.f32.mrf.mxu0
        %v4585 = vpop.f32.mrf.mxu0
        %v4586 = vadd.f32 %v4425, %v4585
        %v4587 = vpop.f32.mrf.mxu0
        %4588 = vmatprep.mubr.bf16.mxu0 %v3361
        %4589 = vmatmul.mubr.bf16.gmra.mxu0 %v3360
        %v4590 = vpop.f32.mrf.mxu0
        %v4591 = vadd.f32 %v4430, %v4590
        %v4592 = vpop.f32.mrf.mxu0
        %v4593 = vpop.f32.mrf.mxu0
        %v4594 = vadd.f32 %v4433, %v4593
        %v4595 = vpop.f32.mrf.mxu0
        %4596 = vmatprep.mubr.bf16.mxu0 %v3370
        %4597 = vmatmul.mubr.bf16.gmra.mxu0 %v3369
        %v4598 = vpop.f32.mrf.mxu0
        %v4599 = vadd.f32 %v4438, %v4598
        %v4600 = vpop.f32.mrf.mxu0
        %v4601 = vpop.f32.mrf.mxu0
        %v4602 = vadd.f32 %v4441, %v4601
        %v4603 = vpop.f32.mrf.mxu0
        %4604 = vmatprep.mubr.bf16.mxu0 %v3379
        %4605 = vmatmul.mubr.bf16.gmra.mxu0 %v3378
        %v4606 = vpop.f32.mrf.mxu0
        %v4607 = vadd.f32 %v4446, %v4606
        %v4608 = vpop.f32.mrf.mxu0
        %v4609 = vpop.f32.mrf.mxu0
        %v4610 = vadd.f32 %v4449, %v4609
        %v4611 = vpop.f32.mrf.mxu0
        %4612 = vmatprep.mubr.bf16.mxu0 %v3388
        %4613 = vmatmul.mubr.bf16.gmra.mxu0 %v3387
        %v4614 = vpop.f32.mrf.mxu0
        %v4615 = vadd.f32 %v4454, %v4614
        %v4616 = vpop.f32.mrf.mxu0
        %v4617 = vpop.f32.mrf.mxu0
        %v4618 = vadd.f32 %v4457, %v4617
        %v4619 = vpop.f32.mrf.mxu0
        %4620 = vmatprep.mubr.bf16.mxu0 %v3397
        %4621 = vmatmul.mubr.bf16.gmra.mxu0 %v3396
        %v4622 = vpop.f32.mrf.mxu0
        %v4623 = vadd.f32 %v4462, %v4622
        %v4624 = vpop.f32.mrf.mxu0
        %v4625 = vpop.f32.mrf.mxu0
        %v4626 = vadd.f32 %v4465, %v4625
        %v4627 = vpop.f32.mrf.mxu0
        %4628 = vmatprep.mubr.bf16.mxu0 %v3406
        %4629 = vmatmul.mubr.bf16.gmra.mxu0 %v3405
        %v4630 = vpop.f32.mrf.mxu0
        %v4631 = vadd.f32 %v4470, %v4630
        %v4632 = vpop.f32.mrf.mxu0
        %v4633 = vpop.f32.mrf.mxu0
        %v4634 = vadd.f32 %v4473, %v4633
        %v4635 = vpop.f32.mrf.mxu0
        %4636 = vmatprep.mubr.bf16.mxu0 %v3415
        %4637 = vmatmul.mubr.bf16.gmra.mxu0 %v3414
        %v4638 = vpop.f32.mrf.mxu0
        %v4639 = vadd.f32 %v4478, %v4638
        %v4640 = vpop.f32.mrf.mxu0
        %v4641 = vpop.f32.mrf.mxu0
        %v4642 = vadd.f32 %v4481, %v4641
        %v4643 = vpop.f32.mrf.mxu0
        %4644 = vmatprep.mubr.bf16.mxu0 %v3424
        %4645 = vmatmul.mubr.bf16.gmra.mxu0 %v3423
        %v4646 = vpop.f32.mrf.mxu0
        %v4647 = vadd.f32 %v4486, %v4646
        %v4648 = vpop.f32.mrf.mxu0
        %v4649 = vpop.f32.mrf.mxu0
        %v4650 = vadd.f32 %v4489, %v4649
        %v4651 = vpop.f32.mrf.mxu0
        %4652 = vmatprep.mubr.bf16.mxu0 %v3433
        %4653 = vmatmul.mubr.bf16.gmra.mxu0 %v3432
        %v4654 = vpop.f32.mrf.mxu0
        %v4655 = vadd.f32 %v4494, %v4654
        %v4656 = vpop.f32.mrf.mxu0
        %v4657 = vpop.f32.mrf.mxu0
        %v4658 = vadd.f32 %v4497, %v4657
        %v4659 = vpop.f32.mrf.mxu0
        %4660 = vmatprep.mubr.bf16.mxu0 %v3442
        %4661 = vmatmul.mubr.bf16.gmra.mxu0 %v3441
        %v4662 = vpop.f32.mrf.mxu0
        %v4663 = vadd.f32 %v4502, %v4662
        %v4664 = vpop.f32.mrf.mxu0
        %v4665 = vpop.f32.mrf.mxu0
        %v4666 = vadd.f32 %v4505, %v4665
        %v4667 = vpop.f32.mrf.mxu0
        %4668 = vmatprep.mubr.bf16.mxu0 %v3451
        %4669 = vmatmul.mubr.bf16.gmra.mxu0 %v3450
        %v4670 = vpop.f32.mrf.mxu0
        %v4671 = vadd.f32 %v4510, %v4670
        %v4672 = vpop.f32.mrf.mxu0
        %v4673 = vpop.f32.mrf.mxu0
        %v4674 = vadd.f32 %v4513, %v4673
        %v4675 = vpop.f32.mrf.mxu0
        %4676 = vmatprep.mubr.bf16.mxu0 %v3460
        %4677 = vmatmul.mubr.bf16.gmra.mxu0 %v3459
        %v4678 = vpop.f32.mrf.mxu0
        %v4679 = vadd.f32 %v4518, %v4678
        %v4680 = vpop.f32.mrf.mxu0
        %v4681 = vpop.f32.mrf.mxu0
        %v4682 = vadd.f32 %v4521, %v4681
        %v4683 = vpop.f32.mrf.mxu0
        %4684 = vmatprep.mubr.bf16.mxu0 %v3469
        %4685 = vmatmul.mubr.bf16.gmra.mxu0 %v3468
        %v4686 = vpop.f32.mrf.mxu0
        %v4687 = vadd.f32 %v4526, %v4686
        %v4688 = vpop.f32.mrf.mxu0
        %v4689 = vpop.f32.mrf.mxu0
        %v4690 = vadd.f32 %v4529, %v4689
        %v4691 = vpop.f32.mrf.mxu0
        %4692 = vmatprep.mubr.bf16.mxu0 %v3478
        %4693 = vmatmul.mubr.bf16.gmra.mxu0 %v3477
        %v4694 = vpop.f32.mrf.mxu0
        %v4695 = vadd.f32 %v4534, %v4694
        %v4696 = vpop.f32.mrf.mxu0
        %v4697 = vpop.f32.mrf.mxu0
        %v4698 = vadd.f32 %v4537, %v4697
        %v4699 = vpop.f32.mrf.mxu0
        %4700 = vmatprep.mubr.bf16.mxu0 %v3487
        %4701 = vmatmul.mubr.bf16.gmra.mxu0 %v3486
        %v4702 = vpop.f32.mrf.mxu0
        %v4703 = vadd.f32 %v4542, %v4702
        %v4704 = vpop.f32.mrf.mxu0
        %v4705 = vpop.f32.mrf.mxu0
        %v4706 = vadd.f32 %v4545, %v4705
        %v4707 = vpop.f32.mrf.mxu0
        %4708 = vdwg.mxu0
        %4709 = vmatprep.subr.bf16.mxu0 0
        %4710 = vmatpush1.bf16.msra.mxu0 %v3992
        %4711 = vmatprep.subr.bf16.mxu0 0
        %4712 = vmatpush1.bf16.msra.mxu0 %v3991
        %4713 = vmatprep.subr.bf16.mxu0 0
        %4714 = vmatpush1.bf16.msra.mxu0 %v3990
        %4715 = vmatprep.subr.bf16.mxu0 0
        %4716 = vmatpush1.bf16.msra.mxu0 %v3989
        %4717 = vmatprep.subr.bf16.mxu0 0
        %4718 = vmatpush1.bf16.msra.mxu0 %v3988
        %4719 = vmatprep.subr.bf16.mxu0 0
        %4720 = vmatpush1.bf16.msra.mxu0 %v3987
        %4721 = vmatprep.subr.bf16.mxu0 0
        %4722 = vmatpush1.bf16.msra.mxu0 %v3986
        %4723 = vmatprep.subr.bf16.mxu0 0
        %4724 = vmatpush1.bf16.msra.mxu0 %v3985
        %4725 = vmatprep.subr.bf16.mxu0 0
        %4726 = vmatpush2.bf16.msra.mxu0 0
        %4727 = vmatprep.subr.bf16.mxu0 0
        %4728 = vmatpush2.bf16.msra.mxu0 0
        %4729 = vmatprep.subr.bf16.mxu0 0
        %4730 = vmatpush2.bf16.msra.mxu0 0
        %4731 = vmatprep.subr.bf16.mxu0 0
        %4732 = vmatpush2.bf16.msra.mxu0 0
        %4733 = vmatprep.subr.bf16.mxu0 0
        %4734 = vmatpush2.bf16.msra.mxu0 0
        %4735 = vmatprep.subr.bf16.mxu0 0
        %4736 = vmatpush2.bf16.msra.mxu0 0
        %4737 = vmatprep.subr.bf16.mxu0 0
        %4738 = vmatpush2.bf16.msra.mxu0 0
        %4739 = vmatprep.subr.bf16.mxu0 0
        %4740 = vmatpush2.bf16.msra.mxu0 0
        %4741 = vmatprep.mubr.bf16.mxu0 0
        %4742 = vmatmul.mubr.bf16.gmra.mxu0 %v3353
        %v4743 = vpop.f32.mrf.mxu0
        %v4744 = vadd.f32 %v4583, %v4743
        %v4745 = vpop.f32.mrf.mxu0
        %v4746 = vpop.f32.mrf.mxu0
        %v4747 = vadd.f32 %v4586, %v4746
        %v4748 = vpop.f32.mrf.mxu0
        %4749 = vmatprep.mubr.bf16.mxu0 0
        %4750 = vmatmul.mubr.bf16.gmra.mxu0 %v3362
        %v4751 = vpop.f32.mrf.mxu0
        %v4752 = vadd.f32 %v4591, %v4751
        %v4753 = vpop.f32.mrf.mxu0
        %v4754 = vpop.f32.mrf.mxu0
        %v4755 = vadd.f32 %v4594, %v4754
        %v4756 = vpop.f32.mrf.mxu0
        %4757 = vmatprep.mubr.bf16.mxu0 0
        %4758 = vmatmul.mubr.bf16.gmra.mxu0 %v3371
        %v4759 = vpop.f32.mrf.mxu0
        %v4760 = vadd.f32 %v4599, %v4759
        %v4761 = vpop.f32.mrf.mxu0
        %v4762 = vpop.f32.mrf.mxu0
        %v4763 = vadd.f32 %v4602, %v4762
        %v4764 = vpop.f32.mrf.mxu0
        %4765 = vmatprep.mubr.bf16.mxu0 0
        %4766 = vmatmul.mubr.bf16.gmra.mxu0 %v3380
        %v4767 = vpop.f32.mrf.mxu0
        %v4768 = vadd.f32 %v4607, %v4767
        %v4769 = vpop.f32.mrf.mxu0
        %v4770 = vpop.f32.mrf.mxu0
        %v4771 = vadd.f32 %v4610, %v4770
        %v4772 = vpop.f32.mrf.mxu0
        %4773 = vmatprep.mubr.bf16.mxu0 0
        %4774 = vmatmul.mubr.bf16.gmra.mxu0 %v3389
        %v4775 = vpop.f32.mrf.mxu0
        %v4776 = vadd.f32 %v4615, %v4775
        %v4777 = vpop.f32.mrf.mxu0
        %v4778 = vpop.f32.mrf.mxu0
        %v4779 = vadd.f32 %v4618, %v4778
        %v4780 = vpop.f32.mrf.mxu0
        %4781 = vmatprep.mubr.bf16.mxu0 0
        %4782 = vmatmul.mubr.bf16.gmra.mxu0 %v3398
        %v4783 = vpop.f32.mrf.mxu0
        %v4784 = vadd.f32 %v4623, %v4783
        %v4785 = vpop.f32.mrf.mxu0
        %v4786 = vpop.f32.mrf.mxu0
        %v4787 = vadd.f32 %v4626, %v4786
        %v4788 = vpop.f32.mrf.mxu0
        %4789 = vmatprep.mubr.bf16.mxu0 0
        %4790 = vmatmul.mubr.bf16.gmra.mxu0 %v3407
        %v4791 = vpop.f32.mrf.mxu0
        %v4792 = vadd.f32 %v4631, %v4791
        %v4793 = vpop.f32.mrf.mxu0
        %v4794 = vpop.f32.mrf.mxu0
        %v4795 = vadd.f32 %v4634, %v4794
        %v4796 = vpop.f32.mrf.mxu0
        %4797 = vmatprep.mubr.bf16.mxu0 0
        %4798 = vmatmul.mubr.bf16.gmra.mxu0 %v3416
        %v4799 = vpop.f32.mrf.mxu0
        %v4800 = vadd.f32 %v4639, %v4799
        %v4801 = vpop.f32.mrf.mxu0
        %v4802 = vpop.f32.mrf.mxu0
        %v4803 = vadd.f32 %v4642, %v4802
        %v4804 = vpop.f32.mrf.mxu0
        %4805 = vmatprep.mubr.bf16.mxu0 0
        %4806 = vmatmul.mubr.bf16.gmra.mxu0 %v3425
        %v4807 = vpop.f32.mrf.mxu0
        %v4808 = vadd.f32 %v4647, %v4807
        %v4809 = vpop.f32.mrf.mxu0
        %v4810 = vpop.f32.mrf.mxu0
        %v4811 = vadd.f32 %v4650, %v4810
        %v4812 = vpop.f32.mrf.mxu0
        %4813 = vmatprep.mubr.bf16.mxu0 0
        %4814 = vmatmul.mubr.bf16.gmra.mxu0 %v3434
        %v4815 = vpop.f32.mrf.mxu0
        %v4816 = vadd.f32 %v4655, %v4815
        %v4817 = vpop.f32.mrf.mxu0
        %v4818 = vpop.f32.mrf.mxu0
        %v4819 = vadd.f32 %v4658, %v4818
        %v4820 = vpop.f32.mrf.mxu0
        %4821 = vmatprep.mubr.bf16.mxu0 0
        %4822 = vmatmul.mubr.bf16.gmra.mxu0 %v3443
        %v4823 = vpop.f32.mrf.mxu0
        %v4824 = vadd.f32 %v4663, %v4823
        %v4825 = vpop.f32.mrf.mxu0
        %v4826 = vpop.f32.mrf.mxu0
        %v4827 = vadd.f32 %v4666, %v4826
        %v4828 = vpop.f32.mrf.mxu0
        %4829 = vmatprep.mubr.bf16.mxu0 0
        %4830 = vmatmul.mubr.bf16.gmra.mxu0 %v3452
        %v4831 = vpop.f32.mrf.mxu0
        %v4832 = vadd.f32 %v4671, %v4831
        %v4833 = vpop.f32.mrf.mxu0
        %v4834 = vpop.f32.mrf.mxu0
        %v4835 = vadd.f32 %v4674, %v4834
        %v4836 = vpop.f32.mrf.mxu0
        %4837 = vmatprep.mubr.bf16.mxu0 0
        %4838 = vmatmul.mubr.bf16.gmra.mxu0 %v3461
        %v4839 = vpop.f32.mrf.mxu0
        %v4840 = vadd.f32 %v4679, %v4839
        %v4841 = vpop.f32.mrf.mxu0
        %v4842 = vpop.f32.mrf.mxu0
        %v4843 = vadd.f32 %v4682, %v4842
        %v4844 = vpop.f32.mrf.mxu0
        %4845 = vmatprep.mubr.bf16.mxu0 0
        %4846 = vmatmul.mubr.bf16.gmra.mxu0 %v3470
        %v4847 = vpop.f32.mrf.mxu0
        %v4848 = vadd.f32 %v4687, %v4847
        %v4849 = vpop.f32.mrf.mxu0
        %v4850 = vpop.f32.mrf.mxu0
        %v4851 = vadd.f32 %v4690, %v4850
        %v4852 = vpop.f32.mrf.mxu0
        %4853 = vmatprep.mubr.bf16.mxu0 0
        %4854 = vmatmul.mubr.bf16.gmra.mxu0 %v3479
        %v4855 = vpop.f32.mrf.mxu0
        %v4856 = vadd.f32 %v4695, %v4855
        %v4857 = vpop.f32.mrf.mxu0
        %v4858 = vpop.f32.mrf.mxu0
        %v4859 = vadd.f32 %v4698, %v4858
        %v4860 = vpop.f32.mrf.mxu0
        %4861 = vmatprep.mubr.bf16.mxu0 0
        %4862 = vmatmul.mubr.bf16.gmra.mxu0 %v3488
        %v4863 = vpop.f32.mrf.mxu0
        %v4864 = vadd.f32 %v4703, %v4863
        %v4865 = vpop.f32.mrf.mxu0
        %v4866 = vpop.f32.mrf.mxu0
        %v4867 = vadd.f32 %v4706, %v4866
        %v4868 = vpop.f32.mrf.mxu0
        %4869 = vdwg.mxu0
        %vm4870 = vcmask 261120
        %4871 = vst.msk [vmem:[%s271] sm:$0xff] %vm4870, %v4744
        %4872 = vst.msk [vmem:[%s271 + $0x8] sm:$0xff] %vm4870, %v4747
        %4873 = vst.msk [vmem:[%s271 + $0x10] sm:$0xff] %vm4870, %v4752
        %4874 = vst.msk [vmem:[%s271 + $0x18] sm:$0xff] %vm4870, %v4755
        %4875 = vst.msk [vmem:[%s271 + $0x20] sm:$0xff] %vm4870, %v4760
        %4876 = vst.msk [vmem:[%s271 + $0x28] sm:$0xff] %vm4870, %v4763
        %4877 = vst.msk [vmem:[%s271 + $0x30] sm:$0xff] %vm4870, %v4768
        %4878 = vst.msk [vmem:[%s271 + $0x38] sm:$0xff] %vm4870, %v4771
        %4879 = vst.msk [vmem:[%s271 + $0x40] sm:$0xff] %vm4870, %v4776
        %4880 = vst.msk [vmem:[%s271 + $0x48] sm:$0xff] %vm4870, %v4779
        %4881 = vst.msk [vmem:[%s271 + $0x50] sm:$0xff] %vm4870, %v4784
        %4882 = vst.msk [vmem:[%s271 + $0x58] sm:$0xff] %vm4870, %v4787
        %4883 = vst.msk [vmem:[%s271 + $0x60] sm:$0xff] %vm4870, %v4792
        %4884 = vst.msk [vmem:[%s271 + $0x68] sm:$0xff] %vm4870, %v4795
        %4885 = vst.msk [vmem:[%s271 + $0x70] sm:$0xff] %vm4870, %v4800
        %4886 = vst.msk [vmem:[%s271 + $0x78] sm:$0xff] %vm4870, %v4803
        %4887 = vst.msk [vmem:[%s271 + $0x80] sm:$0xff] %vm4870, %v4808
        %4888 = vst.msk [vmem:[%s271 + $0x88] sm:$0xff] %vm4870, %v4811
        %4889 = vst.msk [vmem:[%s271 + $0x90] sm:$0xff] %vm4870, %v4816
        %4890 = vst.msk [vmem:[%s271 + $0x98] sm:$0xff] %vm4870, %v4819
        %4891 = vst.msk [vmem:[%s271 + $0xa0] sm:$0xff] %vm4870, %v4824
        %4892 = vst.msk [vmem:[%s271 + $0xa8] sm:$0xff] %vm4870, %v4827
        %4893 = vst.msk [vmem:[%s271 + $0xb0] sm:$0xff] %vm4870, %v4832
        %4894 = vst.msk [vmem:[%s271 + $0xb8] sm:$0xff] %vm4870, %v4835
        %4895 = vst.msk [vmem:[%s271 + $0xc0] sm:$0xff] %vm4870, %v4840
        %4896 = vst.msk [vmem:[%s271 + $0xc8] sm:$0xff] %vm4870, %v4843
        %4897 = vst.msk [vmem:[%s271 + $0xd0] sm:$0xff] %vm4870, %v4848
        %4898 = vst.msk [vmem:[%s271 + $0xd8] sm:$0xff] %vm4870, %v4851
        %4899 = vst.msk [vmem:[%s271 + $0xe0] sm:$0xff] %vm4870, %v4856
        %4900 = vst.msk [vmem:[%s271 + $0xe8] sm:$0xff] %vm4870, %v4859
        %4901 = vst.msk [vmem:[%s271 + $0xf0] sm:$0xff] %vm4870, %v4864
        %4902 = vst.msk [vmem:[%s271 + $0xf8] sm:$0xff] %vm4870, %v4867
        %s4903 = sand.u32 %s181, 1
        %s4904 = scalar_lea.sflag [#allocation5], %s4903
        %s4905 = sand.u32 %s181, 1
        %s4906 = smul.addr %s4905, 256
        %s4907 = scalar_lea.vmem [#allocation4], %s4906
        // Predicated region
        $region49: #{tpu_custom_call.1} parent=47 // pred_check
          %p4908 = pneg %p191
        $region50: #{tpu_custom_call.1} parent=47 // pred_check_branch
          %4910 = sbr.rel (%p4908) target = $region52
        $region51: #{tpu_custom_call.1} parent=47 // pred_region
          %s4912 = ssub.s32 4096, 4096
          %4913 = vsyncadd %s4904, %s4912
          %s4914 = smul.addr %s21, 32
          %s4915 = smul.addr %s4914, 128
          %s4916 = scalar_lea.hbm %s7, %s4915
          %s4917 = sshll.u32 %s4907, 4
          %s4918 = int_to_ptr.vmem [resolvable:$true] %s4917
          %4923 = dma.vmem_to_hbm [thread:$0]  %s4918, 4096, %s4916, %s4904, 128, 128, 8
        $region52: #{tpu_custom_call.1} parent=47 // pred_fallthru
          _
      $region48: #{tpu_custom_call.1} parent=5 // pred_fallthru
        _
      %p4924 = scmp.le.s32.totalorder 2, %s16
      // Predicated region
      $region53: #{tpu_custom_call.1} parent=5 // pred_check
        %p4925 = pneg %p4924
      $region54: #{tpu_custom_call.1} parent=5 // pred_check_branch
        %4927 = sbr.rel (%p4925) target = $region56
      $region55: #{tpu_custom_call.1} parent=5 // pred_region
        %s4928 = ssub.s32 %s16, 2
        // Predicated region
        $region57: #{tpu_custom_call.1} parent=55 // pred_check
          %p4929 = pneg %p197
        $region58: #{tpu_custom_call.1} parent=55 // pred_check_branch
          %4931 = sbr.rel (%p4929) target = $region60
        $region59: #{tpu_custom_call.1} parent=55 // pred_region
          %s4932 = sand.u32 %s182, 1
          %s4933 = scalar_lea.sflag [#allocation5], %s4932
          %s4934 = sand.u32 %s182, 1
          %s4935 = smul.addr %s4934, 256
          %s4936 = scalar_lea.vmem [#allocation4], %s4935
          %4937 = dma.done %s4933, 4096
        $region60: #{tpu_custom_call.1} parent=55 // pred_fallthru
          _
      $region56: #{tpu_custom_call.1} parent=5 // pred_fallthru
        _
    $region6: #{tpu_custom_call.1} parent=1 // loop_footer
      %s20 = sadd.s32 1, %s16
    $region7: #{tpu_custom_call.1} parent=1 // loop_footer_branch
      %15 = sbr.rel target = $region3
    $region8: #{tpu_custom_call.1} parent=1 // loop_exit
      _
    %4938 = vsyncpa [#allocation5], 1
    %s4939 = scalar_lea.sflag [#allocation5], 1
    %4940 = vsyncpa %s4939, 1

</llo_original>
